<compile_context>
chip_gen: v7x
topology: tpu7x:2x2x1
jax: 0.10.0
libtpu: 0.0.40
codegen_flags: <defaults>
</compile_context>

<pallas_src>
import jax
import jax.numpy as jnp
from jax.experimental import pallas as pl
from jax.experimental.pallas import tpu as pltpu

# EfficientNet-B5 head dimensions
C_IN = 512      # channels produced by the last MBConv stage
C_HEAD = 2048   # channels after the final 1x1 conv (classifier in_features)
BN_EPS = 1e-3   # torchvision EfficientNet BatchNorm eps


def efficientnet_b5_head(feat_nchw, params, n_classes, *, tn=C_HEAD):
    """feat_nchw: (B, 512, H, W) float32 — output of the (untranslated) backbone."""
    B, C, H, W = feat_nchw.shape
    assert C == C_IN
    assert C_HEAD % tn == 0
    HW = H * W
    M = B * HW

    # NCHW -> (B*HW, C): channels on the 128-lane axis, flattened M for the MXU.
    x = jnp.transpose(feat_nchw, (0, 2, 3, 1)).reshape(M, C).astype(jnp.bfloat16)
    conv_w = params["conv_w"].astype(jnp.bfloat16)            # (512, 2048)

    # Fold eval-mode BatchNorm into a per-channel scale/bias (kept in f32).
    scale = (params["bn_gamma"] / jnp.sqrt(params["bn_var"] + BN_EPS)
             ).astype(jnp.float32).reshape(1, C_HEAD)
    bias = (params["bn_beta"] - params["bn_mean"] * scale[0]
            ).astype(jnp.float32).reshape(1, C_HEAD)

    # Lane-pad the classifier to a 128-multiple output width; fold the 1/HW
    # average-pool factor into the weights so the kernel only does a sum.
    n_pad = max(128, ((n_classes + 127) // 128) * 128)
    fc_w = (params["fc_w"].astype(jnp.float32) / HW).astype(jnp.bfloat16)
    fc_w = jnp.pad(fc_w, ((0, 0), (0, n_pad - n_classes)))     # (2048, n_pad)
    fc_b = jnp.pad(params["fc_b"].astype(jnp.float32),
                   (0, n_pad - n_classes)).reshape(1, n_pad)

    def head_kernel(x_ref, wc_ref, s_ref, b_ref, wl_ref, bl_ref, o_ref, acc_ref):
        j = pl.program_id(0)

        @pl.when(j == 0)
        def _():
            # classifier bias folded into the accumulator init
            acc_ref[...] = jnp.broadcast_to(bl_ref[...], acc_ref.shape)

        # 1x1 conv == one big channel matmul: (B*HW, 512) x (512, tn) bf16 -> f32
        y = jnp.dot(x_ref[...], wc_ref[...],
                    preferred_element_type=jnp.float32)         # (M, tn) f32
        # folded BatchNorm (eval) + SiLU, all f32 on VPU/EUP
        y = y * s_ref[...] + b_ref[...]
        y = y * jax.nn.sigmoid(y)
        # global average pool: spatial SUM here (1/HW already folded into fc_w)
        pooled = y.reshape(B, HW, tn).sum(axis=1)               # (B, tn) f32
        # partial Linear(2048, n_classes) contraction over this channel tile
        acc_ref[...] += jnp.dot(pooled.astype(wl_ref.dtype), wl_ref[...],
                                preferred_element_type=jnp.float32)

        @pl.when(j == pl.num_programs(0) - 1)
        def _():
            # final F.sigmoid of ModelMultilabel.forward
            o_ref[...] = jax.nn.sigmoid(acc_ref[...]).astype(o_ref.dtype)

    grid = (C_HEAD // tn,)
    out_padded = pl.pallas_call(
        head_kernel,
        out_shape=jax.ShapeDtypeStruct((B, n_pad), jnp.float32),
        grid_spec=pltpu.PrefetchScalarGridSpec(
            num_scalar_prefetch=0,
            grid=grid,
            in_specs=[
                pl.BlockSpec((M, C_IN), lambda j: (0, 0)),        # features
                pl.BlockSpec((C_IN, tn), lambda j: (0, j)),       # 1x1 conv w
                pl.BlockSpec((1, tn), lambda j: (0, j)),          # BN scale
                pl.BlockSpec((1, tn), lambda j: (0, j)),          # BN bias
                pl.BlockSpec((tn, n_pad), lambda j: (j, 0)),      # Linear w (padded)
                pl.BlockSpec((1, n_pad), lambda j: (0, 0)),       # Linear b (padded)
            ],
            out_specs=pl.BlockSpec((B, n_pad), lambda j: (0, 0)),
            scratch_shapes=[pltpu.VMEM((B, n_pad), jnp.float32)],
        ),
        compiler_params=pltpu.CompilerParams(
            dimension_semantics=("arbitrary",),   # reduction over channel tiles
            vmem_limit_bytes=64 * 1024 * 1024,
        ),
    )(x, conv_w, scale, bias, fc_w, fc_b)

    return out_padded[:, :n_classes]


def _reference(feat_nchw, params, n_classes):
    """Pure-JAX f32 reference mirroring the PyTorch head semantics."""
    B, C, H, W = feat_nchw.shape
    x = jnp.transpose(feat_nchw, (0, 2, 3, 1)).reshape(B, H * W, C)
    y = jnp.einsum("bsc,cn->bsn", x, params["conv_w"])
    scale = params["bn_gamma"] / jnp.sqrt(params["bn_var"] + BN_EPS)
    bias = params["bn_beta"] - params["bn_mean"] * scale
    y = y * scale + bias
    y = y * jax.nn.sigmoid(y)                 # SiLU
    pooled = jnp.mean(y, axis=1)              # AdaptiveAvgPool2d(1) + flatten
    logits = pooled @ params["fc_w"] + params["fc_b"]  # Dropout is identity (eval)
    return jax.nn.sigmoid(logits)             # F.sigmoid


if __name__ == "__main__":
    key = jax.random.PRNGKey(0)
    n_classes = 16
    B, H, W = 2, 4, 4  # small synthetic final-stage feature map

    ks = jax.random.split(key, 8)
    # Synthetic "backbone output" features (NCHW, matching PyTorch conv layout).
    feat = jax.random.normal(ks[0], (B, C_IN, H, W), jnp.float32)

    # Deterministic synthetic parameters with the EfficientNet-B5 head shapes.
    params = {
        # PyTorch Conv2d(512, 2048, 1, bias=False) weight is (2048,512,1,1);
        # stored here already transposed to (512, 2048) for channel matmul.
        "conv_w": 0.02 * jax.random.normal(ks[1], (C_IN, C_HEAD), jnp.float32),
        "bn_gamma": jax.random.uniform(ks[2], (C_HEAD,), jnp.float32, 0.5, 1.5),
        "bn_beta": 0.1 * jax.random.normal(ks[3], (C_HEAD,), jnp.float32),
        "bn_mean": 0.1 * jax.random.normal(ks[4], (C_HEAD,), jnp.float32),
        "bn_var": jax.random.uniform(ks[5], (C_HEAD,), jnp.float32, 0.5, 1.5),
        # PyTorch Linear(2048, n_classes) weight is (n_classes, 2048);
        # stored here already transposed to (2048, n_classes).
        "fc_w": 0.02 * jax.random.normal(ks[6], (C_HEAD, n_classes), jnp.float32),
        "fc_b": 0.02 * jax.random.normal(ks[7], (n_classes,), jnp.float32),
    }

    out = jax.block_until_ready(efficientnet_b5_head(feat, params, n_classes))
    ref = _reference(feat, params, n_classes)

    assert out.shape == (B, n_classes), out.shape
    assert jnp.all(jnp.isfinite(out))
    # bf16 MXU operands with f32 accumulation: loosen tolerance vs f32 reference.
    assert jnp.allclose(out, ref, atol=2e-2, rtol=2e-2), float(
        jnp.max(jnp.abs(out - ref)))
    print("KERNEL_OK")
</pallas_src>

<mosaic_0001>
module attributes {stable_mosaic.version = 11 : i64} {
  func.func @head_kernel(%arg0: i32, %arg1: memref<32x512xbf16, #tpu.memory_space<vmem>>, %arg2: memref<512x2048xbf16, #tpu.memory_space<vmem>>, %arg3: memref<1x2048xf32, #tpu.memory_space<vmem>>, %arg4: memref<1x2048xf32, #tpu.memory_space<vmem>>, %arg5: memref<2048x128xbf16, #tpu.memory_space<vmem>>, %arg6: memref<1x128xf32, #tpu.memory_space<vmem>>, %arg7: memref<2x128xf32, #tpu.memory_space<vmem>>, %arg8: memref<2x128xf32, #tpu.memory_space<vmem>>) attributes {dimension_semantics = [#tpu.dimension_semantics<arbitrary>], iteration_bounds = array<i64: 1>, scalar_prefetch = 0 : i64, scratch_operands = 1 : i64, tpu.core_type = #tpu.core_type<tc>, window_params = [{pipeline_mode = #tpu.pipeline_mode<synchronous>, transform_indices = @transform_0, window_bounds = array<i64: 32, 512>}, {transform_indices = @transform_1, window_bounds = array<i64: 512, 2048>}, {transform_indices = @transform_2, window_bounds = array<i64: 1, 2048>}, {transform_indices = @transform_3, window_bounds = array<i64: 1, 2048>}, {transform_indices = @transform_4, window_bounds = array<i64: 2048, 128>}, {pipeline_mode = #tpu.pipeline_mode<synchronous>, transform_indices = @transform_5, window_bounds = array<i64: 1, 128>}, {pipeline_mode = #tpu.pipeline_mode<synchronous>, transform_indices = @transform_6, window_bounds = array<i64: 2, 128>}]} {
    %c0_i32 = arith.constant 0 : i32
    %0 = arith.cmpi eq, %arg0, %c0_i32 : i32
    %1 = arith.extui %0 : i1 to i32
    %c0_i32_0 = arith.constant 0 : i32
    %2 = arith.cmpi ne, %1, %c0_i32_0 : i32
    scf.if %2 {
      %c0_19 = arith.constant 0 : index
      %c0_20 = arith.constant 0 : index
      %29 = vector.load %arg6[%c0_19, %c0_20] : memref<1x128xf32, #tpu.memory_space<vmem>>, vector<1x128xf32>
      %30 = vector.shape_cast %29 : vector<1x128xf32> to vector<1x128xf32>
      %31 = vector.broadcast %30 : vector<1x128xf32> to vector<2x128xf32>
      %c0_21 = arith.constant 0 : index
      %c0_22 = arith.constant 0 : index
      %32 = vector.load %arg8[%c0_21, %c0_22] : memref<2x128xf32, #tpu.memory_space<vmem>>, vector<2x128xf32>
      tpu.vector_store %arg8[%c0_21, %c0_22], %31 {strides = array<i32>} : memref<2x128xf32, #tpu.memory_space<vmem>>, vector<2x128xf32>,
    } else {
    }
    %c0 = arith.constant 0 : index
    %c0_1 = arith.constant 0 : index
    %3 = vector.load %arg1[%c0, %c0_1] : memref<32x512xbf16, #tpu.memory_space<vmem>>, vector<32x512xbf16>
    %c0_2 = arith.constant 0 : index
    %c0_3 = arith.constant 0 : index
    %4 = vector.load %arg2[%c0_2, %c0_3] : memref<512x2048xbf16, #tpu.memory_space<vmem>>, vector<512x2048xbf16>
    %cst = arith.constant dense<0.000000e+00> : vector<32x2048xf32>
    %5 = tpu.matmul %3, %4, %cst {dimension_numbers = #tpu.dot_dimension_numbers<[1], [0], [0], [1], [0, 0, 1, 1], [], []>} : vector<32x512xbf16>, vector<512x2048xbf16>, vector<32x2048xf32> -> vector<32x2048xf32>
    %c0_4 = arith.constant 0 : index
    %c0_5 = arith.constant 0 : index
    %6 = vector.load %arg3[%c0_4, %c0_5] : memref<1x2048xf32, #tpu.memory_space<vmem>>, vector<1x2048xf32>
    %7 = vector.broadcast %6 : vector<1x2048xf32> to vector<32x2048xf32>
    %8 = arith.mulf %5, %7 : vector<32x2048xf32>
    %c0_6 = arith.constant 0 : index
    %c0_7 = arith.constant 0 : index
    %9 = vector.load %arg4[%c0_6, %c0_7] : memref<1x2048xf32, #tpu.memory_space<vmem>>, vector<1x2048xf32>
    %10 = vector.broadcast %9 : vector<1x2048xf32> to vector<32x2048xf32>
    %11 = arith.addf %8, %10 : vector<32x2048xf32>
    %12 = arith.negf %11 : vector<32x2048xf32>
    %13 = math.exp %12 : vector<32x2048xf32>
    %cst_8 = arith.constant 1.000000e+00 : f32
    %14 = vector.broadcast %cst_8 : f32 to vector<32x2048xf32>
    %15 = arith.addf %14, %13 : vector<32x2048xf32>
    %16 = arith.divf %14, %15 : vector<32x2048xf32>
    %17 = arith.mulf %11, %16 : vector<32x2048xf32>
    %18 = vector.shape_cast %17 : vector<32x2048xf32> to vector<2x16x2048xf32>
    %cst_9 = arith.constant dense<0.000000e+00> : vector<2x2048xf32>
    %19 = vector.multi_reduction <add>, %18, %cst_9 [1] : vector<2x16x2048xf32> to vector<2x2048xf32>
    %c0_10 = arith.constant 0 : index
    %c0_11 = arith.constant 0 : index
    %20 = vector.load %arg8[%c0_10, %c0_11] : memref<2x128xf32, #tpu.memory_space<vmem>>, vector<2x128xf32>
    %21 = arith.truncf %19 : vector<2x2048xf32> to vector<2x2048xbf16>
    %c0_12 = arith.constant 0 : index
    %c0_13 = arith.constant 0 : index
    %22 = vector.load %arg5[%c0_12, %c0_13] : memref<2048x128xbf16, #tpu.memory_space<vmem>>, vector<2048x128xbf16>
    %cst_14 = arith.constant dense<0.000000e+00> : vector<2x128xf32>
    %23 = tpu.matmul %21, %22, %cst_14 {dimension_numbers = #tpu.dot_dimension_numbers<[1], [0], [0], [1], [0, 0, 1, 1], [], []>} : vector<2x2048xbf16>, vector<2048x128xbf16>, vector<2x128xf32> -> vector<2x128xf32>
    %24 = arith.addf %20, %23 : vector<2x128xf32>
    %c0_15 = arith.constant 0 : index
    %c0_16 = arith.constant 0 : index
    %25 = vector.load %arg8[%c0_15, %c0_16] : memref<2x128xf32, #tpu.memory_space<vmem>>, vector<2x128xf32>
    tpu.vector_store %arg8[%c0_15, %c0_16], %24 {strides = array<i32>} : memref<2x128xf32, #tpu.memory_space<vmem>>, vector<2x128xf32>,
    %c0_i32_17 = arith.constant 0 : i32
    %26 = arith.cmpi eq, %arg0, %c0_i32_17 : i32
    %27 = arith.extui %26 : i1 to i32
    %c0_i32_18 = arith.constant 0 : i32
    %28 = arith.cmpi ne, %27, %c0_i32_18 : i32
    scf.if %28 {
      %c0_19 = arith.constant 0 : index
      %c0_20 = arith.constant 0 : index
      %29 = vector.load %arg8[%c0_19, %c0_20] : memref<2x128xf32, #tpu.memory_space<vmem>>, vector<2x128xf32>
      %30 = arith.negf %29 : vector<2x128xf32>
      %31 = math.exp %30 : vector<2x128xf32>
      %cst_21 = arith.constant 1.000000e+00 : f32
      %32 = vector.broadcast %cst_21 : f32 to vector<2x128xf32>
      %33 = arith.addf %32, %31 : vector<2x128xf32>
      %34 = arith.divf %32, %33 : vector<2x128xf32>
      %c0_22 = arith.constant 0 : index
      %c0_23 = arith.constant 0 : index
      %35 = vector.load %arg7[%c0_22, %c0_23] : memref<2x128xf32, #tpu.memory_space<vmem>>, vector<2x128xf32>
      tpu.vector_store %arg7[%c0_22, %c0_23], %34 {strides = array<i32>} : memref<2x128xf32, #tpu.memory_space<vmem>>, vector<2x128xf32>,
    } else {
    }
    return
  }
  func.func @transform_0(%arg0: i32) -> (i32, i32) {
    %c0_i32 = arith.constant 0 : i32
    %c0_i32_0 = arith.constant 0 : i32
    %c0_i32_1 = arith.constant 0 : i32
    return %c0_i32, %c0_i32_0 : i32, i32
  }
  func.func @transform_1(%arg0: i32) -> (i32, i32) {
    %c0_i32 = arith.constant 0 : i32
    %c0_i32_0 = arith.constant 0 : i32
    return %c0_i32, %arg0 : i32, i32
  }
  func.func @transform_2(%arg0: i32) -> (i32, i32) {
    %c0_i32 = arith.constant 0 : i32
    %c0_i32_0 = arith.constant 0 : i32
    return %c0_i32, %arg0 : i32, i32
  }
  func.func @transform_3(%arg0: i32) -> (i32, i32) {
    %c0_i32 = arith.constant 0 : i32
    %c0_i32_0 = arith.constant 0 : i32
    return %c0_i32, %arg0 : i32, i32
  }
  func.func @transform_4(%arg0: i32) -> (i32, i32) {
    %c0_i32 = arith.constant 0 : i32
    %c0_i32_0 = arith.constant 0 : i32
    return %arg0, %c0_i32 : i32, i32
  }
  func.func @transform_5(%arg0: i32) -> (i32, i32) {
    %c0_i32 = arith.constant 0 : i32
    %c0_i32_0 = arith.constant 0 : i32
    %c0_i32_1 = arith.constant 0 : i32
    return %c0_i32, %c0_i32_0 : i32, i32
  }
  func.func @transform_6(%arg0: i32) -> (i32, i32) {
    %c0_i32 = arith.constant 0 : i32
    %c0_i32_0 = arith.constant 0 : i32
    %c0_i32_1 = arith.constant 0 : i32
    return %c0_i32, %c0_i32_0 : i32, i32
  }
}

</mosaic_0001>

<llo_original>
// kernel: tpu_custom_call.1
$region0: #{tpu_custom_call.1}
  #allocation0 [shape = 'u32[]', space=smem, size = 0x4, offset = 0x4, fixed_abs, tag = 'smem constant byte address 0x4 - core index']
  #allocation1 [shape = 'u32[144,128]{1,0:T(1,128)}', space=vmem, size = 0x12000, scoped, tag = 'internal scratch']
  #allocation2 [shape = 'f32[2,128]{1,0:T(2,128)}', space=vmem, size = 0x400, scoped, tag = 'scratch operand']
  %s0 = inlined_call_operand.hbm [shape: bf16[32,512], index: 0, kind: input, shape index: {}]
  %s1 = inlined_call_operand.hbm [shape: bf16[512,2048], index: 1, kind: input, shape index: {}]
  %s2 = inlined_call_operand.hbm [shape: f32[1,2048], index: 2, kind: input, shape index: {}]
  %s3 = inlined_call_operand.hbm [shape: f32[1,2048], index: 3, kind: input, shape index: {}]
  %s4 = inlined_call_operand.hbm [shape: bf16[2048,128], index: 4, kind: input, shape index: {}]
  %s5 = inlined_call_operand.hbm [shape: f32[1,128], index: 5, kind: input, shape index: {}]
  %s6 = inlined_call_operand.hbm [shape: f32[2,128], index: 6, kind: output, shape index: {}]
  %s7 = sld [smem:[#allocation0]]
  $region66: #{tpu_custom_call.1} parent=0
    _
  %s9 = ssub.s32 1, %s7
  %s10 = scalar_select 0, %s9, %s7
  $region1: #{tpu_custom_call.1} parent=0
    #allocation3 [shape = 'u8[32768]{0}', space=vmem, size = 0x8000, scoped, tag = 'input window, operand 0, single buffered']
    #allocation4 [shape = 's32[1]{0}', space=sflag, size = 0x4, scoped, tag = 'scoped memory for tpu_custom_call.1']
    #allocation5 [shape = 's32[1]{0}', space=sflag, size = 0x4, scoped, tag = 'scoped memory for tpu_custom_call.1']
    #allocation6 [shape = 'u8[2097152]{0}', space=vmem, size = 0x200000, scoped, tag = 'input window, operand 1, single buffered']
    #allocation7 [shape = 's32[1]{0}', space=sflag, size = 0x4, scoped, tag = 'scoped memory for tpu_custom_call.1']
    #allocation8 [shape = 'u8[8192]{0}', space=vmem, size = 0x2000, scoped, tag = 'input window, operand 2, single buffered']
    #allocation9 [shape = 'u8[8192]{0}', space=vmem, size = 0x2000, scoped, tag = 'input window, operand 3, single buffered']
    #allocation10 [shape = 's32[1]{0}', space=sflag, size = 0x4, scoped, tag = 'scoped memory for tpu_custom_call.1']
    #allocation11 [shape = 'u8[524288]{0}', space=vmem, size = 0x80000, scoped, tag = 'input window, operand 4, single buffered']
    #allocation12 [shape = 'u8[512]{0}', space=vmem, size = 0x400, scoped, tag = 'input window, operand 5, single buffered']
    #allocation13 [shape = 's32[1]{0}', space=sflag, size = 0x4, scoped, tag = 'scoped memory for tpu_custom_call.1']
    #allocation14 [shape = 'u8[1024]{0}', space=vmem, size = 0x400, scoped, tag = 'output window, operand 0, single buffered']
    %11 = vsyncpa [#allocation4], 0
    %12 = vsyncpa [#allocation7], 0
    %13 = vsyncpa [#allocation10], 0
    %14 = vsyncpa [#allocation13], 0
    %15 = vsyncpa [#allocation5], 0
    // Predicated region
    $region2: #{tpu_custom_call.1} parent=1 // pred_check
      _
    $region3: #{tpu_custom_call.1} parent=1 // pred_check_branch
      %17 = sbr.rel (0) target = $region5
    $region4: #{tpu_custom_call.1} parent=1 // pred_region
      %s19 = ssub.s32 1024, 1024
      %20 = vsyncadd [#allocation4], %s19
      %s21 = sshll.u32 [#allocation3], 4
      %s22 = int_to_ptr.vmem [resolvable:$true] %s21
      %27 = dma.hbm_to_vmem [thread:$0]  %s0, 1024, %s22, [#allocation4], 256, 256, 16
    $region5: #{tpu_custom_call.1} parent=1 // pred_fallthru
      _
    // Predicated region
    $region6: #{tpu_custom_call.1} parent=1 // pred_check
      _
    $region7: #{tpu_custom_call.1} parent=1 // pred_check_branch
      %29 = sbr.rel (0) target = $region9
    $region8: #{tpu_custom_call.1} parent=1 // pred_region
      %s31 = ssub.s32 65536, 65536
      %32 = vsyncadd [#allocation7], %s31
      %s33 = sshll.u32 [#allocation6], 4
      %s34 = int_to_ptr.vmem [resolvable:$true] %s33
      %39 = dma.hbm_to_vmem [thread:$0]  %s1, 65536, %s34, [#allocation7], 1024, 1024, 64
    $region9: #{tpu_custom_call.1} parent=1 // pred_fallthru
      _
    // Predicated region
    $region10: #{tpu_custom_call.1} parent=1 // pred_check
      _
    $region11: #{tpu_custom_call.1} parent=1 // pred_check_branch
      %41 = sbr.rel (0) target = $region13
    $region12: #{tpu_custom_call.1} parent=1 // pred_region
      %s43 = ssub.s32 256, 256
      %44 = vsyncadd [#allocation7], %s43
      %s46 = sshll.u32 [#allocation8], 4
      %s47 = int_to_ptr.vmem [resolvable:$true] %s46
      %49 = dma.hbm_to_vmem [thread:$0]  %s2, 256, %s47, [#allocation7]
    $region13: #{tpu_custom_call.1} parent=1 // pred_fallthru
      _
    // Predicated region
    $region14: #{tpu_custom_call.1} parent=1 // pred_check
      _
    $region15: #{tpu_custom_call.1} parent=1 // pred_check_branch
      %51 = sbr.rel (0) target = $region17
    $region16: #{tpu_custom_call.1} parent=1 // pred_region
      %s53 = ssub.s32 256, 256
      %54 = vsyncadd [#allocation10], %s53
      %s56 = sshll.u32 [#allocation9], 4
      %s57 = int_to_ptr.vmem [resolvable:$true] %s56
      %59 = dma.hbm_to_vmem [thread:$0]  %s3, 256, %s57, [#allocation10]
    $region17: #{tpu_custom_call.1} parent=1 // pred_fallthru
      _
    // Predicated region
    $region18: #{tpu_custom_call.1} parent=1 // pred_check
      _
    $region19: #{tpu_custom_call.1} parent=1 // pred_check_branch
      %61 = sbr.rel (0) target = $region21
    $region20: #{tpu_custom_call.1} parent=1 // pred_region
      %s63 = ssub.s32 16384, 16384
      %64 = vsyncadd [#allocation10], %s63
      %s65 = sshll.u32 [#allocation11], 4
      %s66 = int_to_ptr.vmem [resolvable:$true] %s65
      %71 = dma.hbm_to_vmem [thread:$0]  %s4, 16384, %s66, [#allocation10], 64, 64, 4
    $region21: #{tpu_custom_call.1} parent=1 // pred_fallthru
      _
    // Predicated region
    $region22: #{tpu_custom_call.1} parent=1 // pred_check
      _
    $region23: #{tpu_custom_call.1} parent=1 // pred_check_branch
      %73 = sbr.rel (0) target = $region25
    $region24: #{tpu_custom_call.1} parent=1 // pred_region
      %s75 = ssub.s32 16, 16
      %76 = vsyncadd [#allocation13], %s75
      %s78 = sshll.u32 [#allocation12], 4
      %s79 = int_to_ptr.vmem [resolvable:$true] %s78
      %81 = dma.hbm_to_vmem [thread:$0]  %s5, 16, %s79, [#allocation13]
    $region25: #{tpu_custom_call.1} parent=1 // pred_fallthru
      _
    // Predicated region
    $region26: #{tpu_custom_call.1} parent=1 // pred_check
      _
    $region27: #{tpu_custom_call.1} parent=1 // pred_check_branch
      %83 = sbr.rel (0) target = $region29
    $region28: #{tpu_custom_call.1} parent=1 // pred_region
      %84 = dma.done [#allocation4], 1024
    $region29: #{tpu_custom_call.1} parent=1 // pred_fallthru
      _
    // Predicated region
    $region30: #{tpu_custom_call.1} parent=1 // pred_check
      _
    $region31: #{tpu_custom_call.1} parent=1 // pred_check_branch
      %86 = sbr.rel (0) target = $region33
    $region32: #{tpu_custom_call.1} parent=1 // pred_region
      %87 = dma.done [#allocation7], 65536
    $region33: #{tpu_custom_call.1} parent=1 // pred_fallthru
      _
    // Predicated region
    $region34: #{tpu_custom_call.1} parent=1 // pred_check
      _
    $region35: #{tpu_custom_call.1} parent=1 // pred_check_branch
      %89 = sbr.rel (0) target = $region37
    $region36: #{tpu_custom_call.1} parent=1 // pred_region
      %90 = dma.done [#allocation7], 256
    $region37: #{tpu_custom_call.1} parent=1 // pred_fallthru
      _
    // Predicated region
    $region38: #{tpu_custom_call.1} parent=1 // pred_check
      _
    $region39: #{tpu_custom_call.1} parent=1 // pred_check_branch
      %92 = sbr.rel (0) target = $region41
    $region40: #{tpu_custom_call.1} parent=1 // pred_region
      %93 = dma.done [#allocation10], 256
    $region41: #{tpu_custom_call.1} parent=1 // pred_fallthru
      _
    // Predicated region
    $region42: #{tpu_custom_call.1} parent=1 // pred_check
      _
    $region43: #{tpu_custom_call.1} parent=1 // pred_check_branch
      %95 = sbr.rel (0) target = $region45
    $region44: #{tpu_custom_call.1} parent=1 // pred_region
      %96 = dma.done [#allocation10], 16384
    $region45: #{tpu_custom_call.1} parent=1 // pred_fallthru
      _
    // Predicated region
    $region46: #{tpu_custom_call.1} parent=1 // pred_check
      _
    $region47: #{tpu_custom_call.1} parent=1 // pred_check_branch
      %98 = sbr.rel (0) target = $region49
    $region48: #{tpu_custom_call.1} parent=1 // pred_region
      %99 = dma.done [#allocation13], 16
    $region49: #{tpu_custom_call.1} parent=1 // pred_fallthru
      _
    %p101 = scmp.eq.s32.totalorder 0, 0
    // Predicated region
    $region50: #{tpu_custom_call.1} parent=1 // pred_check
      %p102 = pneg %p101
    $region51: #{tpu_custom_call.1} parent=1 // pred_check_branch
      %104 = sbr.rel (%p102) target = $region53
    $region52: #{tpu_custom_call.1} parent=1 // pred_region
      %v105 = vld [vmem:[#allocation12] sm:$0x1]
      %v107 = vlaneseq
      %v108 = vshrl.u32 %v107, 7
      %v109 = vsub.s32 0, %v108
      %v110 = vrot.slane %v105, %v109
      %112 = vst [vmem:[#allocation2] sm:$0x3] %v110
    $region53: #{tpu_custom_call.1} parent=1 // pred_fallthru
      _
    %v113 = vld [vmem:[#allocation3] sm:$0xff]
    %v114 = vld [vmem:[#allocation3 + $0x8] sm:$0xff]
    %v115 = vld [vmem:[#allocation3 + $0x10] sm:$0xff]
    %v116 = vld [vmem:[#allocation3 + $0x18] sm:$0xff]
    %v117 = vld [vmem:[#allocation3 + $0x20] sm:$0xff]
    %v118 = vld [vmem:[#allocation3 + $0x28] sm:$0xff]
    %v119 = vld [vmem:[#allocation3 + $0x30] sm:$0xff]
    %v120 = vld [vmem:[#allocation3 + $0x38] sm:$0xff]
    %v121 = vld [vmem:[#allocation6] sm:$0xff]
    %v122 = vld [vmem:[#allocation6 + $0x8] sm:$0xff]
    %v123 = vld [vmem:[#allocation6 + $0x10] sm:$0xff]
    %v124 = vld [vmem:[#allocation6 + $0x18] sm:$0xff]
    %v125 = vld [vmem:[#allocation6 + $0x20] sm:$0xff]
    %v126 = vld [vmem:[#allocation6 + $0x28] sm:$0xff]
    %v127 = vld [vmem:[#allocation6 + $0x30] sm:$0xff]
    %v128 = vld [vmem:[#allocation6 + $0x38] sm:$0xff]
    %v129 = vld [vmem:[#allocation6 + $0x40] sm:$0xff]
    %v130 = vld [vmem:[#allocation6 + $0x48] sm:$0xff]
    %v131 = vld [vmem:[#allocation6 + $0x50] sm:$0xff]
    %v132 = vld [vmem:[#allocation6 + $0x58] sm:$0xff]
    %v133 = vld [vmem:[#allocation6 + $0x60] sm:$0xff]
    %v134 = vld [vmem:[#allocation6 + $0x68] sm:$0xff]
    %v135 = vld [vmem:[#allocation6 + $0x70] sm:$0xff]
    %v136 = vld [vmem:[#allocation6 + $0x78] sm:$0xff]
    %v137 = vld [vmem:[#allocation6 + $0x80] sm:$0xff]
    %v138 = vld [vmem:[#allocation6 + $0x88] sm:$0xff]
    %v139 = vld [vmem:[#allocation6 + $0x90] sm:$0xff]
    %v140 = vld [vmem:[#allocation6 + $0x98] sm:$0xff]
    %v141 = vld [vmem:[#allocation6 + $0xa0] sm:$0xff]
    %v142 = vld [vmem:[#allocation6 + $0xa8] sm:$0xff]
    %v143 = vld [vmem:[#allocation6 + $0xb0] sm:$0xff]
    %v144 = vld [vmem:[#allocation6 + $0xb8] sm:$0xff]
    %v145 = vld [vmem:[#allocation6 + $0xc0] sm:$0xff]
    %v146 = vld [vmem:[#allocation6 + $0xc8] sm:$0xff]
    %v147 = vld [vmem:[#allocation6 + $0xd0] sm:$0xff]
    %v148 = vld [vmem:[#allocation6 + $0xd8] sm:$0xff]
    %v149 = vld [vmem:[#allocation6 + $0xe0] sm:$0xff]
    %v150 = vld [vmem:[#allocation6 + $0xe8] sm:$0xff]
    %v151 = vld [vmem:[#allocation6 + $0xf0] sm:$0xff]
    %v152 = vld [vmem:[#allocation6 + $0xf8] sm:$0xff]
    %v153 = vld [vmem:[#allocation6 + $0x100] sm:$0xff]
    %v154 = vld [vmem:[#allocation6 + $0x108] sm:$0xff]
    %v155 = vld [vmem:[#allocation6 + $0x110] sm:$0xff]
    %v156 = vld [vmem:[#allocation6 + $0x118] sm:$0xff]
    %v157 = vld [vmem:[#allocation6 + $0x120] sm:$0xff]
    %v158 = vld [vmem:[#allocation6 + $0x128] sm:$0xff]
    %v159 = vld [vmem:[#allocation6 + $0x130] sm:$0xff]
    %v160 = vld [vmem:[#allocation6 + $0x138] sm:$0xff]
    %v161 = vld [vmem:[#allocation6 + $0x140] sm:$0xff]
    %v162 = vld [vmem:[#allocation6 + $0x148] sm:$0xff]
    %v163 = vld [vmem:[#allocation6 + $0x150] sm:$0xff]
    %v164 = vld [vmem:[#allocation6 + $0x158] sm:$0xff]
    %v165 = vld [vmem:[#allocation6 + $0x160] sm:$0xff]
    %v166 = vld [vmem:[#allocation6 + $0x168] sm:$0xff]
    %v167 = vld [vmem:[#allocation6 + $0x170] sm:$0xff]
    %v168 = vld [vmem:[#allocation6 + $0x178] sm:$0xff]
    %v169 = vld [vmem:[#allocation6 + $0x180] sm:$0xff]
    %v170 = vld [vmem:[#allocation6 + $0x188] sm:$0xff]
    %v171 = vld [vmem:[#allocation6 + $0x190] sm:$0xff]
    %v172 = vld [vmem:[#allocation6 + $0x198] sm:$0xff]
    %v173 = vld [vmem:[#allocation6 + $0x1a0] sm:$0xff]
    %v174 = vld [vmem:[#allocation6 + $0x1a8] sm:$0xff]
    %v175 = vld [vmem:[#allocation6 + $0x1b0] sm:$0xff]
    %v176 = vld [vmem:[#allocation6 + $0x1b8] sm:$0xff]
    %v177 = vld [vmem:[#allocation6 + $0x1c0] sm:$0xff]
    %v178 = vld [vmem:[#allocation6 + $0x1c8] sm:$0xff]
    %v179 = vld [vmem:[#allocation6 + $0x1d0] sm:$0xff]
    %v180 = vld [vmem:[#allocation6 + $0x1d8] sm:$0xff]
    %v181 = vld [vmem:[#allocation6 + $0x1e0] sm:$0xff]
    %v182 = vld [vmem:[#allocation6 + $0x1e8] sm:$0xff]
    %v183 = vld [vmem:[#allocation6 + $0x1f0] sm:$0xff]
    %v184 = vld [vmem:[#allocation6 + $0x1f8] sm:$0xff]
    %v185 = vld [vmem:[#allocation6 + $0x200] sm:$0xff]
    %v186 = vld [vmem:[#allocation6 + $0x208] sm:$0xff]
    %v187 = vld [vmem:[#allocation6 + $0x210] sm:$0xff]
    %v188 = vld [vmem:[#allocation6 + $0x218] sm:$0xff]
    %v189 = vld [vmem:[#allocation6 + $0x220] sm:$0xff]
    %v190 = vld [vmem:[#allocation6 + $0x228] sm:$0xff]
    %v191 = vld [vmem:[#allocation6 + $0x230] sm:$0xff]
    %v192 = vld [vmem:[#allocation6 + $0x238] sm:$0xff]
    %v193 = vld [vmem:[#allocation6 + $0x240] sm:$0xff]
    %v194 = vld [vmem:[#allocation6 + $0x248] sm:$0xff]
    %v195 = vld [vmem:[#allocation6 + $0x250] sm:$0xff]
    %v196 = vld [vmem:[#allocation6 + $0x258] sm:$0xff]
    %v197 = vld [vmem:[#allocation6 + $0x260] sm:$0xff]
    %v198 = vld [vmem:[#allocation6 + $0x268] sm:$0xff]
    %v199 = vld [vmem:[#allocation6 + $0x270] sm:$0xff]
    %v200 = vld [vmem:[#allocation6 + $0x278] sm:$0xff]
    %v201 = vld [vmem:[#allocation6 + $0x280] sm:$0xff]
    %v202 = vld [vmem:[#allocation6 + $0x288] sm:$0xff]
    %v203 = vld [vmem:[#allocation6 + $0x290] sm:$0xff]
    %v204 = vld [vmem:[#allocation6 + $0x298] sm:$0xff]
    %v205 = vld [vmem:[#allocation6 + $0x2a0] sm:$0xff]
    %v206 = vld [vmem:[#allocation6 + $0x2a8] sm:$0xff]
    %v207 = vld [vmem:[#allocation6 + $0x2b0] sm:$0xff]
    %v208 = vld [vmem:[#allocation6 + $0x2b8] sm:$0xff]
    %v209 = vld [vmem:[#allocation6 + $0x2c0] sm:$0xff]
    %v210 = vld [vmem:[#allocation6 + $0x2c8] sm:$0xff]
    %v211 = vld [vmem:[#allocation6 + $0x2d0] sm:$0xff]
    %v212 = vld [vmem:[#allocation6 + $0x2d8] sm:$0xff]
    %v213 = vld [vmem:[#allocation6 + $0x2e0] sm:$0xff]
    %v214 = vld [vmem:[#allocation6 + $0x2e8] sm:$0xff]
    %v215 = vld [vmem:[#allocation6 + $0x2f0] sm:$0xff]
    %v216 = vld [vmem:[#allocation6 + $0x2f8] sm:$0xff]
    %v217 = vld [vmem:[#allocation6 + $0x300] sm:$0xff]
    %v218 = vld [vmem:[#allocation6 + $0x308] sm:$0xff]
    %v219 = vld [vmem:[#allocation6 + $0x310] sm:$0xff]
    %v220 = vld [vmem:[#allocation6 + $0x318] sm:$0xff]
    %v221 = vld [vmem:[#allocation6 + $0x320] sm:$0xff]
    %v222 = vld [vmem:[#allocation6 + $0x328] sm:$0xff]
    %v223 = vld [vmem:[#allocation6 + $0x330] sm:$0xff]
    %v224 = vld [vmem:[#allocation6 + $0x338] sm:$0xff]
    %v225 = vld [vmem:[#allocation6 + $0x340] sm:$0xff]
    %v226 = vld [vmem:[#allocation6 + $0x348] sm:$0xff]
    %v227 = vld [vmem:[#allocation6 + $0x350] sm:$0xff]
    %v228 = vld [vmem:[#allocation6 + $0x358] sm:$0xff]
    %v229 = vld [vmem:[#allocation6 + $0x360] sm:$0xff]
    %v230 = vld [vmem:[#allocation6 + $0x368] sm:$0xff]
    %v231 = vld [vmem:[#allocation6 + $0x370] sm:$0xff]
    %v232 = vld [vmem:[#allocation6 + $0x378] sm:$0xff]
    %v233 = vld [vmem:[#allocation6 + $0x380] sm:$0xff]
    %v234 = vld [vmem:[#allocation6 + $0x388] sm:$0xff]
    %v235 = vld [vmem:[#allocation6 + $0x390] sm:$0xff]
    %v236 = vld [vmem:[#allocation6 + $0x398] sm:$0xff]
    %v237 = vld [vmem:[#allocation6 + $0x3a0] sm:$0xff]
    %v238 = vld [vmem:[#allocation6 + $0x3a8] sm:$0xff]
    %v239 = vld [vmem:[#allocation6 + $0x3b0] sm:$0xff]
    %v240 = vld [vmem:[#allocation6 + $0x3b8] sm:$0xff]
    %v241 = vld [vmem:[#allocation6 + $0x3c0] sm:$0xff]
    %v242 = vld [vmem:[#allocation6 + $0x3c8] sm:$0xff]
    %v243 = vld [vmem:[#allocation6 + $0x3d0] sm:$0xff]
    %v244 = vld [vmem:[#allocation6 + $0x3d8] sm:$0xff]
    %v245 = vld [vmem:[#allocation6 + $0x3e0] sm:$0xff]
    %v246 = vld [vmem:[#allocation6 + $0x3e8] sm:$0xff]
    %v247 = vld [vmem:[#allocation6 + $0x3f0] sm:$0xff]
    %v248 = vld [vmem:[#allocation6 + $0x3f8] sm:$0xff]
    %v249 = vld [vmem:[#allocation6 + $0x400] sm:$0xff]
    %v250 = vld [vmem:[#allocation6 + $0x408] sm:$0xff]
    %v251 = vld [vmem:[#allocation6 + $0x410] sm:$0xff]
    %v252 = vld [vmem:[#allocation6 + $0x418] sm:$0xff]
    %v253 = vld [vmem:[#allocation6 + $0x420] sm:$0xff]
    %v254 = vld [vmem:[#allocation6 + $0x428] sm:$0xff]
    %v255 = vld [vmem:[#allocation6 + $0x430] sm:$0xff]
    %v256 = vld [vmem:[#allocation6 + $0x438] sm:$0xff]
    %v257 = vld [vmem:[#allocation6 + $0x440] sm:$0xff]
    %v258 = vld [vmem:[#allocation6 + $0x448] sm:$0xff]
    %v259 = vld [vmem:[#allocation6 + $0x450] sm:$0xff]
    %v260 = vld [vmem:[#allocation6 + $0x458] sm:$0xff]
    %v261 = vld [vmem:[#allocation6 + $0x460] sm:$0xff]
    %v262 = vld [vmem:[#allocation6 + $0x468] sm:$0xff]
    %v263 = vld [vmem:[#allocation6 + $0x470] sm:$0xff]
    %v264 = vld [vmem:[#allocation6 + $0x478] sm:$0xff]
    %v265 = vld [vmem:[#allocation6 + $0x480] sm:$0xff]
    %v266 = vld [vmem:[#allocation6 + $0x488] sm:$0xff]
    %v267 = vld [vmem:[#allocation6 + $0x490] sm:$0xff]
    %v268 = vld [vmem:[#allocation6 + $0x498] sm:$0xff]
    %v269 = vld [vmem:[#allocation6 + $0x4a0] sm:$0xff]
    %v270 = vld [vmem:[#allocation6 + $0x4a8] sm:$0xff]
    %v271 = vld [vmem:[#allocation6 + $0x4b0] sm:$0xff]
    %v272 = vld [vmem:[#allocation6 + $0x4b8] sm:$0xff]
    %v273 = vld [vmem:[#allocation6 + $0x4c0] sm:$0xff]
    %v274 = vld [vmem:[#allocation6 + $0x4c8] sm:$0xff]
    %v275 = vld [vmem:[#allocation6 + $0x4d0] sm:$0xff]
    %v276 = vld [vmem:[#allocation6 + $0x4d8] sm:$0xff]
    %v277 = vld [vmem:[#allocation6 + $0x4e0] sm:$0xff]
    %v278 = vld [vmem:[#allocation6 + $0x4e8] sm:$0xff]
    %v279 = vld [vmem:[#allocation6 + $0x4f0] sm:$0xff]
    %v280 = vld [vmem:[#allocation6 + $0x4f8] sm:$0xff]
    %v281 = vld [vmem:[#allocation6 + $0x500] sm:$0xff]
    %v282 = vld [vmem:[#allocation6 + $0x508] sm:$0xff]
    %v283 = vld [vmem:[#allocation6 + $0x510] sm:$0xff]
    %v284 = vld [vmem:[#allocation6 + $0x518] sm:$0xff]
    %v285 = vld [vmem:[#allocation6 + $0x520] sm:$0xff]
    %v286 = vld [vmem:[#allocation6 + $0x528] sm:$0xff]
    %v287 = vld [vmem:[#allocation6 + $0x530] sm:$0xff]
    %v288 = vld [vmem:[#allocation6 + $0x538] sm:$0xff]
    %v289 = vld [vmem:[#allocation6 + $0x540] sm:$0xff]
    %v290 = vld [vmem:[#allocation6 + $0x548] sm:$0xff]
    %v291 = vld [vmem:[#allocation6 + $0x550] sm:$0xff]
    %v292 = vld [vmem:[#allocation6 + $0x558] sm:$0xff]
    %v293 = vld [vmem:[#allocation6 + $0x560] sm:$0xff]
    %v294 = vld [vmem:[#allocation6 + $0x568] sm:$0xff]
    %v295 = vld [vmem:[#allocation6 + $0x570] sm:$0xff]
    %v296 = vld [vmem:[#allocation6 + $0x578] sm:$0xff]
    %v297 = vld [vmem:[#allocation6 + $0x580] sm:$0xff]
    %v298 = vld [vmem:[#allocation6 + $0x588] sm:$0xff]
    %v299 = vld [vmem:[#allocation6 + $0x590] sm:$0xff]
    %v300 = vld [vmem:[#allocation6 + $0x598] sm:$0xff]
    %v301 = vld [vmem:[#allocation6 + $0x5a0] sm:$0xff]
    %v302 = vld [vmem:[#allocation6 + $0x5a8] sm:$0xff]
    %v303 = vld [vmem:[#allocation6 + $0x5b0] sm:$0xff]
    %v304 = vld [vmem:[#allocation6 + $0x5b8] sm:$0xff]
    %v305 = vld [vmem:[#allocation6 + $0x5c0] sm:$0xff]
    %v306 = vld [vmem:[#allocation6 + $0x5c8] sm:$0xff]
    %v307 = vld [vmem:[#allocation6 + $0x5d0] sm:$0xff]
    %v308 = vld [vmem:[#allocation6 + $0x5d8] sm:$0xff]
    %v309 = vld [vmem:[#allocation6 + $0x5e0] sm:$0xff]
    %v310 = vld [vmem:[#allocation6 + $0x5e8] sm:$0xff]
    %v311 = vld [vmem:[#allocation6 + $0x5f0] sm:$0xff]
    %v312 = vld [vmem:[#allocation6 + $0x5f8] sm:$0xff]
    %v313 = vld [vmem:[#allocation6 + $0x600] sm:$0xff]
    %v314 = vld [vmem:[#allocation6 + $0x608] sm:$0xff]
    %v315 = vld [vmem:[#allocation6 + $0x610] sm:$0xff]
    %v316 = vld [vmem:[#allocation6 + $0x618] sm:$0xff]
    %v317 = vld [vmem:[#allocation6 + $0x620] sm:$0xff]
    %v318 = vld [vmem:[#allocation6 + $0x628] sm:$0xff]
    %v319 = vld [vmem:[#allocation6 + $0x630] sm:$0xff]
    %v320 = vld [vmem:[#allocation6 + $0x638] sm:$0xff]
    %v321 = vld [vmem:[#allocation6 + $0x640] sm:$0xff]
    %v322 = vld [vmem:[#allocation6 + $0x648] sm:$0xff]
    %v323 = vld [vmem:[#allocation6 + $0x650] sm:$0xff]
    %v324 = vld [vmem:[#allocation6 + $0x658] sm:$0xff]
    %v325 = vld [vmem:[#allocation6 + $0x660] sm:$0xff]
    %v326 = vld [vmem:[#allocation6 + $0x668] sm:$0xff]
    %v327 = vld [vmem:[#allocation6 + $0x670] sm:$0xff]
    %v328 = vld [vmem:[#allocation6 + $0x678] sm:$0xff]
    %v329 = vld [vmem:[#allocation6 + $0x680] sm:$0xff]
    %v330 = vld [vmem:[#allocation6 + $0x688] sm:$0xff]
    %v331 = vld [vmem:[#allocation6 + $0x690] sm:$0xff]
    %v332 = vld [vmem:[#allocation6 + $0x698] sm:$0xff]
    %v333 = vld [vmem:[#allocation6 + $0x6a0] sm:$0xff]
    %v334 = vld [vmem:[#allocation6 + $0x6a8] sm:$0xff]
    %v335 = vld [vmem:[#allocation6 + $0x6b0] sm:$0xff]
    %v336 = vld [vmem:[#allocation6 + $0x6b8] sm:$0xff]
    %v337 = vld [vmem:[#allocation6 + $0x6c0] sm:$0xff]
    %v338 = vld [vmem:[#allocation6 + $0x6c8] sm:$0xff]
    %v339 = vld [vmem:[#allocation6 + $0x6d0] sm:$0xff]
    %v340 = vld [vmem:[#allocation6 + $0x6d8] sm:$0xff]
    %v341 = vld [vmem:[#allocation6 + $0x6e0] sm:$0xff]
    %v342 = vld [vmem:[#allocation6 + $0x6e8] sm:$0xff]
    %v343 = vld [vmem:[#allocation6 + $0x6f0] sm:$0xff]
    %v344 = vld [vmem:[#allocation6 + $0x6f8] sm:$0xff]
    %v345 = vld [vmem:[#allocation6 + $0x700] sm:$0xff]
    %v346 = vld [vmem:[#allocation6 + $0x708] sm:$0xff]
    %v347 = vld [vmem:[#allocation6 + $0x710] sm:$0xff]
    %v348 = vld [vmem:[#allocation6 + $0x718] sm:$0xff]
    %v349 = vld [vmem:[#allocation6 + $0x720] sm:$0xff]
    %v350 = vld [vmem:[#allocation6 + $0x728] sm:$0xff]
    %v351 = vld [vmem:[#allocation6 + $0x730] sm:$0xff]
    %v352 = vld [vmem:[#allocation6 + $0x738] sm:$0xff]
    %v353 = vld [vmem:[#allocation6 + $0x740] sm:$0xff]
    %v354 = vld [vmem:[#allocation6 + $0x748] sm:$0xff]
    %v355 = vld [vmem:[#allocation6 + $0x750] sm:$0xff]
    %v356 = vld [vmem:[#allocation6 + $0x758] sm:$0xff]
    %v357 = vld [vmem:[#allocation6 + $0x760] sm:$0xff]
    %v358 = vld [vmem:[#allocation6 + $0x768] sm:$0xff]
    %v359 = vld [vmem:[#allocation6 + $0x770] sm:$0xff]
    %v360 = vld [vmem:[#allocation6 + $0x778] sm:$0xff]
    %v361 = vld [vmem:[#allocation6 + $0x780] sm:$0xff]
    %v362 = vld [vmem:[#allocation6 + $0x788] sm:$0xff]
    %v363 = vld [vmem:[#allocation6 + $0x790] sm:$0xff]
    %v364 = vld [vmem:[#allocation6 + $0x798] sm:$0xff]
    %v365 = vld [vmem:[#allocation6 + $0x7a0] sm:$0xff]
    %v366 = vld [vmem:[#allocation6 + $0x7a8] sm:$0xff]
    %v367 = vld [vmem:[#allocation6 + $0x7b0] sm:$0xff]
    %v368 = vld [vmem:[#allocation6 + $0x7b8] sm:$0xff]
    %v369 = vld [vmem:[#allocation6 + $0x7c0] sm:$0xff]
    %v370 = vld [vmem:[#allocation6 + $0x7c8] sm:$0xff]
    %v371 = vld [vmem:[#allocation6 + $0x7d0] sm:$0xff]
    %v372 = vld [vmem:[#allocation6 + $0x7d8] sm:$0xff]
    %v373 = vld [vmem:[#allocation6 + $0x7e0] sm:$0xff]
    %v374 = vld [vmem:[#allocation6 + $0x7e8] sm:$0xff]
    %v375 = vld [vmem:[#allocation6 + $0x7f0] sm:$0xff]
    %v376 = vld [vmem:[#allocation6 + $0x7f8] sm:$0xff]
    %v377 = vld [vmem:[#allocation6 + $0x800] sm:$0xff]
    %v378 = vld [vmem:[#allocation6 + $0x808] sm:$0xff]
    %v379 = vld [vmem:[#allocation6 + $0x810] sm:$0xff]
    %v380 = vld [vmem:[#allocation6 + $0x818] sm:$0xff]
    %v381 = vld [vmem:[#allocation6 + $0x820] sm:$0xff]
    %v382 = vld [vmem:[#allocation6 + $0x828] sm:$0xff]
    %v383 = vld [vmem:[#allocation6 + $0x830] sm:$0xff]
    %v384 = vld [vmem:[#allocation6 + $0x838] sm:$0xff]
    %v385 = vld [vmem:[#allocation6 + $0x840] sm:$0xff]
    %v386 = vld [vmem:[#allocation6 + $0x848] sm:$0xff]
    %v387 = vld [vmem:[#allocation6 + $0x850] sm:$0xff]
    %v388 = vld [vmem:[#allocation6 + $0x858] sm:$0xff]
    %v389 = vld [vmem:[#allocation6 + $0x860] sm:$0xff]
    %v390 = vld [vmem:[#allocation6 + $0x868] sm:$0xff]
    %v391 = vld [vmem:[#allocation6 + $0x870] sm:$0xff]
    %v392 = vld [vmem:[#allocation6 + $0x878] sm:$0xff]
    %v393 = vld [vmem:[#allocation6 + $0x880] sm:$0xff]
    %v394 = vld [vmem:[#allocation6 + $0x888] sm:$0xff]
    %v395 = vld [vmem:[#allocation6 + $0x890] sm:$0xff]
    %v396 = vld [vmem:[#allocation6 + $0x898] sm:$0xff]
    %v397 = vld [vmem:[#allocation6 + $0x8a0] sm:$0xff]
    %v398 = vld [vmem:[#allocation6 + $0x8a8] sm:$0xff]
    %v399 = vld [vmem:[#allocation6 + $0x8b0] sm:$0xff]
    %v400 = vld [vmem:[#allocation6 + $0x8b8] sm:$0xff]
    %v401 = vld [vmem:[#allocation6 + $0x8c0] sm:$0xff]
    %v402 = vld [vmem:[#allocation6 + $0x8c8] sm:$0xff]
    %v403 = vld [vmem:[#allocation6 + $0x8d0] sm:$0xff]
    %v404 = vld [vmem:[#allocation6 + $0x8d8] sm:$0xff]
    %v405 = vld [vmem:[#allocation6 + $0x8e0] sm:$0xff]
    %v406 = vld [vmem:[#allocation6 + $0x8e8] sm:$0xff]
    %v407 = vld [vmem:[#allocation6 + $0x8f0] sm:$0xff]
    %v408 = vld [vmem:[#allocation6 + $0x8f8] sm:$0xff]
    %v409 = vld [vmem:[#allocation6 + $0x900] sm:$0xff]
    %v410 = vld [vmem:[#allocation6 + $0x908] sm:$0xff]
    %v411 = vld [vmem:[#allocation6 + $0x910] sm:$0xff]
    %v412 = vld [vmem:[#allocation6 + $0x918] sm:$0xff]
    %v413 = vld [vmem:[#allocation6 + $0x920] sm:$0xff]
    %v414 = vld [vmem:[#allocation6 + $0x928] sm:$0xff]
    %v415 = vld [vmem:[#allocation6 + $0x930] sm:$0xff]
    %v416 = vld [vmem:[#allocation6 + $0x938] sm:$0xff]
    %v417 = vld [vmem:[#allocation6 + $0x940] sm:$0xff]
    %v418 = vld [vmem:[#allocation6 + $0x948] sm:$0xff]
    %v419 = vld [vmem:[#allocation6 + $0x950] sm:$0xff]
    %v420 = vld [vmem:[#allocation6 + $0x958] sm:$0xff]
    %v421 = vld [vmem:[#allocation6 + $0x960] sm:$0xff]
    %v422 = vld [vmem:[#allocation6 + $0x968] sm:$0xff]
    %v423 = vld [vmem:[#allocation6 + $0x970] sm:$0xff]
    %v424 = vld [vmem:[#allocation6 + $0x978] sm:$0xff]
    %v425 = vld [vmem:[#allocation6 + $0x980] sm:$0xff]
    %v426 = vld [vmem:[#allocation6 + $0x988] sm:$0xff]
    %v427 = vld [vmem:[#allocation6 + $0x990] sm:$0xff]
    %v428 = vld [vmem:[#allocation6 + $0x998] sm:$0xff]
    %v429 = vld [vmem:[#allocation6 + $0x9a0] sm:$0xff]
    %v430 = vld [vmem:[#allocation6 + $0x9a8] sm:$0xff]
    %v431 = vld [vmem:[#allocation6 + $0x9b0] sm:$0xff]
    %v432 = vld [vmem:[#allocation6 + $0x9b8] sm:$0xff]
    %v433 = vld [vmem:[#allocation6 + $0x9c0] sm:$0xff]
    %v434 = vld [vmem:[#allocation6 + $0x9c8] sm:$0xff]
    %v435 = vld [vmem:[#allocation6 + $0x9d0] sm:$0xff]
    %v436 = vld [vmem:[#allocation6 + $0x9d8] sm:$0xff]
    %v437 = vld [vmem:[#allocation6 + $0x9e0] sm:$0xff]
    %v438 = vld [vmem:[#allocation6 + $0x9e8] sm:$0xff]
    %v439 = vld [vmem:[#allocation6 + $0x9f0] sm:$0xff]
    %v440 = vld [vmem:[#allocation6 + $0x9f8] sm:$0xff]
    %v441 = vld [vmem:[#allocation6 + $0xa00] sm:$0xff]
    %v442 = vld [vmem:[#allocation6 + $0xa08] sm:$0xff]
    %v443 = vld [vmem:[#allocation6 + $0xa10] sm:$0xff]
    %v444 = vld [vmem:[#allocation6 + $0xa18] sm:$0xff]
    %v445 = vld [vmem:[#allocation6 + $0xa20] sm:$0xff]
    %v446 = vld [vmem:[#allocation6 + $0xa28] sm:$0xff]
    %v447 = vld [vmem:[#allocation6 + $0xa30] sm:$0xff]
    %v448 = vld [vmem:[#allocation6 + $0xa38] sm:$0xff]
    %v449 = vld [vmem:[#allocation6 + $0xa40] sm:$0xff]
    %v450 = vld [vmem:[#allocation6 + $0xa48] sm:$0xff]
    %v451 = vld [vmem:[#allocation6 + $0xa50] sm:$0xff]
    %v452 = vld [vmem:[#allocation6 + $0xa58] sm:$0xff]
    %v453 = vld [vmem:[#allocation6 + $0xa60] sm:$0xff]
    %v454 = vld [vmem:[#allocation6 + $0xa68] sm:$0xff]
    %v455 = vld [vmem:[#allocation6 + $0xa70] sm:$0xff]
    %v456 = vld [vmem:[#allocation6 + $0xa78] sm:$0xff]
    %v457 = vld [vmem:[#allocation6 + $0xa80] sm:$0xff]
    %v458 = vld [vmem:[#allocation6 + $0xa88] sm:$0xff]
    %v459 = vld [vmem:[#allocation6 + $0xa90] sm:$0xff]
    %v460 = vld [vmem:[#allocation6 + $0xa98] sm:$0xff]
    %v461 = vld [vmem:[#allocation6 + $0xaa0] sm:$0xff]
    %v462 = vld [vmem:[#allocation6 + $0xaa8] sm:$0xff]
    %v463 = vld [vmem:[#allocation6 + $0xab0] sm:$0xff]
    %v464 = vld [vmem:[#allocation6 + $0xab8] sm:$0xff]
    %v465 = vld [vmem:[#allocation6 + $0xac0] sm:$0xff]
    %v466 = vld [vmem:[#allocation6 + $0xac8] sm:$0xff]
    %v467 = vld [vmem:[#allocation6 + $0xad0] sm:$0xff]
    %v468 = vld [vmem:[#allocation6 + $0xad8] sm:$0xff]
    %v469 = vld [vmem:[#allocation6 + $0xae0] sm:$0xff]
    %v470 = vld [vmem:[#allocation6 + $0xae8] sm:$0xff]
    %v471 = vld [vmem:[#allocation6 + $0xaf0] sm:$0xff]
    %v472 = vld [vmem:[#allocation6 + $0xaf8] sm:$0xff]
    %v473 = vld [vmem:[#allocation6 + $0xb00] sm:$0xff]
    %v474 = vld [vmem:[#allocation6 + $0xb08] sm:$0xff]
    %v475 = vld [vmem:[#allocation6 + $0xb10] sm:$0xff]
    %v476 = vld [vmem:[#allocation6 + $0xb18] sm:$0xff]
    %v477 = vld [vmem:[#allocation6 + $0xb20] sm:$0xff]
    %v478 = vld [vmem:[#allocation6 + $0xb28] sm:$0xff]
    %v479 = vld [vmem:[#allocation6 + $0xb30] sm:$0xff]
    %v480 = vld [vmem:[#allocation6 + $0xb38] sm:$0xff]
    %v481 = vld [vmem:[#allocation6 + $0xb40] sm:$0xff]
    %v482 = vld [vmem:[#allocation6 + $0xb48] sm:$0xff]
    %v483 = vld [vmem:[#allocation6 + $0xb50] sm:$0xff]
    %v484 = vld [vmem:[#allocation6 + $0xb58] sm:$0xff]
    %v485 = vld [vmem:[#allocation6 + $0xb60] sm:$0xff]
    %v486 = vld [vmem:[#allocation6 + $0xb68] sm:$0xff]
    %v487 = vld [vmem:[#allocation6 + $0xb70] sm:$0xff]
    %v488 = vld [vmem:[#allocation6 + $0xb78] sm:$0xff]
    %v489 = vld [vmem:[#allocation6 + $0xb80] sm:$0xff]
    %v490 = vld [vmem:[#allocation6 + $0xb88] sm:$0xff]
    %v491 = vld [vmem:[#allocation6 + $0xb90] sm:$0xff]
    %v492 = vld [vmem:[#allocation6 + $0xb98] sm:$0xff]
    %v493 = vld [vmem:[#allocation6 + $0xba0] sm:$0xff]
    %v494 = vld [vmem:[#allocation6 + $0xba8] sm:$0xff]
    %v495 = vld [vmem:[#allocation6 + $0xbb0] sm:$0xff]
    %v496 = vld [vmem:[#allocation6 + $0xbb8] sm:$0xff]
    %v497 = vld [vmem:[#allocation6 + $0xbc0] sm:$0xff]
    %v498 = vld [vmem:[#allocation6 + $0xbc8] sm:$0xff]
    %v499 = vld [vmem:[#allocation6 + $0xbd0] sm:$0xff]
    %v500 = vld [vmem:[#allocation6 + $0xbd8] sm:$0xff]
    %v501 = vld [vmem:[#allocation6 + $0xbe0] sm:$0xff]
    %v502 = vld [vmem:[#allocation6 + $0xbe8] sm:$0xff]
    %v503 = vld [vmem:[#allocation6 + $0xbf0] sm:$0xff]
    %v504 = vld [vmem:[#allocation6 + $0xbf8] sm:$0xff]
    %v505 = vld [vmem:[#allocation6 + $0xc00] sm:$0xff]
    %v506 = vld [vmem:[#allocation6 + $0xc08] sm:$0xff]
    %v507 = vld [vmem:[#allocation6 + $0xc10] sm:$0xff]
    %v508 = vld [vmem:[#allocation6 + $0xc18] sm:$0xff]
    %v509 = vld [vmem:[#allocation6 + $0xc20] sm:$0xff]
    %v510 = vld [vmem:[#allocation6 + $0xc28] sm:$0xff]
    %v511 = vld [vmem:[#allocation6 + $0xc30] sm:$0xff]
    %v512 = vld [vmem:[#allocation6 + $0xc38] sm:$0xff]
    %v513 = vld [vmem:[#allocation6 + $0xc40] sm:$0xff]
    %v514 = vld [vmem:[#allocation6 + $0xc48] sm:$0xff]
    %v515 = vld [vmem:[#allocation6 + $0xc50] sm:$0xff]
    %v516 = vld [vmem:[#allocation6 + $0xc58] sm:$0xff]
    %v517 = vld [vmem:[#allocation6 + $0xc60] sm:$0xff]
    %v518 = vld [vmem:[#allocation6 + $0xc68] sm:$0xff]
    %v519 = vld [vmem:[#allocation6 + $0xc70] sm:$0xff]
    %v520 = vld [vmem:[#allocation6 + $0xc78] sm:$0xff]
    %v521 = vld [vmem:[#allocation6 + $0xc80] sm:$0xff]
    %v522 = vld [vmem:[#allocation6 + $0xc88] sm:$0xff]
    %v523 = vld [vmem:[#allocation6 + $0xc90] sm:$0xff]
    %v524 = vld [vmem:[#allocation6 + $0xc98] sm:$0xff]
    %v525 = vld [vmem:[#allocation6 + $0xca0] sm:$0xff]
    %v526 = vld [vmem:[#allocation6 + $0xca8] sm:$0xff]
    %v527 = vld [vmem:[#allocation6 + $0xcb0] sm:$0xff]
    %v528 = vld [vmem:[#allocation6 + $0xcb8] sm:$0xff]
    %v529 = vld [vmem:[#allocation6 + $0xcc0] sm:$0xff]
    %v530 = vld [vmem:[#allocation6 + $0xcc8] sm:$0xff]
    %v531 = vld [vmem:[#allocation6 + $0xcd0] sm:$0xff]
    %v532 = vld [vmem:[#allocation6 + $0xcd8] sm:$0xff]
    %v533 = vld [vmem:[#allocation6 + $0xce0] sm:$0xff]
    %v534 = vld [vmem:[#allocation6 + $0xce8] sm:$0xff]
    %v535 = vld [vmem:[#allocation6 + $0xcf0] sm:$0xff]
    %v536 = vld [vmem:[#allocation6 + $0xcf8] sm:$0xff]
    %v537 = vld [vmem:[#allocation6 + $0xd00] sm:$0xff]
    %v538 = vld [vmem:[#allocation6 + $0xd08] sm:$0xff]
    %v539 = vld [vmem:[#allocation6 + $0xd10] sm:$0xff]
    %v540 = vld [vmem:[#allocation6 + $0xd18] sm:$0xff]
    %v541 = vld [vmem:[#allocation6 + $0xd20] sm:$0xff]
    %v542 = vld [vmem:[#allocation6 + $0xd28] sm:$0xff]
    %v543 = vld [vmem:[#allocation6 + $0xd30] sm:$0xff]
    %v544 = vld [vmem:[#allocation6 + $0xd38] sm:$0xff]
    %v545 = vld [vmem:[#allocation6 + $0xd40] sm:$0xff]
    %v546 = vld [vmem:[#allocation6 + $0xd48] sm:$0xff]
    %v547 = vld [vmem:[#allocation6 + $0xd50] sm:$0xff]
    %v548 = vld [vmem:[#allocation6 + $0xd58] sm:$0xff]
    %v549 = vld [vmem:[#allocation6 + $0xd60] sm:$0xff]
    %v550 = vld [vmem:[#allocation6 + $0xd68] sm:$0xff]
    %v551 = vld [vmem:[#allocation6 + $0xd70] sm:$0xff]
    %v552 = vld [vmem:[#allocation6 + $0xd78] sm:$0xff]
    %v553 = vld [vmem:[#allocation6 + $0xd80] sm:$0xff]
    %v554 = vld [vmem:[#allocation6 + $0xd88] sm:$0xff]
    %v555 = vld [vmem:[#allocation6 + $0xd90] sm:$0xff]
    %v556 = vld [vmem:[#allocation6 + $0xd98] sm:$0xff]
    %v557 = vld [vmem:[#allocation6 + $0xda0] sm:$0xff]
    %v558 = vld [vmem:[#allocation6 + $0xda8] sm:$0xff]
    %v559 = vld [vmem:[#allocation6 + $0xdb0] sm:$0xff]
    %v560 = vld [vmem:[#allocation6 + $0xdb8] sm:$0xff]
    %v561 = vld [vmem:[#allocation6 + $0xdc0] sm:$0xff]
    %v562 = vld [vmem:[#allocation6 + $0xdc8] sm:$0xff]
    %v563 = vld [vmem:[#allocation6 + $0xdd0] sm:$0xff]
    %v564 = vld [vmem:[#allocation6 + $0xdd8] sm:$0xff]
    %v565 = vld [vmem:[#allocation6 + $0xde0] sm:$0xff]
    %v566 = vld [vmem:[#allocation6 + $0xde8] sm:$0xff]
    %v567 = vld [vmem:[#allocation6 + $0xdf0] sm:$0xff]
    %v568 = vld [vmem:[#allocation6 + $0xdf8] sm:$0xff]
    %v569 = vld [vmem:[#allocation6 + $0xe00] sm:$0xff]
    %v570 = vld [vmem:[#allocation6 + $0xe08] sm:$0xff]
    %v571 = vld [vmem:[#allocation6 + $0xe10] sm:$0xff]
    %v572 = vld [vmem:[#allocation6 + $0xe18] sm:$0xff]
    %v573 = vld [vmem:[#allocation6 + $0xe20] sm:$0xff]
    %v574 = vld [vmem:[#allocation6 + $0xe28] sm:$0xff]
    %v575 = vld [vmem:[#allocation6 + $0xe30] sm:$0xff]
    %v576 = vld [vmem:[#allocation6 + $0xe38] sm:$0xff]
    %v577 = vld [vmem:[#allocation6 + $0xe40] sm:$0xff]
    %v578 = vld [vmem:[#allocation6 + $0xe48] sm:$0xff]
    %v579 = vld [vmem:[#allocation6 + $0xe50] sm:$0xff]
    %v580 = vld [vmem:[#allocation6 + $0xe58] sm:$0xff]
    %v581 = vld [vmem:[#allocation6 + $0xe60] sm:$0xff]
    %v582 = vld [vmem:[#allocation6 + $0xe68] sm:$0xff]
    %v583 = vld [vmem:[#allocation6 + $0xe70] sm:$0xff]
    %v584 = vld [vmem:[#allocation6 + $0xe78] sm:$0xff]
    %v585 = vld [vmem:[#allocation6 + $0xe80] sm:$0xff]
    %v586 = vld [vmem:[#allocation6 + $0xe88] sm:$0xff]
    %v587 = vld [vmem:[#allocation6 + $0xe90] sm:$0xff]
    %v588 = vld [vmem:[#allocation6 + $0xe98] sm:$0xff]
    %v589 = vld [vmem:[#allocation6 + $0xea0] sm:$0xff]
    %v590 = vld [vmem:[#allocation6 + $0xea8] sm:$0xff]
    %v591 = vld [vmem:[#allocation6 + $0xeb0] sm:$0xff]
    %v592 = vld [vmem:[#allocation6 + $0xeb8] sm:$0xff]
    %v593 = vld [vmem:[#allocation6 + $0xec0] sm:$0xff]
    %v594 = vld [vmem:[#allocation6 + $0xec8] sm:$0xff]
    %v595 = vld [vmem:[#allocation6 + $0xed0] sm:$0xff]
    %v596 = vld [vmem:[#allocation6 + $0xed8] sm:$0xff]
    %v597 = vld [vmem:[#allocation6 + $0xee0] sm:$0xff]
    %v598 = vld [vmem:[#allocation6 + $0xee8] sm:$0xff]
    %v599 = vld [vmem:[#allocation6 + $0xef0] sm:$0xff]
    %v600 = vld [vmem:[#allocation6 + $0xef8] sm:$0xff]
    %v601 = vld [vmem:[#allocation6 + $0xf00] sm:$0xff]
    %v602 = vld [vmem:[#allocation6 + $0xf08] sm:$0xff]
    %v603 = vld [vmem:[#allocation6 + $0xf10] sm:$0xff]
    %v604 = vld [vmem:[#allocation6 + $0xf18] sm:$0xff]
    %v605 = vld [vmem:[#allocation6 + $0xf20] sm:$0xff]
    %v606 = vld [vmem:[#allocation6 + $0xf28] sm:$0xff]
    %v607 = vld [vmem:[#allocation6 + $0xf30] sm:$0xff]
    %v608 = vld [vmem:[#allocation6 + $0xf38] sm:$0xff]
    %v609 = vld [vmem:[#allocation6 + $0xf40] sm:$0xff]
    %v610 = vld [vmem:[#allocation6 + $0xf48] sm:$0xff]
    %v611 = vld [vmem:[#allocation6 + $0xf50] sm:$0xff]
    %v612 = vld [vmem:[#allocation6 + $0xf58] sm:$0xff]
    %v613 = vld [vmem:[#allocation6 + $0xf60] sm:$0xff]
    %v614 = vld [vmem:[#allocation6 + $0xf68] sm:$0xff]
    %v615 = vld [vmem:[#allocation6 + $0xf70] sm:$0xff]
    %v616 = vld [vmem:[#allocation6 + $0xf78] sm:$0xff]
    %v617 = vld [vmem:[#allocation6 + $0xf80] sm:$0xff]
    %v618 = vld [vmem:[#allocation6 + $0xf88] sm:$0xff]
    %v619 = vld [vmem:[#allocation6 + $0xf90] sm:$0xff]
    %v620 = vld [vmem:[#allocation6 + $0xf98] sm:$0xff]
    %v621 = vld [vmem:[#allocation6 + $0xfa0] sm:$0xff]
    %v622 = vld [vmem:[#allocation6 + $0xfa8] sm:$0xff]
    %v623 = vld [vmem:[#allocation6 + $0xfb0] sm:$0xff]
    %v624 = vld [vmem:[#allocation6 + $0xfb8] sm:$0xff]
    %v625 = vld [vmem:[#allocation6 + $0xfc0] sm:$0xff]
    %v626 = vld [vmem:[#allocation6 + $0xfc8] sm:$0xff]
    %v627 = vld [vmem:[#allocation6 + $0xfd0] sm:$0xff]
    %v628 = vld [vmem:[#allocation6 + $0xfd8] sm:$0xff]
    %v629 = vld [vmem:[#allocation6 + $0xfe0] sm:$0xff]
    %v630 = vld [vmem:[#allocation6 + $0xfe8] sm:$0xff]
    %v631 = vld [vmem:[#allocation6 + $0xff0] sm:$0xff]
    %v632 = vld [vmem:[#allocation6 + $0xff8] sm:$0xff]
    %v641 = vunpack.c.l.b16 %v113
    %v642 = vunpack.c.h.b16 %v113
    %v643 = vunpack.c.l.b16 %v114
    %v644 = vunpack.c.h.b16 %v114
    %v645 = vunpack.c.l.b16 %v115
    %v646 = vunpack.c.h.b16 %v115
    %v647 = vunpack.c.l.b16 %v116
    %v648 = vunpack.c.h.b16 %v116
    %v649 = vunpack.c.l.b16 %v117
    %v650 = vunpack.c.h.b16 %v117
    %v651 = vunpack.c.l.b16 %v118
    %v652 = vunpack.c.h.b16 %v118
    %v653 = vunpack.c.l.b16 %v119
    %v654 = vunpack.c.h.b16 %v119
    %v655 = vunpack.c.l.b16 %v120
    %v656 = vunpack.c.h.b16 %v120
    %v657 = vpack.c.b16 %v645, %v641
    %v658 = vpack.c.b16 %v646, %v642
    %v659 = vpack.c.b16 %v647, %v643
    %v660 = vpack.c.b16 %v648, %v644
    %v661 = vpack.c.b16 %v653, %v649
    %v662 = vpack.c.b16 %v654, %v650
    %v663 = vpack.c.b16 %v655, %v651
    %v664 = vpack.c.b16 %v656, %v652
    %v1185 = vunpack.c.l.b16 %v121
    %v1186 = vunpack.c.h.b16 %v121
    %v1187 = vunpack.c.l.b16 %v122
    %v1188 = vunpack.c.h.b16 %v122
    %v1189 = vunpack.c.l.b16 %v123
    %v1190 = vunpack.c.h.b16 %v123
    %v1191 = vunpack.c.l.b16 %v124
    %v1192 = vunpack.c.h.b16 %v124
    %v1193 = vunpack.c.l.b16 %v125
    %v1194 = vunpack.c.h.b16 %v125
    %v1195 = vunpack.c.l.b16 %v126
    %v1196 = vunpack.c.h.b16 %v126
    %v1197 = vunpack.c.l.b16 %v127
    %v1198 = vunpack.c.h.b16 %v127
    %v1199 = vunpack.c.l.b16 %v128
    %v1200 = vunpack.c.h.b16 %v128
    %v1201 = vunpack.c.l.b16 %v129
    %v1202 = vunpack.c.h.b16 %v129
    %v1203 = vunpack.c.l.b16 %v130
    %v1204 = vunpack.c.h.b16 %v130
    %v1205 = vunpack.c.l.b16 %v131
    %v1206 = vunpack.c.h.b16 %v131
    %v1207 = vunpack.c.l.b16 %v132
    %v1208 = vunpack.c.h.b16 %v132
    %v1209 = vunpack.c.l.b16 %v133
    %v1210 = vunpack.c.h.b16 %v133
    %v1211 = vunpack.c.l.b16 %v134
    %v1212 = vunpack.c.h.b16 %v134
    %v1213 = vunpack.c.l.b16 %v135
    %v1214 = vunpack.c.h.b16 %v135
    %v1215 = vunpack.c.l.b16 %v136
    %v1216 = vunpack.c.h.b16 %v136
    %v1217 = vunpack.c.l.b16 %v137
    %v1218 = vunpack.c.h.b16 %v137
    %v1219 = vunpack.c.l.b16 %v138
    %v1220 = vunpack.c.h.b16 %v138
    %v1221 = vunpack.c.l.b16 %v139
    %v1222 = vunpack.c.h.b16 %v139
    %v1223 = vunpack.c.l.b16 %v140
    %v1224 = vunpack.c.h.b16 %v140
    %v1225 = vunpack.c.l.b16 %v141
    %v1226 = vunpack.c.h.b16 %v141
    %v1227 = vunpack.c.l.b16 %v142
    %v1228 = vunpack.c.h.b16 %v142
    %v1229 = vunpack.c.l.b16 %v143
    %v1230 = vunpack.c.h.b16 %v143
    %v1231 = vunpack.c.l.b16 %v144
    %v1232 = vunpack.c.h.b16 %v144
    %v1233 = vunpack.c.l.b16 %v145
    %v1234 = vunpack.c.h.b16 %v145
    %v1235 = vunpack.c.l.b16 %v146
    %v1236 = vunpack.c.h.b16 %v146
    %v1237 = vunpack.c.l.b16 %v147
    %v1238 = vunpack.c.h.b16 %v147
    %v1239 = vunpack.c.l.b16 %v148
    %v1240 = vunpack.c.h.b16 %v148
    %v1241 = vunpack.c.l.b16 %v149
    %v1242 = vunpack.c.h.b16 %v149
    %v1243 = vunpack.c.l.b16 %v150
    %v1244 = vunpack.c.h.b16 %v150
    %v1245 = vunpack.c.l.b16 %v151
    %v1246 = vunpack.c.h.b16 %v151
    %v1247 = vunpack.c.l.b16 %v152
    %v1248 = vunpack.c.h.b16 %v152
    %v1249 = vunpack.c.l.b16 %v153
    %v1250 = vunpack.c.h.b16 %v153
    %v1251 = vunpack.c.l.b16 %v154
    %v1252 = vunpack.c.h.b16 %v154
    %v1253 = vunpack.c.l.b16 %v155
    %v1254 = vunpack.c.h.b16 %v155
    %v1255 = vunpack.c.l.b16 %v156
    %v1256 = vunpack.c.h.b16 %v156
    %v1257 = vunpack.c.l.b16 %v157
    %v1258 = vunpack.c.h.b16 %v157
    %v1259 = vunpack.c.l.b16 %v158
    %v1260 = vunpack.c.h.b16 %v158
    %v1261 = vunpack.c.l.b16 %v159
    %v1262 = vunpack.c.h.b16 %v159
    %v1263 = vunpack.c.l.b16 %v160
    %v1264 = vunpack.c.h.b16 %v160
    %v1265 = vunpack.c.l.b16 %v161
    %v1266 = vunpack.c.h.b16 %v161
    %v1267 = vunpack.c.l.b16 %v162
    %v1268 = vunpack.c.h.b16 %v162
    %v1269 = vunpack.c.l.b16 %v163
    %v1270 = vunpack.c.h.b16 %v163
    %v1271 = vunpack.c.l.b16 %v164
    %v1272 = vunpack.c.h.b16 %v164
    %v1273 = vunpack.c.l.b16 %v165
    %v1274 = vunpack.c.h.b16 %v165
    %v1275 = vunpack.c.l.b16 %v166
    %v1276 = vunpack.c.h.b16 %v166
    %v1277 = vunpack.c.l.b16 %v167
    %v1278 = vunpack.c.h.b16 %v167
    %v1279 = vunpack.c.l.b16 %v168
    %v1280 = vunpack.c.h.b16 %v168
    %v1281 = vunpack.c.l.b16 %v169
    %v1282 = vunpack.c.h.b16 %v169
    %v1283 = vunpack.c.l.b16 %v170
    %v1284 = vunpack.c.h.b16 %v170
    %v1285 = vunpack.c.l.b16 %v171
    %v1286 = vunpack.c.h.b16 %v171
    %v1287 = vunpack.c.l.b16 %v172
    %v1288 = vunpack.c.h.b16 %v172
    %v1289 = vunpack.c.l.b16 %v173
    %v1290 = vunpack.c.h.b16 %v173
    %v1291 = vunpack.c.l.b16 %v174
    %v1292 = vunpack.c.h.b16 %v174
    %v1293 = vunpack.c.l.b16 %v175
    %v1294 = vunpack.c.h.b16 %v175
    %v1295 = vunpack.c.l.b16 %v176
    %v1296 = vunpack.c.h.b16 %v176
    %v1297 = vunpack.c.l.b16 %v177
    %v1298 = vunpack.c.h.b16 %v177
    %v1299 = vunpack.c.l.b16 %v178
    %v1300 = vunpack.c.h.b16 %v178
    %v1301 = vunpack.c.l.b16 %v179
    %v1302 = vunpack.c.h.b16 %v179
    %v1303 = vunpack.c.l.b16 %v180
    %v1304 = vunpack.c.h.b16 %v180
    %v1305 = vunpack.c.l.b16 %v181
    %v1306 = vunpack.c.h.b16 %v181
    %v1307 = vunpack.c.l.b16 %v182
    %v1308 = vunpack.c.h.b16 %v182
    %v1309 = vunpack.c.l.b16 %v183
    %v1310 = vunpack.c.h.b16 %v183
    %v1311 = vunpack.c.l.b16 %v184
    %v1312 = vunpack.c.h.b16 %v184
    %v1313 = vunpack.c.l.b16 %v185
    %v1314 = vunpack.c.h.b16 %v185
    %v1315 = vunpack.c.l.b16 %v186
    %v1316 = vunpack.c.h.b16 %v186
    %v1317 = vunpack.c.l.b16 %v187
    %v1318 = vunpack.c.h.b16 %v187
    %v1319 = vunpack.c.l.b16 %v188
    %v1320 = vunpack.c.h.b16 %v188
    %v1321 = vunpack.c.l.b16 %v189
    %v1322 = vunpack.c.h.b16 %v189
    %v1323 = vunpack.c.l.b16 %v190
    %v1324 = vunpack.c.h.b16 %v190
    %v1325 = vunpack.c.l.b16 %v191
    %v1326 = vunpack.c.h.b16 %v191
    %v1327 = vunpack.c.l.b16 %v192
    %v1328 = vunpack.c.h.b16 %v192
    %v1329 = vunpack.c.l.b16 %v193
    %v1330 = vunpack.c.h.b16 %v193
    %v1331 = vunpack.c.l.b16 %v194
    %v1332 = vunpack.c.h.b16 %v194
    %v1333 = vunpack.c.l.b16 %v195
    %v1334 = vunpack.c.h.b16 %v195
    %v1335 = vunpack.c.l.b16 %v196
    %v1336 = vunpack.c.h.b16 %v196
    %v1337 = vunpack.c.l.b16 %v197
    %v1338 = vunpack.c.h.b16 %v197
    %v1339 = vunpack.c.l.b16 %v198
    %v1340 = vunpack.c.h.b16 %v198
    %v1341 = vunpack.c.l.b16 %v199
    %v1342 = vunpack.c.h.b16 %v199
    %v1343 = vunpack.c.l.b16 %v200
    %v1344 = vunpack.c.h.b16 %v200
    %v1345 = vunpack.c.l.b16 %v201
    %v1346 = vunpack.c.h.b16 %v201
    %v1347 = vunpack.c.l.b16 %v202
    %v1348 = vunpack.c.h.b16 %v202
    %v1349 = vunpack.c.l.b16 %v203
    %v1350 = vunpack.c.h.b16 %v203
    %v1351 = vunpack.c.l.b16 %v204
    %v1352 = vunpack.c.h.b16 %v204
    %v1353 = vunpack.c.l.b16 %v205
    %v1354 = vunpack.c.h.b16 %v205
    %v1355 = vunpack.c.l.b16 %v206
    %v1356 = vunpack.c.h.b16 %v206
    %v1357 = vunpack.c.l.b16 %v207
    %v1358 = vunpack.c.h.b16 %v207
    %v1359 = vunpack.c.l.b16 %v208
    %v1360 = vunpack.c.h.b16 %v208
    %v1361 = vunpack.c.l.b16 %v209
    %v1362 = vunpack.c.h.b16 %v209
    %v1363 = vunpack.c.l.b16 %v210
    %v1364 = vunpack.c.h.b16 %v210
    %v1365 = vunpack.c.l.b16 %v211
    %v1366 = vunpack.c.h.b16 %v211
    %v1367 = vunpack.c.l.b16 %v212
    %v1368 = vunpack.c.h.b16 %v212
    %v1369 = vunpack.c.l.b16 %v213
    %v1370 = vunpack.c.h.b16 %v213
    %v1371 = vunpack.c.l.b16 %v214
    %v1372 = vunpack.c.h.b16 %v214
    %v1373 = vunpack.c.l.b16 %v215
    %v1374 = vunpack.c.h.b16 %v215
    %v1375 = vunpack.c.l.b16 %v216
    %v1376 = vunpack.c.h.b16 %v216
    %v1377 = vunpack.c.l.b16 %v217
    %v1378 = vunpack.c.h.b16 %v217
    %v1379 = vunpack.c.l.b16 %v218
    %v1380 = vunpack.c.h.b16 %v218
    %v1381 = vunpack.c.l.b16 %v219
    %v1382 = vunpack.c.h.b16 %v219
    %v1383 = vunpack.c.l.b16 %v220
    %v1384 = vunpack.c.h.b16 %v220
    %v1385 = vunpack.c.l.b16 %v221
    %v1386 = vunpack.c.h.b16 %v221
    %v1387 = vunpack.c.l.b16 %v222
    %v1388 = vunpack.c.h.b16 %v222
    %v1389 = vunpack.c.l.b16 %v223
    %v1390 = vunpack.c.h.b16 %v223
    %v1391 = vunpack.c.l.b16 %v224
    %v1392 = vunpack.c.h.b16 %v224
    %v1393 = vunpack.c.l.b16 %v225
    %v1394 = vunpack.c.h.b16 %v225
    %v1395 = vunpack.c.l.b16 %v226
    %v1396 = vunpack.c.h.b16 %v226
    %v1397 = vunpack.c.l.b16 %v227
    %v1398 = vunpack.c.h.b16 %v227
    %v1399 = vunpack.c.l.b16 %v228
    %v1400 = vunpack.c.h.b16 %v228
    %v1401 = vunpack.c.l.b16 %v229
    %v1402 = vunpack.c.h.b16 %v229
    %v1403 = vunpack.c.l.b16 %v230
    %v1404 = vunpack.c.h.b16 %v230
    %v1405 = vunpack.c.l.b16 %v231
    %v1406 = vunpack.c.h.b16 %v231
    %v1407 = vunpack.c.l.b16 %v232
    %v1408 = vunpack.c.h.b16 %v232
    %v1409 = vunpack.c.l.b16 %v233
    %v1410 = vunpack.c.h.b16 %v233
    %v1411 = vunpack.c.l.b16 %v234
    %v1412 = vunpack.c.h.b16 %v234
    %v1413 = vunpack.c.l.b16 %v235
    %v1414 = vunpack.c.h.b16 %v235
    %v1415 = vunpack.c.l.b16 %v236
    %v1416 = vunpack.c.h.b16 %v236
    %v1417 = vunpack.c.l.b16 %v237
    %v1418 = vunpack.c.h.b16 %v237
    %v1419 = vunpack.c.l.b16 %v238
    %v1420 = vunpack.c.h.b16 %v238
    %v1421 = vunpack.c.l.b16 %v239
    %v1422 = vunpack.c.h.b16 %v239
    %v1423 = vunpack.c.l.b16 %v240
    %v1424 = vunpack.c.h.b16 %v240
    %v1425 = vunpack.c.l.b16 %v241
    %v1426 = vunpack.c.h.b16 %v241
    %v1427 = vunpack.c.l.b16 %v242
    %v1428 = vunpack.c.h.b16 %v242
    %v1429 = vunpack.c.l.b16 %v243
    %v1430 = vunpack.c.h.b16 %v243
    %v1431 = vunpack.c.l.b16 %v244
    %v1432 = vunpack.c.h.b16 %v244
    %v1433 = vunpack.c.l.b16 %v245
    %v1434 = vunpack.c.h.b16 %v245
    %v1435 = vunpack.c.l.b16 %v246
    %v1436 = vunpack.c.h.b16 %v246
    %v1437 = vunpack.c.l.b16 %v247
    %v1438 = vunpack.c.h.b16 %v247
    %v1439 = vunpack.c.l.b16 %v248
    %v1440 = vunpack.c.h.b16 %v248
    %v1441 = vunpack.c.l.b16 %v249
    %v1442 = vunpack.c.h.b16 %v249
    %v1443 = vunpack.c.l.b16 %v250
    %v1444 = vunpack.c.h.b16 %v250
    %v1445 = vunpack.c.l.b16 %v251
    %v1446 = vunpack.c.h.b16 %v251
    %v1447 = vunpack.c.l.b16 %v252
    %v1448 = vunpack.c.h.b16 %v252
    %v1449 = vunpack.c.l.b16 %v253
    %v1450 = vunpack.c.h.b16 %v253
    %v1451 = vunpack.c.l.b16 %v254
    %v1452 = vunpack.c.h.b16 %v254
    %v1453 = vunpack.c.l.b16 %v255
    %v1454 = vunpack.c.h.b16 %v255
    %v1455 = vunpack.c.l.b16 %v256
    %v1456 = vunpack.c.h.b16 %v256
    %v1457 = vunpack.c.l.b16 %v257
    %v1458 = vunpack.c.h.b16 %v257
    %v1459 = vunpack.c.l.b16 %v258
    %v1460 = vunpack.c.h.b16 %v258
    %v1461 = vunpack.c.l.b16 %v259
    %v1462 = vunpack.c.h.b16 %v259
    %v1463 = vunpack.c.l.b16 %v260
    %v1464 = vunpack.c.h.b16 %v260
    %v1465 = vunpack.c.l.b16 %v261
    %v1466 = vunpack.c.h.b16 %v261
    %v1467 = vunpack.c.l.b16 %v262
    %v1468 = vunpack.c.h.b16 %v262
    %v1469 = vunpack.c.l.b16 %v263
    %v1470 = vunpack.c.h.b16 %v263
    %v1471 = vunpack.c.l.b16 %v264
    %v1472 = vunpack.c.h.b16 %v264
    %v1473 = vunpack.c.l.b16 %v265
    %v1474 = vunpack.c.h.b16 %v265
    %v1475 = vunpack.c.l.b16 %v266
    %v1476 = vunpack.c.h.b16 %v266
    %v1477 = vunpack.c.l.b16 %v267
    %v1478 = vunpack.c.h.b16 %v267
    %v1479 = vunpack.c.l.b16 %v268
    %v1480 = vunpack.c.h.b16 %v268
    %v1481 = vunpack.c.l.b16 %v269
    %v1482 = vunpack.c.h.b16 %v269
    %v1483 = vunpack.c.l.b16 %v270
    %v1484 = vunpack.c.h.b16 %v270
    %v1485 = vunpack.c.l.b16 %v271
    %v1486 = vunpack.c.h.b16 %v271
    %v1487 = vunpack.c.l.b16 %v272
    %v1488 = vunpack.c.h.b16 %v272
    %v1489 = vunpack.c.l.b16 %v273
    %v1490 = vunpack.c.h.b16 %v273
    %v1491 = vunpack.c.l.b16 %v274
    %v1492 = vunpack.c.h.b16 %v274
    %v1493 = vunpack.c.l.b16 %v275
    %v1494 = vunpack.c.h.b16 %v275
    %v1495 = vunpack.c.l.b16 %v276
    %v1496 = vunpack.c.h.b16 %v276
    %v1497 = vunpack.c.l.b16 %v277
    %v1498 = vunpack.c.h.b16 %v277
    %v1499 = vunpack.c.l.b16 %v278
    %v1500 = vunpack.c.h.b16 %v278
    %v1501 = vunpack.c.l.b16 %v279
    %v1502 = vunpack.c.h.b16 %v279
    %v1503 = vunpack.c.l.b16 %v280
    %v1504 = vunpack.c.h.b16 %v280
    %v1505 = vunpack.c.l.b16 %v281
    %v1506 = vunpack.c.h.b16 %v281
    %v1507 = vunpack.c.l.b16 %v282
    %v1508 = vunpack.c.h.b16 %v282
    %v1509 = vunpack.c.l.b16 %v283
    %v1510 = vunpack.c.h.b16 %v283
    %v1511 = vunpack.c.l.b16 %v284
    %v1512 = vunpack.c.h.b16 %v284
    %v1513 = vunpack.c.l.b16 %v285
    %v1514 = vunpack.c.h.b16 %v285
    %v1515 = vunpack.c.l.b16 %v286
    %v1516 = vunpack.c.h.b16 %v286
    %v1517 = vunpack.c.l.b16 %v287
    %v1518 = vunpack.c.h.b16 %v287
    %v1519 = vunpack.c.l.b16 %v288
    %v1520 = vunpack.c.h.b16 %v288
    %v1521 = vunpack.c.l.b16 %v289
    %v1522 = vunpack.c.h.b16 %v289
    %v1523 = vunpack.c.l.b16 %v290
    %v1524 = vunpack.c.h.b16 %v290
    %v1525 = vunpack.c.l.b16 %v291
    %v1526 = vunpack.c.h.b16 %v291
    %v1527 = vunpack.c.l.b16 %v292
    %v1528 = vunpack.c.h.b16 %v292
    %v1529 = vunpack.c.l.b16 %v293
    %v1530 = vunpack.c.h.b16 %v293
    %v1531 = vunpack.c.l.b16 %v294
    %v1532 = vunpack.c.h.b16 %v294
    %v1533 = vunpack.c.l.b16 %v295
    %v1534 = vunpack.c.h.b16 %v295
    %v1535 = vunpack.c.l.b16 %v296
    %v1536 = vunpack.c.h.b16 %v296
    %v1537 = vunpack.c.l.b16 %v297
    %v1538 = vunpack.c.h.b16 %v297
    %v1539 = vunpack.c.l.b16 %v298
    %v1540 = vunpack.c.h.b16 %v298
    %v1541 = vunpack.c.l.b16 %v299
    %v1542 = vunpack.c.h.b16 %v299
    %v1543 = vunpack.c.l.b16 %v300
    %v1544 = vunpack.c.h.b16 %v300
    %v1545 = vunpack.c.l.b16 %v301
    %v1546 = vunpack.c.h.b16 %v301
    %v1547 = vunpack.c.l.b16 %v302
    %v1548 = vunpack.c.h.b16 %v302
    %v1549 = vunpack.c.l.b16 %v303
    %v1550 = vunpack.c.h.b16 %v303
    %v1551 = vunpack.c.l.b16 %v304
    %v1552 = vunpack.c.h.b16 %v304
    %v1553 = vunpack.c.l.b16 %v305
    %v1554 = vunpack.c.h.b16 %v305
    %v1555 = vunpack.c.l.b16 %v306
    %v1556 = vunpack.c.h.b16 %v306
    %v1557 = vunpack.c.l.b16 %v307
    %v1558 = vunpack.c.h.b16 %v307
    %v1559 = vunpack.c.l.b16 %v308
    %v1560 = vunpack.c.h.b16 %v308
    %v1561 = vunpack.c.l.b16 %v309
    %v1562 = vunpack.c.h.b16 %v309
    %v1563 = vunpack.c.l.b16 %v310
    %v1564 = vunpack.c.h.b16 %v310
    %v1565 = vunpack.c.l.b16 %v311
    %v1566 = vunpack.c.h.b16 %v311
    %v1567 = vunpack.c.l.b16 %v312
    %v1568 = vunpack.c.h.b16 %v312
    %v1569 = vunpack.c.l.b16 %v313
    %v1570 = vunpack.c.h.b16 %v313
    %v1571 = vunpack.c.l.b16 %v314
    %v1572 = vunpack.c.h.b16 %v314
    %v1573 = vunpack.c.l.b16 %v315
    %v1574 = vunpack.c.h.b16 %v315
    %v1575 = vunpack.c.l.b16 %v316
    %v1576 = vunpack.c.h.b16 %v316
    %v1577 = vunpack.c.l.b16 %v317
    %v1578 = vunpack.c.h.b16 %v317
    %v1579 = vunpack.c.l.b16 %v318
    %v1580 = vunpack.c.h.b16 %v318
    %v1581 = vunpack.c.l.b16 %v319
    %v1582 = vunpack.c.h.b16 %v319
    %v1583 = vunpack.c.l.b16 %v320
    %v1584 = vunpack.c.h.b16 %v320
    %v1585 = vunpack.c.l.b16 %v321
    %v1586 = vunpack.c.h.b16 %v321
    %v1587 = vunpack.c.l.b16 %v322
    %v1588 = vunpack.c.h.b16 %v322
    %v1589 = vunpack.c.l.b16 %v323
    %v1590 = vunpack.c.h.b16 %v323
    %v1591 = vunpack.c.l.b16 %v324
    %v1592 = vunpack.c.h.b16 %v324
    %v1593 = vunpack.c.l.b16 %v325
    %v1594 = vunpack.c.h.b16 %v325
    %v1595 = vunpack.c.l.b16 %v326
    %v1596 = vunpack.c.h.b16 %v326
    %v1597 = vunpack.c.l.b16 %v327
    %v1598 = vunpack.c.h.b16 %v327
    %v1599 = vunpack.c.l.b16 %v328
    %v1600 = vunpack.c.h.b16 %v328
    %v1601 = vunpack.c.l.b16 %v329
    %v1602 = vunpack.c.h.b16 %v329
    %v1603 = vunpack.c.l.b16 %v330
    %v1604 = vunpack.c.h.b16 %v330
    %v1605 = vunpack.c.l.b16 %v331
    %v1606 = vunpack.c.h.b16 %v331
    %v1607 = vunpack.c.l.b16 %v332
    %v1608 = vunpack.c.h.b16 %v332
    %v1609 = vunpack.c.l.b16 %v333
    %v1610 = vunpack.c.h.b16 %v333
    %v1611 = vunpack.c.l.b16 %v334
    %v1612 = vunpack.c.h.b16 %v334
    %v1613 = vunpack.c.l.b16 %v335
    %v1614 = vunpack.c.h.b16 %v335
    %v1615 = vunpack.c.l.b16 %v336
    %v1616 = vunpack.c.h.b16 %v336
    %v1617 = vunpack.c.l.b16 %v337
    %v1618 = vunpack.c.h.b16 %v337
    %v1619 = vunpack.c.l.b16 %v338
    %v1620 = vunpack.c.h.b16 %v338
    %v1621 = vunpack.c.l.b16 %v339
    %v1622 = vunpack.c.h.b16 %v339
    %v1623 = vunpack.c.l.b16 %v340
    %v1624 = vunpack.c.h.b16 %v340
    %v1625 = vunpack.c.l.b16 %v341
    %v1626 = vunpack.c.h.b16 %v341
    %v1627 = vunpack.c.l.b16 %v342
    %v1628 = vunpack.c.h.b16 %v342
    %v1629 = vunpack.c.l.b16 %v343
    %v1630 = vunpack.c.h.b16 %v343
    %v1631 = vunpack.c.l.b16 %v344
    %v1632 = vunpack.c.h.b16 %v344
    %v1633 = vunpack.c.l.b16 %v345
    %v1634 = vunpack.c.h.b16 %v345
    %v1635 = vunpack.c.l.b16 %v346
    %v1636 = vunpack.c.h.b16 %v346
    %v1637 = vunpack.c.l.b16 %v347
    %v1638 = vunpack.c.h.b16 %v347
    %v1639 = vunpack.c.l.b16 %v348
    %v1640 = vunpack.c.h.b16 %v348
    %v1641 = vunpack.c.l.b16 %v349
    %v1642 = vunpack.c.h.b16 %v349
    %v1643 = vunpack.c.l.b16 %v350
    %v1644 = vunpack.c.h.b16 %v350
    %v1645 = vunpack.c.l.b16 %v351
    %v1646 = vunpack.c.h.b16 %v351
    %v1647 = vunpack.c.l.b16 %v352
    %v1648 = vunpack.c.h.b16 %v352
    %v1649 = vunpack.c.l.b16 %v353
    %v1650 = vunpack.c.h.b16 %v353
    %v1651 = vunpack.c.l.b16 %v354
    %v1652 = vunpack.c.h.b16 %v354
    %v1653 = vunpack.c.l.b16 %v355
    %v1654 = vunpack.c.h.b16 %v355
    %v1655 = vunpack.c.l.b16 %v356
    %v1656 = vunpack.c.h.b16 %v356
    %v1657 = vunpack.c.l.b16 %v357
    %v1658 = vunpack.c.h.b16 %v357
    %v1659 = vunpack.c.l.b16 %v358
    %v1660 = vunpack.c.h.b16 %v358
    %v1661 = vunpack.c.l.b16 %v359
    %v1662 = vunpack.c.h.b16 %v359
    %v1663 = vunpack.c.l.b16 %v360
    %v1664 = vunpack.c.h.b16 %v360
    %v1665 = vunpack.c.l.b16 %v361
    %v1666 = vunpack.c.h.b16 %v361
    %v1667 = vunpack.c.l.b16 %v362
    %v1668 = vunpack.c.h.b16 %v362
    %v1669 = vunpack.c.l.b16 %v363
    %v1670 = vunpack.c.h.b16 %v363
    %v1671 = vunpack.c.l.b16 %v364
    %v1672 = vunpack.c.h.b16 %v364
    %v1673 = vunpack.c.l.b16 %v365
    %v1674 = vunpack.c.h.b16 %v365
    %v1675 = vunpack.c.l.b16 %v366
    %v1676 = vunpack.c.h.b16 %v366
    %v1677 = vunpack.c.l.b16 %v367
    %v1678 = vunpack.c.h.b16 %v367
    %v1679 = vunpack.c.l.b16 %v368
    %v1680 = vunpack.c.h.b16 %v368
    %v1681 = vunpack.c.l.b16 %v369
    %v1682 = vunpack.c.h.b16 %v369
    %v1683 = vunpack.c.l.b16 %v370
    %v1684 = vunpack.c.h.b16 %v370
    %v1685 = vunpack.c.l.b16 %v371
    %v1686 = vunpack.c.h.b16 %v371
    %v1687 = vunpack.c.l.b16 %v372
    %v1688 = vunpack.c.h.b16 %v372
    %v1689 = vunpack.c.l.b16 %v373
    %v1690 = vunpack.c.h.b16 %v373
    %v1691 = vunpack.c.l.b16 %v374
    %v1692 = vunpack.c.h.b16 %v374
    %v1693 = vunpack.c.l.b16 %v375
    %v1694 = vunpack.c.h.b16 %v375
    %v1695 = vunpack.c.l.b16 %v376
    %v1696 = vunpack.c.h.b16 %v376
    %v1697 = vunpack.c.l.b16 %v377
    %v1698 = vunpack.c.h.b16 %v377
    %v1699 = vunpack.c.l.b16 %v378
    %v1700 = vunpack.c.h.b16 %v378
    %v1701 = vunpack.c.l.b16 %v379
    %v1702 = vunpack.c.h.b16 %v379
    %v1703 = vunpack.c.l.b16 %v380
    %v1704 = vunpack.c.h.b16 %v380
    %v1705 = vunpack.c.l.b16 %v381
    %v1706 = vunpack.c.h.b16 %v381
    %v1707 = vunpack.c.l.b16 %v382
    %v1708 = vunpack.c.h.b16 %v382
    %v1709 = vunpack.c.l.b16 %v383
    %v1710 = vunpack.c.h.b16 %v383
    %v1711 = vunpack.c.l.b16 %v384
    %v1712 = vunpack.c.h.b16 %v384
    %v1713 = vunpack.c.l.b16 %v385
    %v1714 = vunpack.c.h.b16 %v385
    %v1715 = vunpack.c.l.b16 %v386
    %v1716 = vunpack.c.h.b16 %v386
    %v1717 = vunpack.c.l.b16 %v387
    %v1718 = vunpack.c.h.b16 %v387
    %v1719 = vunpack.c.l.b16 %v388
    %v1720 = vunpack.c.h.b16 %v388
    %v1721 = vunpack.c.l.b16 %v389
    %v1722 = vunpack.c.h.b16 %v389
    %v1723 = vunpack.c.l.b16 %v390
    %v1724 = vunpack.c.h.b16 %v390
    %v1725 = vunpack.c.l.b16 %v391
    %v1726 = vunpack.c.h.b16 %v391
    %v1727 = vunpack.c.l.b16 %v392
    %v1728 = vunpack.c.h.b16 %v392
    %v1729 = vunpack.c.l.b16 %v393
    %v1730 = vunpack.c.h.b16 %v393
    %v1731 = vunpack.c.l.b16 %v394
    %v1732 = vunpack.c.h.b16 %v394
    %v1733 = vunpack.c.l.b16 %v395
    %v1734 = vunpack.c.h.b16 %v395
    %v1735 = vunpack.c.l.b16 %v396
    %v1736 = vunpack.c.h.b16 %v396
    %v1737 = vunpack.c.l.b16 %v397
    %v1738 = vunpack.c.h.b16 %v397
    %v1739 = vunpack.c.l.b16 %v398
    %v1740 = vunpack.c.h.b16 %v398
    %v1741 = vunpack.c.l.b16 %v399
    %v1742 = vunpack.c.h.b16 %v399
    %v1743 = vunpack.c.l.b16 %v400
    %v1744 = vunpack.c.h.b16 %v400
    %v1745 = vunpack.c.l.b16 %v401
    %v1746 = vunpack.c.h.b16 %v401
    %v1747 = vunpack.c.l.b16 %v402
    %v1748 = vunpack.c.h.b16 %v402
    %v1749 = vunpack.c.l.b16 %v403
    %v1750 = vunpack.c.h.b16 %v403
    %v1751 = vunpack.c.l.b16 %v404
    %v1752 = vunpack.c.h.b16 %v404
    %v1753 = vunpack.c.l.b16 %v405
    %v1754 = vunpack.c.h.b16 %v405
    %v1755 = vunpack.c.l.b16 %v406
    %v1756 = vunpack.c.h.b16 %v406
    %v1757 = vunpack.c.l.b16 %v407
    %v1758 = vunpack.c.h.b16 %v407
    %v1759 = vunpack.c.l.b16 %v408
    %v1760 = vunpack.c.h.b16 %v408
    %v1761 = vunpack.c.l.b16 %v409
    %v1762 = vunpack.c.h.b16 %v409
    %v1763 = vunpack.c.l.b16 %v410
    %v1764 = vunpack.c.h.b16 %v410
    %v1765 = vunpack.c.l.b16 %v411
    %v1766 = vunpack.c.h.b16 %v411
    %v1767 = vunpack.c.l.b16 %v412
    %v1768 = vunpack.c.h.b16 %v412
    %v1769 = vunpack.c.l.b16 %v413
    %v1770 = vunpack.c.h.b16 %v413
    %v1771 = vunpack.c.l.b16 %v414
    %v1772 = vunpack.c.h.b16 %v414
    %v1773 = vunpack.c.l.b16 %v415
    %v1774 = vunpack.c.h.b16 %v415
    %v1775 = vunpack.c.l.b16 %v416
    %v1776 = vunpack.c.h.b16 %v416
    %v1777 = vunpack.c.l.b16 %v417
    %v1778 = vunpack.c.h.b16 %v417
    %v1779 = vunpack.c.l.b16 %v418
    %v1780 = vunpack.c.h.b16 %v418
    %v1781 = vunpack.c.l.b16 %v419
    %v1782 = vunpack.c.h.b16 %v419
    %v1783 = vunpack.c.l.b16 %v420
    %v1784 = vunpack.c.h.b16 %v420
    %v1785 = vunpack.c.l.b16 %v421
    %v1786 = vunpack.c.h.b16 %v421
    %v1787 = vunpack.c.l.b16 %v422
    %v1788 = vunpack.c.h.b16 %v422
    %v1789 = vunpack.c.l.b16 %v423
    %v1790 = vunpack.c.h.b16 %v423
    %v1791 = vunpack.c.l.b16 %v424
    %v1792 = vunpack.c.h.b16 %v424
    %v1793 = vunpack.c.l.b16 %v425
    %v1794 = vunpack.c.h.b16 %v425
    %v1795 = vunpack.c.l.b16 %v426
    %v1796 = vunpack.c.h.b16 %v426
    %v1797 = vunpack.c.l.b16 %v427
    %v1798 = vunpack.c.h.b16 %v427
    %v1799 = vunpack.c.l.b16 %v428
    %v1800 = vunpack.c.h.b16 %v428
    %v1801 = vunpack.c.l.b16 %v429
    %v1802 = vunpack.c.h.b16 %v429
    %v1803 = vunpack.c.l.b16 %v430
    %v1804 = vunpack.c.h.b16 %v430
    %v1805 = vunpack.c.l.b16 %v431
    %v1806 = vunpack.c.h.b16 %v431
    %v1807 = vunpack.c.l.b16 %v432
    %v1808 = vunpack.c.h.b16 %v432
    %v1809 = vunpack.c.l.b16 %v433
    %v1810 = vunpack.c.h.b16 %v433
    %v1811 = vunpack.c.l.b16 %v434
    %v1812 = vunpack.c.h.b16 %v434
    %v1813 = vunpack.c.l.b16 %v435
    %v1814 = vunpack.c.h.b16 %v435
    %v1815 = vunpack.c.l.b16 %v436
    %v1816 = vunpack.c.h.b16 %v436
    %v1817 = vunpack.c.l.b16 %v437
    %v1818 = vunpack.c.h.b16 %v437
    %v1819 = vunpack.c.l.b16 %v438
    %v1820 = vunpack.c.h.b16 %v438
    %v1821 = vunpack.c.l.b16 %v439
    %v1822 = vunpack.c.h.b16 %v439
    %v1823 = vunpack.c.l.b16 %v440
    %v1824 = vunpack.c.h.b16 %v440
    %v1825 = vunpack.c.l.b16 %v441
    %v1826 = vunpack.c.h.b16 %v441
    %v1827 = vunpack.c.l.b16 %v442
    %v1828 = vunpack.c.h.b16 %v442
    %v1829 = vunpack.c.l.b16 %v443
    %v1830 = vunpack.c.h.b16 %v443
    %v1831 = vunpack.c.l.b16 %v444
    %v1832 = vunpack.c.h.b16 %v444
    %v1833 = vunpack.c.l.b16 %v445
    %v1834 = vunpack.c.h.b16 %v445
    %v1835 = vunpack.c.l.b16 %v446
    %v1836 = vunpack.c.h.b16 %v446
    %v1837 = vunpack.c.l.b16 %v447
    %v1838 = vunpack.c.h.b16 %v447
    %v1839 = vunpack.c.l.b16 %v448
    %v1840 = vunpack.c.h.b16 %v448
    %v1841 = vunpack.c.l.b16 %v449
    %v1842 = vunpack.c.h.b16 %v449
    %v1843 = vunpack.c.l.b16 %v450
    %v1844 = vunpack.c.h.b16 %v450
    %v1845 = vunpack.c.l.b16 %v451
    %v1846 = vunpack.c.h.b16 %v451
    %v1847 = vunpack.c.l.b16 %v452
    %v1848 = vunpack.c.h.b16 %v452
    %v1849 = vunpack.c.l.b16 %v453
    %v1850 = vunpack.c.h.b16 %v453
    %v1851 = vunpack.c.l.b16 %v454
    %v1852 = vunpack.c.h.b16 %v454
    %v1853 = vunpack.c.l.b16 %v455
    %v1854 = vunpack.c.h.b16 %v455
    %v1855 = vunpack.c.l.b16 %v456
    %v1856 = vunpack.c.h.b16 %v456
    %v1857 = vunpack.c.l.b16 %v457
    %v1858 = vunpack.c.h.b16 %v457
    %v1859 = vunpack.c.l.b16 %v458
    %v1860 = vunpack.c.h.b16 %v458
    %v1861 = vunpack.c.l.b16 %v459
    %v1862 = vunpack.c.h.b16 %v459
    %v1863 = vunpack.c.l.b16 %v460
    %v1864 = vunpack.c.h.b16 %v460
    %v1865 = vunpack.c.l.b16 %v461
    %v1866 = vunpack.c.h.b16 %v461
    %v1867 = vunpack.c.l.b16 %v462
    %v1868 = vunpack.c.h.b16 %v462
    %v1869 = vunpack.c.l.b16 %v463
    %v1870 = vunpack.c.h.b16 %v463
    %v1871 = vunpack.c.l.b16 %v464
    %v1872 = vunpack.c.h.b16 %v464
    %v1873 = vunpack.c.l.b16 %v465
    %v1874 = vunpack.c.h.b16 %v465
    %v1875 = vunpack.c.l.b16 %v466
    %v1876 = vunpack.c.h.b16 %v466
    %v1877 = vunpack.c.l.b16 %v467
    %v1878 = vunpack.c.h.b16 %v467
    %v1879 = vunpack.c.l.b16 %v468
    %v1880 = vunpack.c.h.b16 %v468
    %v1881 = vunpack.c.l.b16 %v469
    %v1882 = vunpack.c.h.b16 %v469
    %v1883 = vunpack.c.l.b16 %v470
    %v1884 = vunpack.c.h.b16 %v470
    %v1885 = vunpack.c.l.b16 %v471
    %v1886 = vunpack.c.h.b16 %v471
    %v1887 = vunpack.c.l.b16 %v472
    %v1888 = vunpack.c.h.b16 %v472
    %v1889 = vunpack.c.l.b16 %v473
    %v1890 = vunpack.c.h.b16 %v473
    %v1891 = vunpack.c.l.b16 %v474
    %v1892 = vunpack.c.h.b16 %v474
    %v1893 = vunpack.c.l.b16 %v475
    %v1894 = vunpack.c.h.b16 %v475
    %v1895 = vunpack.c.l.b16 %v476
    %v1896 = vunpack.c.h.b16 %v476
    %v1897 = vunpack.c.l.b16 %v477
    %v1898 = vunpack.c.h.b16 %v477
    %v1899 = vunpack.c.l.b16 %v478
    %v1900 = vunpack.c.h.b16 %v478
    %v1901 = vunpack.c.l.b16 %v479
    %v1902 = vunpack.c.h.b16 %v479
    %v1903 = vunpack.c.l.b16 %v480
    %v1904 = vunpack.c.h.b16 %v480
    %v1905 = vunpack.c.l.b16 %v481
    %v1906 = vunpack.c.h.b16 %v481
    %v1907 = vunpack.c.l.b16 %v482
    %v1908 = vunpack.c.h.b16 %v482
    %v1909 = vunpack.c.l.b16 %v483
    %v1910 = vunpack.c.h.b16 %v483
    %v1911 = vunpack.c.l.b16 %v484
    %v1912 = vunpack.c.h.b16 %v484
    %v1913 = vunpack.c.l.b16 %v485
    %v1914 = vunpack.c.h.b16 %v485
    %v1915 = vunpack.c.l.b16 %v486
    %v1916 = vunpack.c.h.b16 %v486
    %v1917 = vunpack.c.l.b16 %v487
    %v1918 = vunpack.c.h.b16 %v487
    %v1919 = vunpack.c.l.b16 %v488
    %v1920 = vunpack.c.h.b16 %v488
    %v1921 = vunpack.c.l.b16 %v489
    %v1922 = vunpack.c.h.b16 %v489
    %v1923 = vunpack.c.l.b16 %v490
    %v1924 = vunpack.c.h.b16 %v490
    %v1925 = vunpack.c.l.b16 %v491
    %v1926 = vunpack.c.h.b16 %v491
    %v1927 = vunpack.c.l.b16 %v492
    %v1928 = vunpack.c.h.b16 %v492
    %v1929 = vunpack.c.l.b16 %v493
    %v1930 = vunpack.c.h.b16 %v493
    %v1931 = vunpack.c.l.b16 %v494
    %v1932 = vunpack.c.h.b16 %v494
    %v1933 = vunpack.c.l.b16 %v495
    %v1934 = vunpack.c.h.b16 %v495
    %v1935 = vunpack.c.l.b16 %v496
    %v1936 = vunpack.c.h.b16 %v496
    %v1937 = vunpack.c.l.b16 %v497
    %v1938 = vunpack.c.h.b16 %v497
    %v1939 = vunpack.c.l.b16 %v498
    %v1940 = vunpack.c.h.b16 %v498
    %v1941 = vunpack.c.l.b16 %v499
    %v1942 = vunpack.c.h.b16 %v499
    %v1943 = vunpack.c.l.b16 %v500
    %v1944 = vunpack.c.h.b16 %v500
    %v1945 = vunpack.c.l.b16 %v501
    %v1946 = vunpack.c.h.b16 %v501
    %v1947 = vunpack.c.l.b16 %v502
    %v1948 = vunpack.c.h.b16 %v502
    %v1949 = vunpack.c.l.b16 %v503
    %v1950 = vunpack.c.h.b16 %v503
    %v1951 = vunpack.c.l.b16 %v504
    %v1952 = vunpack.c.h.b16 %v504
    %v1953 = vunpack.c.l.b16 %v505
    %v1954 = vunpack.c.h.b16 %v505
    %v1955 = vunpack.c.l.b16 %v506
    %v1956 = vunpack.c.h.b16 %v506
    %v1957 = vunpack.c.l.b16 %v507
    %v1958 = vunpack.c.h.b16 %v507
    %v1959 = vunpack.c.l.b16 %v508
    %v1960 = vunpack.c.h.b16 %v508
    %v1961 = vunpack.c.l.b16 %v509
    %v1962 = vunpack.c.h.b16 %v509
    %v1963 = vunpack.c.l.b16 %v510
    %v1964 = vunpack.c.h.b16 %v510
    %v1965 = vunpack.c.l.b16 %v511
    %v1966 = vunpack.c.h.b16 %v511
    %v1967 = vunpack.c.l.b16 %v512
    %v1968 = vunpack.c.h.b16 %v512
    %v1969 = vunpack.c.l.b16 %v513
    %v1970 = vunpack.c.h.b16 %v513
    %v1971 = vunpack.c.l.b16 %v514
    %v1972 = vunpack.c.h.b16 %v514
    %v1973 = vunpack.c.l.b16 %v515
    %v1974 = vunpack.c.h.b16 %v515
    %v1975 = vunpack.c.l.b16 %v516
    %v1976 = vunpack.c.h.b16 %v516
    %v1977 = vunpack.c.l.b16 %v517
    %v1978 = vunpack.c.h.b16 %v517
    %v1979 = vunpack.c.l.b16 %v518
    %v1980 = vunpack.c.h.b16 %v518
    %v1981 = vunpack.c.l.b16 %v519
    %v1982 = vunpack.c.h.b16 %v519
    %v1983 = vunpack.c.l.b16 %v520
    %v1984 = vunpack.c.h.b16 %v520
    %v1985 = vunpack.c.l.b16 %v521
    %v1986 = vunpack.c.h.b16 %v521
    %v1987 = vunpack.c.l.b16 %v522
    %v1988 = vunpack.c.h.b16 %v522
    %v1989 = vunpack.c.l.b16 %v523
    %v1990 = vunpack.c.h.b16 %v523
    %v1991 = vunpack.c.l.b16 %v524
    %v1992 = vunpack.c.h.b16 %v524
    %v1993 = vunpack.c.l.b16 %v525
    %v1994 = vunpack.c.h.b16 %v525
    %v1995 = vunpack.c.l.b16 %v526
    %v1996 = vunpack.c.h.b16 %v526
    %v1997 = vunpack.c.l.b16 %v527
    %v1998 = vunpack.c.h.b16 %v527
    %v1999 = vunpack.c.l.b16 %v528
    %v2000 = vunpack.c.h.b16 %v528
    %v2001 = vunpack.c.l.b16 %v529
    %v2002 = vunpack.c.h.b16 %v529
    %v2003 = vunpack.c.l.b16 %v530
    %v2004 = vunpack.c.h.b16 %v530
    %v2005 = vunpack.c.l.b16 %v531
    %v2006 = vunpack.c.h.b16 %v531
    %v2007 = vunpack.c.l.b16 %v532
    %v2008 = vunpack.c.h.b16 %v532
    %v2009 = vunpack.c.l.b16 %v533
    %v2010 = vunpack.c.h.b16 %v533
    %v2011 = vunpack.c.l.b16 %v534
    %v2012 = vunpack.c.h.b16 %v534
    %v2013 = vunpack.c.l.b16 %v535
    %v2014 = vunpack.c.h.b16 %v535
    %v2015 = vunpack.c.l.b16 %v536
    %v2016 = vunpack.c.h.b16 %v536
    %v2017 = vunpack.c.l.b16 %v537
    %v2018 = vunpack.c.h.b16 %v537
    %v2019 = vunpack.c.l.b16 %v538
    %v2020 = vunpack.c.h.b16 %v538
    %v2021 = vunpack.c.l.b16 %v539
    %v2022 = vunpack.c.h.b16 %v539
    %v2023 = vunpack.c.l.b16 %v540
    %v2024 = vunpack.c.h.b16 %v540
    %v2025 = vunpack.c.l.b16 %v541
    %v2026 = vunpack.c.h.b16 %v541
    %v2027 = vunpack.c.l.b16 %v542
    %v2028 = vunpack.c.h.b16 %v542
    %v2029 = vunpack.c.l.b16 %v543
    %v2030 = vunpack.c.h.b16 %v543
    %v2031 = vunpack.c.l.b16 %v544
    %v2032 = vunpack.c.h.b16 %v544
    %v2033 = vunpack.c.l.b16 %v545
    %v2034 = vunpack.c.h.b16 %v545
    %v2035 = vunpack.c.l.b16 %v546
    %v2036 = vunpack.c.h.b16 %v546
    %v2037 = vunpack.c.l.b16 %v547
    %v2038 = vunpack.c.h.b16 %v547
    %v2039 = vunpack.c.l.b16 %v548
    %v2040 = vunpack.c.h.b16 %v548
    %v2041 = vunpack.c.l.b16 %v549
    %v2042 = vunpack.c.h.b16 %v549
    %v2043 = vunpack.c.l.b16 %v550
    %v2044 = vunpack.c.h.b16 %v550
    %v2045 = vunpack.c.l.b16 %v551
    %v2046 = vunpack.c.h.b16 %v551
    %v2047 = vunpack.c.l.b16 %v552
    %v2048 = vunpack.c.h.b16 %v552
    %v2049 = vunpack.c.l.b16 %v553
    %v2050 = vunpack.c.h.b16 %v553
    %v2051 = vunpack.c.l.b16 %v554
    %v2052 = vunpack.c.h.b16 %v554
    %v2053 = vunpack.c.l.b16 %v555
    %v2054 = vunpack.c.h.b16 %v555
    %v2055 = vunpack.c.l.b16 %v556
    %v2056 = vunpack.c.h.b16 %v556
    %v2057 = vunpack.c.l.b16 %v557
    %v2058 = vunpack.c.h.b16 %v557
    %v2059 = vunpack.c.l.b16 %v558
    %v2060 = vunpack.c.h.b16 %v558
    %v2061 = vunpack.c.l.b16 %v559
    %v2062 = vunpack.c.h.b16 %v559
    %v2063 = vunpack.c.l.b16 %v560
    %v2064 = vunpack.c.h.b16 %v560
    %v2065 = vunpack.c.l.b16 %v561
    %v2066 = vunpack.c.h.b16 %v561
    %v2067 = vunpack.c.l.b16 %v562
    %v2068 = vunpack.c.h.b16 %v562
    %v2069 = vunpack.c.l.b16 %v563
    %v2070 = vunpack.c.h.b16 %v563
    %v2071 = vunpack.c.l.b16 %v564
    %v2072 = vunpack.c.h.b16 %v564
    %v2073 = vunpack.c.l.b16 %v565
    %v2074 = vunpack.c.h.b16 %v565
    %v2075 = vunpack.c.l.b16 %v566
    %v2076 = vunpack.c.h.b16 %v566
    %v2077 = vunpack.c.l.b16 %v567
    %v2078 = vunpack.c.h.b16 %v567
    %v2079 = vunpack.c.l.b16 %v568
    %v2080 = vunpack.c.h.b16 %v568
    %v2081 = vunpack.c.l.b16 %v569
    %v2082 = vunpack.c.h.b16 %v569
    %v2083 = vunpack.c.l.b16 %v570
    %v2084 = vunpack.c.h.b16 %v570
    %v2085 = vunpack.c.l.b16 %v571
    %v2086 = vunpack.c.h.b16 %v571
    %v2087 = vunpack.c.l.b16 %v572
    %v2088 = vunpack.c.h.b16 %v572
    %v2089 = vunpack.c.l.b16 %v573
    %v2090 = vunpack.c.h.b16 %v573
    %v2091 = vunpack.c.l.b16 %v574
    %v2092 = vunpack.c.h.b16 %v574
    %v2093 = vunpack.c.l.b16 %v575
    %v2094 = vunpack.c.h.b16 %v575
    %v2095 = vunpack.c.l.b16 %v576
    %v2096 = vunpack.c.h.b16 %v576
    %v2097 = vunpack.c.l.b16 %v577
    %v2098 = vunpack.c.h.b16 %v577
    %v2099 = vunpack.c.l.b16 %v578
    %v2100 = vunpack.c.h.b16 %v578
    %v2101 = vunpack.c.l.b16 %v579
    %v2102 = vunpack.c.h.b16 %v579
    %v2103 = vunpack.c.l.b16 %v580
    %v2104 = vunpack.c.h.b16 %v580
    %v2105 = vunpack.c.l.b16 %v581
    %v2106 = vunpack.c.h.b16 %v581
    %v2107 = vunpack.c.l.b16 %v582
    %v2108 = vunpack.c.h.b16 %v582
    %v2109 = vunpack.c.l.b16 %v583
    %v2110 = vunpack.c.h.b16 %v583
    %v2111 = vunpack.c.l.b16 %v584
    %v2112 = vunpack.c.h.b16 %v584
    %v2113 = vunpack.c.l.b16 %v585
    %v2114 = vunpack.c.h.b16 %v585
    %v2115 = vunpack.c.l.b16 %v586
    %v2116 = vunpack.c.h.b16 %v586
    %v2117 = vunpack.c.l.b16 %v587
    %v2118 = vunpack.c.h.b16 %v587
    %v2119 = vunpack.c.l.b16 %v588
    %v2120 = vunpack.c.h.b16 %v588
    %v2121 = vunpack.c.l.b16 %v589
    %v2122 = vunpack.c.h.b16 %v589
    %v2123 = vunpack.c.l.b16 %v590
    %v2124 = vunpack.c.h.b16 %v590
    %v2125 = vunpack.c.l.b16 %v591
    %v2126 = vunpack.c.h.b16 %v591
    %v2127 = vunpack.c.l.b16 %v592
    %v2128 = vunpack.c.h.b16 %v592
    %v2129 = vunpack.c.l.b16 %v593
    %v2130 = vunpack.c.h.b16 %v593
    %v2131 = vunpack.c.l.b16 %v594
    %v2132 = vunpack.c.h.b16 %v594
    %v2133 = vunpack.c.l.b16 %v595
    %v2134 = vunpack.c.h.b16 %v595
    %v2135 = vunpack.c.l.b16 %v596
    %v2136 = vunpack.c.h.b16 %v596
    %v2137 = vunpack.c.l.b16 %v597
    %v2138 = vunpack.c.h.b16 %v597
    %v2139 = vunpack.c.l.b16 %v598
    %v2140 = vunpack.c.h.b16 %v598
    %v2141 = vunpack.c.l.b16 %v599
    %v2142 = vunpack.c.h.b16 %v599
    %v2143 = vunpack.c.l.b16 %v600
    %v2144 = vunpack.c.h.b16 %v600
    %v2145 = vunpack.c.l.b16 %v601
    %v2146 = vunpack.c.h.b16 %v601
    %v2147 = vunpack.c.l.b16 %v602
    %v2148 = vunpack.c.h.b16 %v602
    %v2149 = vunpack.c.l.b16 %v603
    %v2150 = vunpack.c.h.b16 %v603
    %v2151 = vunpack.c.l.b16 %v604
    %v2152 = vunpack.c.h.b16 %v604
    %v2153 = vunpack.c.l.b16 %v605
    %v2154 = vunpack.c.h.b16 %v605
    %v2155 = vunpack.c.l.b16 %v606
    %v2156 = vunpack.c.h.b16 %v606
    %v2157 = vunpack.c.l.b16 %v607
    %v2158 = vunpack.c.h.b16 %v607
    %v2159 = vunpack.c.l.b16 %v608
    %v2160 = vunpack.c.h.b16 %v608
    %v2161 = vunpack.c.l.b16 %v609
    %v2162 = vunpack.c.h.b16 %v609
    %v2163 = vunpack.c.l.b16 %v610
    %v2164 = vunpack.c.h.b16 %v610
    %v2165 = vunpack.c.l.b16 %v611
    %v2166 = vunpack.c.h.b16 %v611
    %v2167 = vunpack.c.l.b16 %v612
    %v2168 = vunpack.c.h.b16 %v612
    %v2169 = vunpack.c.l.b16 %v613
    %v2170 = vunpack.c.h.b16 %v613
    %v2171 = vunpack.c.l.b16 %v614
    %v2172 = vunpack.c.h.b16 %v614
    %v2173 = vunpack.c.l.b16 %v615
    %v2174 = vunpack.c.h.b16 %v615
    %v2175 = vunpack.c.l.b16 %v616
    %v2176 = vunpack.c.h.b16 %v616
    %v2177 = vunpack.c.l.b16 %v617
    %v2178 = vunpack.c.h.b16 %v617
    %v2179 = vunpack.c.l.b16 %v618
    %v2180 = vunpack.c.h.b16 %v618
    %v2181 = vunpack.c.l.b16 %v619
    %v2182 = vunpack.c.h.b16 %v619
    %v2183 = vunpack.c.l.b16 %v620
    %v2184 = vunpack.c.h.b16 %v620
    %v2185 = vunpack.c.l.b16 %v621
    %v2186 = vunpack.c.h.b16 %v621
    %v2187 = vunpack.c.l.b16 %v622
    %v2188 = vunpack.c.h.b16 %v622
    %v2189 = vunpack.c.l.b16 %v623
    %v2190 = vunpack.c.h.b16 %v623
    %v2191 = vunpack.c.l.b16 %v624
    %v2192 = vunpack.c.h.b16 %v624
    %v2193 = vunpack.c.l.b16 %v625
    %v2194 = vunpack.c.h.b16 %v625
    %v2195 = vunpack.c.l.b16 %v626
    %v2196 = vunpack.c.h.b16 %v626
    %v2197 = vunpack.c.l.b16 %v627
    %v2198 = vunpack.c.h.b16 %v627
    %v2199 = vunpack.c.l.b16 %v628
    %v2200 = vunpack.c.h.b16 %v628
    %v2201 = vunpack.c.l.b16 %v629
    %v2202 = vunpack.c.h.b16 %v629
    %v2203 = vunpack.c.l.b16 %v630
    %v2204 = vunpack.c.h.b16 %v630
    %v2205 = vunpack.c.l.b16 %v631
    %v2206 = vunpack.c.h.b16 %v631
    %v2207 = vunpack.c.l.b16 %v632
    %v2208 = vunpack.c.h.b16 %v632
    %v2209 = vpack.c.b16 %v1201, %v1185
    %v2210 = vpack.c.b16 %v1202, %v1186
    %v2211 = vpack.c.b16 %v1203, %v1187
    %v2212 = vpack.c.b16 %v1204, %v1188
    %v2213 = vpack.c.b16 %v1205, %v1189
    %v2214 = vpack.c.b16 %v1206, %v1190
    %v2215 = vpack.c.b16 %v1207, %v1191
    %v2216 = vpack.c.b16 %v1208, %v1192
    %v2217 = vpack.c.b16 %v1209, %v1193
    %v2218 = vpack.c.b16 %v1210, %v1194
    %v2219 = vpack.c.b16 %v1211, %v1195
    %v2220 = vpack.c.b16 %v1212, %v1196
    %v2221 = vpack.c.b16 %v1213, %v1197
    %v2222 = vpack.c.b16 %v1214, %v1198
    %v2223 = vpack.c.b16 %v1215, %v1199
    %v2224 = vpack.c.b16 %v1216, %v1200
    %v2225 = vpack.c.b16 %v1233, %v1217
    %v2226 = vpack.c.b16 %v1234, %v1218
    %v2227 = vpack.c.b16 %v1235, %v1219
    %v2228 = vpack.c.b16 %v1236, %v1220
    %v2229 = vpack.c.b16 %v1237, %v1221
    %v2230 = vpack.c.b16 %v1238, %v1222
    %v2231 = vpack.c.b16 %v1239, %v1223
    %v2232 = vpack.c.b16 %v1240, %v1224
    %v2233 = vpack.c.b16 %v1241, %v1225
    %v2234 = vpack.c.b16 %v1242, %v1226
    %v2235 = vpack.c.b16 %v1243, %v1227
    %v2236 = vpack.c.b16 %v1244, %v1228
    %v2237 = vpack.c.b16 %v1245, %v1229
    %v2238 = vpack.c.b16 %v1246, %v1230
    %v2239 = vpack.c.b16 %v1247, %v1231
    %v2240 = vpack.c.b16 %v1248, %v1232
    %v2241 = vpack.c.b16 %v1265, %v1249
    %v2242 = vpack.c.b16 %v1266, %v1250
    %v2243 = vpack.c.b16 %v1267, %v1251
    %v2244 = vpack.c.b16 %v1268, %v1252
    %v2245 = vpack.c.b16 %v1269, %v1253
    %v2246 = vpack.c.b16 %v1270, %v1254
    %v2247 = vpack.c.b16 %v1271, %v1255
    %v2248 = vpack.c.b16 %v1272, %v1256
    %v2249 = vpack.c.b16 %v1273, %v1257
    %v2250 = vpack.c.b16 %v1274, %v1258
    %v2251 = vpack.c.b16 %v1275, %v1259
    %v2252 = vpack.c.b16 %v1276, %v1260
    %v2253 = vpack.c.b16 %v1277, %v1261
    %v2254 = vpack.c.b16 %v1278, %v1262
    %v2255 = vpack.c.b16 %v1279, %v1263
    %v2256 = vpack.c.b16 %v1280, %v1264
    %v2257 = vpack.c.b16 %v1297, %v1281
    %v2258 = vpack.c.b16 %v1298, %v1282
    %v2259 = vpack.c.b16 %v1299, %v1283
    %v2260 = vpack.c.b16 %v1300, %v1284
    %v2261 = vpack.c.b16 %v1301, %v1285
    %v2262 = vpack.c.b16 %v1302, %v1286
    %v2263 = vpack.c.b16 %v1303, %v1287
    %v2264 = vpack.c.b16 %v1304, %v1288
    %v2265 = vpack.c.b16 %v1305, %v1289
    %v2266 = vpack.c.b16 %v1306, %v1290
    %v2267 = vpack.c.b16 %v1307, %v1291
    %v2268 = vpack.c.b16 %v1308, %v1292
    %v2269 = vpack.c.b16 %v1309, %v1293
    %v2270 = vpack.c.b16 %v1310, %v1294
    %v2271 = vpack.c.b16 %v1311, %v1295
    %v2272 = vpack.c.b16 %v1312, %v1296
    %v2273 = vpack.c.b16 %v1329, %v1313
    %v2274 = vpack.c.b16 %v1330, %v1314
    %v2275 = vpack.c.b16 %v1331, %v1315
    %v2276 = vpack.c.b16 %v1332, %v1316
    %v2277 = vpack.c.b16 %v1333, %v1317
    %v2278 = vpack.c.b16 %v1334, %v1318
    %v2279 = vpack.c.b16 %v1335, %v1319
    %v2280 = vpack.c.b16 %v1336, %v1320
    %v2281 = vpack.c.b16 %v1337, %v1321
    %v2282 = vpack.c.b16 %v1338, %v1322
    %v2283 = vpack.c.b16 %v1339, %v1323
    %v2284 = vpack.c.b16 %v1340, %v1324
    %v2285 = vpack.c.b16 %v1341, %v1325
    %v2286 = vpack.c.b16 %v1342, %v1326
    %v2287 = vpack.c.b16 %v1343, %v1327
    %v2288 = vpack.c.b16 %v1344, %v1328
    %v2289 = vpack.c.b16 %v1361, %v1345
    %v2290 = vpack.c.b16 %v1362, %v1346
    %v2291 = vpack.c.b16 %v1363, %v1347
    %v2292 = vpack.c.b16 %v1364, %v1348
    %v2293 = vpack.c.b16 %v1365, %v1349
    %v2294 = vpack.c.b16 %v1366, %v1350
    %v2295 = vpack.c.b16 %v1367, %v1351
    %v2296 = vpack.c.b16 %v1368, %v1352
    %v2297 = vpack.c.b16 %v1369, %v1353
    %v2298 = vpack.c.b16 %v1370, %v1354
    %v2299 = vpack.c.b16 %v1371, %v1355
    %v2300 = vpack.c.b16 %v1372, %v1356
    %v2301 = vpack.c.b16 %v1373, %v1357
    %v2302 = vpack.c.b16 %v1374, %v1358
    %v2303 = vpack.c.b16 %v1375, %v1359
    %v2304 = vpack.c.b16 %v1376, %v1360
    %v2305 = vpack.c.b16 %v1393, %v1377
    %v2306 = vpack.c.b16 %v1394, %v1378
    %v2307 = vpack.c.b16 %v1395, %v1379
    %v2308 = vpack.c.b16 %v1396, %v1380
    %v2309 = vpack.c.b16 %v1397, %v1381
    %v2310 = vpack.c.b16 %v1398, %v1382
    %v2311 = vpack.c.b16 %v1399, %v1383
    %v2312 = vpack.c.b16 %v1400, %v1384
    %v2313 = vpack.c.b16 %v1401, %v1385
    %v2314 = vpack.c.b16 %v1402, %v1386
    %v2315 = vpack.c.b16 %v1403, %v1387
    %v2316 = vpack.c.b16 %v1404, %v1388
    %v2317 = vpack.c.b16 %v1405, %v1389
    %v2318 = vpack.c.b16 %v1406, %v1390
    %v2319 = vpack.c.b16 %v1407, %v1391
    %v2320 = vpack.c.b16 %v1408, %v1392
    %v2321 = vpack.c.b16 %v1425, %v1409
    %v2322 = vpack.c.b16 %v1426, %v1410
    %v2323 = vpack.c.b16 %v1427, %v1411
    %v2324 = vpack.c.b16 %v1428, %v1412
    %v2325 = vpack.c.b16 %v1429, %v1413
    %v2326 = vpack.c.b16 %v1430, %v1414
    %v2327 = vpack.c.b16 %v1431, %v1415
    %v2328 = vpack.c.b16 %v1432, %v1416
    %v2329 = vpack.c.b16 %v1433, %v1417
    %v2330 = vpack.c.b16 %v1434, %v1418
    %v2331 = vpack.c.b16 %v1435, %v1419
    %v2332 = vpack.c.b16 %v1436, %v1420
    %v2333 = vpack.c.b16 %v1437, %v1421
    %v2334 = vpack.c.b16 %v1438, %v1422
    %v2335 = vpack.c.b16 %v1439, %v1423
    %v2336 = vpack.c.b16 %v1440, %v1424
    %v2337 = vpack.c.b16 %v1457, %v1441
    %v2338 = vpack.c.b16 %v1458, %v1442
    %v2339 = vpack.c.b16 %v1459, %v1443
    %v2340 = vpack.c.b16 %v1460, %v1444
    %v2341 = vpack.c.b16 %v1461, %v1445
    %v2342 = vpack.c.b16 %v1462, %v1446
    %v2343 = vpack.c.b16 %v1463, %v1447
    %v2344 = vpack.c.b16 %v1464, %v1448
    %v2345 = vpack.c.b16 %v1465, %v1449
    %v2346 = vpack.c.b16 %v1466, %v1450
    %v2347 = vpack.c.b16 %v1467, %v1451
    %v2348 = vpack.c.b16 %v1468, %v1452
    %v2349 = vpack.c.b16 %v1469, %v1453
    %v2350 = vpack.c.b16 %v1470, %v1454
    %v2351 = vpack.c.b16 %v1471, %v1455
    %v2352 = vpack.c.b16 %v1472, %v1456
    %v2353 = vpack.c.b16 %v1489, %v1473
    %v2354 = vpack.c.b16 %v1490, %v1474
    %v2355 = vpack.c.b16 %v1491, %v1475
    %v2356 = vpack.c.b16 %v1492, %v1476
    %v2357 = vpack.c.b16 %v1493, %v1477
    %v2358 = vpack.c.b16 %v1494, %v1478
    %v2359 = vpack.c.b16 %v1495, %v1479
    %v2360 = vpack.c.b16 %v1496, %v1480
    %v2361 = vpack.c.b16 %v1497, %v1481
    %v2362 = vpack.c.b16 %v1498, %v1482
    %v2363 = vpack.c.b16 %v1499, %v1483
    %v2364 = vpack.c.b16 %v1500, %v1484
    %v2365 = vpack.c.b16 %v1501, %v1485
    %v2366 = vpack.c.b16 %v1502, %v1486
    %v2367 = vpack.c.b16 %v1503, %v1487
    %v2368 = vpack.c.b16 %v1504, %v1488
    %v2369 = vpack.c.b16 %v1521, %v1505
    %v2370 = vpack.c.b16 %v1522, %v1506
    %v2371 = vpack.c.b16 %v1523, %v1507
    %v2372 = vpack.c.b16 %v1524, %v1508
    %v2373 = vpack.c.b16 %v1525, %v1509
    %v2374 = vpack.c.b16 %v1526, %v1510
    %v2375 = vpack.c.b16 %v1527, %v1511
    %v2376 = vpack.c.b16 %v1528, %v1512
    %v2377 = vpack.c.b16 %v1529, %v1513
    %v2378 = vpack.c.b16 %v1530, %v1514
    %v2379 = vpack.c.b16 %v1531, %v1515
    %v2380 = vpack.c.b16 %v1532, %v1516
    %v2381 = vpack.c.b16 %v1533, %v1517
    %v2382 = vpack.c.b16 %v1534, %v1518
    %v2383 = vpack.c.b16 %v1535, %v1519
    %v2384 = vpack.c.b16 %v1536, %v1520
    %v2385 = vpack.c.b16 %v1553, %v1537
    %v2386 = vpack.c.b16 %v1554, %v1538
    %v2387 = vpack.c.b16 %v1555, %v1539
    %v2388 = vpack.c.b16 %v1556, %v1540
    %v2389 = vpack.c.b16 %v1557, %v1541
    %v2390 = vpack.c.b16 %v1558, %v1542
    %v2391 = vpack.c.b16 %v1559, %v1543
    %v2392 = vpack.c.b16 %v1560, %v1544
    %v2393 = vpack.c.b16 %v1561, %v1545
    %v2394 = vpack.c.b16 %v1562, %v1546
    %v2395 = vpack.c.b16 %v1563, %v1547
    %v2396 = vpack.c.b16 %v1564, %v1548
    %v2397 = vpack.c.b16 %v1565, %v1549
    %v2398 = vpack.c.b16 %v1566, %v1550
    %v2399 = vpack.c.b16 %v1567, %v1551
    %v2400 = vpack.c.b16 %v1568, %v1552
    %v2401 = vpack.c.b16 %v1585, %v1569
    %v2402 = vpack.c.b16 %v1586, %v1570
    %v2403 = vpack.c.b16 %v1587, %v1571
    %v2404 = vpack.c.b16 %v1588, %v1572
    %v2405 = vpack.c.b16 %v1589, %v1573
    %v2406 = vpack.c.b16 %v1590, %v1574
    %v2407 = vpack.c.b16 %v1591, %v1575
    %v2408 = vpack.c.b16 %v1592, %v1576
    %v2409 = vpack.c.b16 %v1593, %v1577
    %v2410 = vpack.c.b16 %v1594, %v1578
    %v2411 = vpack.c.b16 %v1595, %v1579
    %v2412 = vpack.c.b16 %v1596, %v1580
    %v2413 = vpack.c.b16 %v1597, %v1581
    %v2414 = vpack.c.b16 %v1598, %v1582
    %v2415 = vpack.c.b16 %v1599, %v1583
    %v2416 = vpack.c.b16 %v1600, %v1584
    %v2417 = vpack.c.b16 %v1617, %v1601
    %v2418 = vpack.c.b16 %v1618, %v1602
    %v2419 = vpack.c.b16 %v1619, %v1603
    %v2420 = vpack.c.b16 %v1620, %v1604
    %v2421 = vpack.c.b16 %v1621, %v1605
    %v2422 = vpack.c.b16 %v1622, %v1606
    %v2423 = vpack.c.b16 %v1623, %v1607
    %v2424 = vpack.c.b16 %v1624, %v1608
    %v2425 = vpack.c.b16 %v1625, %v1609
    %v2426 = vpack.c.b16 %v1626, %v1610
    %v2427 = vpack.c.b16 %v1627, %v1611
    %v2428 = vpack.c.b16 %v1628, %v1612
    %v2429 = vpack.c.b16 %v1629, %v1613
    %v2430 = vpack.c.b16 %v1630, %v1614
    %v2431 = vpack.c.b16 %v1631, %v1615
    %v2432 = vpack.c.b16 %v1632, %v1616
    %v2433 = vpack.c.b16 %v1649, %v1633
    %v2434 = vpack.c.b16 %v1650, %v1634
    %v2435 = vpack.c.b16 %v1651, %v1635
    %v2436 = vpack.c.b16 %v1652, %v1636
    %v2437 = vpack.c.b16 %v1653, %v1637
    %v2438 = vpack.c.b16 %v1654, %v1638
    %v2439 = vpack.c.b16 %v1655, %v1639
    %v2440 = vpack.c.b16 %v1656, %v1640
    %v2441 = vpack.c.b16 %v1657, %v1641
    %v2442 = vpack.c.b16 %v1658, %v1642
    %v2443 = vpack.c.b16 %v1659, %v1643
    %v2444 = vpack.c.b16 %v1660, %v1644
    %v2445 = vpack.c.b16 %v1661, %v1645
    %v2446 = vpack.c.b16 %v1662, %v1646
    %v2447 = vpack.c.b16 %v1663, %v1647
    %v2448 = vpack.c.b16 %v1664, %v1648
    %v2449 = vpack.c.b16 %v1681, %v1665
    %v2450 = vpack.c.b16 %v1682, %v1666
    %v2451 = vpack.c.b16 %v1683, %v1667
    %v2452 = vpack.c.b16 %v1684, %v1668
    %v2453 = vpack.c.b16 %v1685, %v1669
    %v2454 = vpack.c.b16 %v1686, %v1670
    %v2455 = vpack.c.b16 %v1687, %v1671
    %v2456 = vpack.c.b16 %v1688, %v1672
    %v2457 = vpack.c.b16 %v1689, %v1673
    %v2458 = vpack.c.b16 %v1690, %v1674
    %v2459 = vpack.c.b16 %v1691, %v1675
    %v2460 = vpack.c.b16 %v1692, %v1676
    %v2461 = vpack.c.b16 %v1693, %v1677
    %v2462 = vpack.c.b16 %v1694, %v1678
    %v2463 = vpack.c.b16 %v1695, %v1679
    %v2464 = vpack.c.b16 %v1696, %v1680
    %v2465 = vpack.c.b16 %v1713, %v1697
    %v2466 = vpack.c.b16 %v1714, %v1698
    %v2467 = vpack.c.b16 %v1715, %v1699
    %v2468 = vpack.c.b16 %v1716, %v1700
    %v2469 = vpack.c.b16 %v1717, %v1701
    %v2470 = vpack.c.b16 %v1718, %v1702
    %v2471 = vpack.c.b16 %v1719, %v1703
    %v2472 = vpack.c.b16 %v1720, %v1704
    %v2473 = vpack.c.b16 %v1721, %v1705
    %v2474 = vpack.c.b16 %v1722, %v1706
    %v2475 = vpack.c.b16 %v1723, %v1707
    %v2476 = vpack.c.b16 %v1724, %v1708
    %v2477 = vpack.c.b16 %v1725, %v1709
    %v2478 = vpack.c.b16 %v1726, %v1710
    %v2479 = vpack.c.b16 %v1727, %v1711
    %v2480 = vpack.c.b16 %v1728, %v1712
    %v2481 = vpack.c.b16 %v1745, %v1729
    %v2482 = vpack.c.b16 %v1746, %v1730
    %v2483 = vpack.c.b16 %v1747, %v1731
    %v2484 = vpack.c.b16 %v1748, %v1732
    %v2485 = vpack.c.b16 %v1749, %v1733
    %v2486 = vpack.c.b16 %v1750, %v1734
    %v2487 = vpack.c.b16 %v1751, %v1735
    %v2488 = vpack.c.b16 %v1752, %v1736
    %v2489 = vpack.c.b16 %v1753, %v1737
    %v2490 = vpack.c.b16 %v1754, %v1738
    %v2491 = vpack.c.b16 %v1755, %v1739
    %v2492 = vpack.c.b16 %v1756, %v1740
    %v2493 = vpack.c.b16 %v1757, %v1741
    %v2494 = vpack.c.b16 %v1758, %v1742
    %v2495 = vpack.c.b16 %v1759, %v1743
    %v2496 = vpack.c.b16 %v1760, %v1744
    %v2497 = vpack.c.b16 %v1777, %v1761
    %v2498 = vpack.c.b16 %v1778, %v1762
    %v2499 = vpack.c.b16 %v1779, %v1763
    %v2500 = vpack.c.b16 %v1780, %v1764
    %v2501 = vpack.c.b16 %v1781, %v1765
    %v2502 = vpack.c.b16 %v1782, %v1766
    %v2503 = vpack.c.b16 %v1783, %v1767
    %v2504 = vpack.c.b16 %v1784, %v1768
    %v2505 = vpack.c.b16 %v1785, %v1769
    %v2506 = vpack.c.b16 %v1786, %v1770
    %v2507 = vpack.c.b16 %v1787, %v1771
    %v2508 = vpack.c.b16 %v1788, %v1772
    %v2509 = vpack.c.b16 %v1789, %v1773
    %v2510 = vpack.c.b16 %v1790, %v1774
    %v2511 = vpack.c.b16 %v1791, %v1775
    %v2512 = vpack.c.b16 %v1792, %v1776
    %v2513 = vpack.c.b16 %v1809, %v1793
    %v2514 = vpack.c.b16 %v1810, %v1794
    %v2515 = vpack.c.b16 %v1811, %v1795
    %v2516 = vpack.c.b16 %v1812, %v1796
    %v2517 = vpack.c.b16 %v1813, %v1797
    %v2518 = vpack.c.b16 %v1814, %v1798
    %v2519 = vpack.c.b16 %v1815, %v1799
    %v2520 = vpack.c.b16 %v1816, %v1800
    %v2521 = vpack.c.b16 %v1817, %v1801
    %v2522 = vpack.c.b16 %v1818, %v1802
    %v2523 = vpack.c.b16 %v1819, %v1803
    %v2524 = vpack.c.b16 %v1820, %v1804
    %v2525 = vpack.c.b16 %v1821, %v1805
    %v2526 = vpack.c.b16 %v1822, %v1806
    %v2527 = vpack.c.b16 %v1823, %v1807
    %v2528 = vpack.c.b16 %v1824, %v1808
    %v2529 = vpack.c.b16 %v1841, %v1825
    %v2530 = vpack.c.b16 %v1842, %v1826
    %v2531 = vpack.c.b16 %v1843, %v1827
    %v2532 = vpack.c.b16 %v1844, %v1828
    %v2533 = vpack.c.b16 %v1845, %v1829
    %v2534 = vpack.c.b16 %v1846, %v1830
    %v2535 = vpack.c.b16 %v1847, %v1831
    %v2536 = vpack.c.b16 %v1848, %v1832
    %v2537 = vpack.c.b16 %v1849, %v1833
    %v2538 = vpack.c.b16 %v1850, %v1834
    %v2539 = vpack.c.b16 %v1851, %v1835
    %v2540 = vpack.c.b16 %v1852, %v1836
    %v2541 = vpack.c.b16 %v1853, %v1837
    %v2542 = vpack.c.b16 %v1854, %v1838
    %v2543 = vpack.c.b16 %v1855, %v1839
    %v2544 = vpack.c.b16 %v1856, %v1840
    %v2545 = vpack.c.b16 %v1873, %v1857
    %v2546 = vpack.c.b16 %v1874, %v1858
    %v2547 = vpack.c.b16 %v1875, %v1859
    %v2548 = vpack.c.b16 %v1876, %v1860
    %v2549 = vpack.c.b16 %v1877, %v1861
    %v2550 = vpack.c.b16 %v1878, %v1862
    %v2551 = vpack.c.b16 %v1879, %v1863
    %v2552 = vpack.c.b16 %v1880, %v1864
    %v2553 = vpack.c.b16 %v1881, %v1865
    %v2554 = vpack.c.b16 %v1882, %v1866
    %v2555 = vpack.c.b16 %v1883, %v1867
    %v2556 = vpack.c.b16 %v1884, %v1868
    %v2557 = vpack.c.b16 %v1885, %v1869
    %v2558 = vpack.c.b16 %v1886, %v1870
    %v2559 = vpack.c.b16 %v1887, %v1871
    %v2560 = vpack.c.b16 %v1888, %v1872
    %v2561 = vpack.c.b16 %v1905, %v1889
    %v2562 = vpack.c.b16 %v1906, %v1890
    %v2563 = vpack.c.b16 %v1907, %v1891
    %v2564 = vpack.c.b16 %v1908, %v1892
    %v2565 = vpack.c.b16 %v1909, %v1893
    %v2566 = vpack.c.b16 %v1910, %v1894
    %v2567 = vpack.c.b16 %v1911, %v1895
    %v2568 = vpack.c.b16 %v1912, %v1896
    %v2569 = vpack.c.b16 %v1913, %v1897
    %v2570 = vpack.c.b16 %v1914, %v1898
    %v2571 = vpack.c.b16 %v1915, %v1899
    %v2572 = vpack.c.b16 %v1916, %v1900
    %v2573 = vpack.c.b16 %v1917, %v1901
    %v2574 = vpack.c.b16 %v1918, %v1902
    %v2575 = vpack.c.b16 %v1919, %v1903
    %v2576 = vpack.c.b16 %v1920, %v1904
    %v2577 = vpack.c.b16 %v1937, %v1921
    %v2578 = vpack.c.b16 %v1938, %v1922
    %v2579 = vpack.c.b16 %v1939, %v1923
    %v2580 = vpack.c.b16 %v1940, %v1924
    %v2581 = vpack.c.b16 %v1941, %v1925
    %v2582 = vpack.c.b16 %v1942, %v1926
    %v2583 = vpack.c.b16 %v1943, %v1927
    %v2584 = vpack.c.b16 %v1944, %v1928
    %v2585 = vpack.c.b16 %v1945, %v1929
    %v2586 = vpack.c.b16 %v1946, %v1930
    %v2587 = vpack.c.b16 %v1947, %v1931
    %v2588 = vpack.c.b16 %v1948, %v1932
    %v2589 = vpack.c.b16 %v1949, %v1933
    %v2590 = vpack.c.b16 %v1950, %v1934
    %v2591 = vpack.c.b16 %v1951, %v1935
    %v2592 = vpack.c.b16 %v1952, %v1936
    %v2593 = vpack.c.b16 %v1969, %v1953
    %v2594 = vpack.c.b16 %v1970, %v1954
    %v2595 = vpack.c.b16 %v1971, %v1955
    %v2596 = vpack.c.b16 %v1972, %v1956
    %v2597 = vpack.c.b16 %v1973, %v1957
    %v2598 = vpack.c.b16 %v1974, %v1958
    %v2599 = vpack.c.b16 %v1975, %v1959
    %v2600 = vpack.c.b16 %v1976, %v1960
    %v2601 = vpack.c.b16 %v1977, %v1961
    %v2602 = vpack.c.b16 %v1978, %v1962
    %v2603 = vpack.c.b16 %v1979, %v1963
    %v2604 = vpack.c.b16 %v1980, %v1964
    %v2605 = vpack.c.b16 %v1981, %v1965
    %v2606 = vpack.c.b16 %v1982, %v1966
    %v2607 = vpack.c.b16 %v1983, %v1967
    %v2608 = vpack.c.b16 %v1984, %v1968
    %v2609 = vpack.c.b16 %v2001, %v1985
    %v2610 = vpack.c.b16 %v2002, %v1986
    %v2611 = vpack.c.b16 %v2003, %v1987
    %v2612 = vpack.c.b16 %v2004, %v1988
    %v2613 = vpack.c.b16 %v2005, %v1989
    %v2614 = vpack.c.b16 %v2006, %v1990
    %v2615 = vpack.c.b16 %v2007, %v1991
    %v2616 = vpack.c.b16 %v2008, %v1992
    %v2617 = vpack.c.b16 %v2009, %v1993
    %v2618 = vpack.c.b16 %v2010, %v1994
    %v2619 = vpack.c.b16 %v2011, %v1995
    %v2620 = vpack.c.b16 %v2012, %v1996
    %v2621 = vpack.c.b16 %v2013, %v1997
    %v2622 = vpack.c.b16 %v2014, %v1998
    %v2623 = vpack.c.b16 %v2015, %v1999
    %v2624 = vpack.c.b16 %v2016, %v2000
    %v2625 = vpack.c.b16 %v2033, %v2017
    %v2626 = vpack.c.b16 %v2034, %v2018
    %v2627 = vpack.c.b16 %v2035, %v2019
    %v2628 = vpack.c.b16 %v2036, %v2020
    %v2629 = vpack.c.b16 %v2037, %v2021
    %v2630 = vpack.c.b16 %v2038, %v2022
    %v2631 = vpack.c.b16 %v2039, %v2023
    %v2632 = vpack.c.b16 %v2040, %v2024
    %v2633 = vpack.c.b16 %v2041, %v2025
    %v2634 = vpack.c.b16 %v2042, %v2026
    %v2635 = vpack.c.b16 %v2043, %v2027
    %v2636 = vpack.c.b16 %v2044, %v2028
    %v2637 = vpack.c.b16 %v2045, %v2029
    %v2638 = vpack.c.b16 %v2046, %v2030
    %v2639 = vpack.c.b16 %v2047, %v2031
    %v2640 = vpack.c.b16 %v2048, %v2032
    %v2641 = vpack.c.b16 %v2065, %v2049
    %v2642 = vpack.c.b16 %v2066, %v2050
    %v2643 = vpack.c.b16 %v2067, %v2051
    %v2644 = vpack.c.b16 %v2068, %v2052
    %v2645 = vpack.c.b16 %v2069, %v2053
    %v2646 = vpack.c.b16 %v2070, %v2054
    %v2647 = vpack.c.b16 %v2071, %v2055
    %v2648 = vpack.c.b16 %v2072, %v2056
    %v2649 = vpack.c.b16 %v2073, %v2057
    %v2650 = vpack.c.b16 %v2074, %v2058
    %v2651 = vpack.c.b16 %v2075, %v2059
    %v2652 = vpack.c.b16 %v2076, %v2060
    %v2653 = vpack.c.b16 %v2077, %v2061
    %v2654 = vpack.c.b16 %v2078, %v2062
    %v2655 = vpack.c.b16 %v2079, %v2063
    %v2656 = vpack.c.b16 %v2080, %v2064
    %v2657 = vpack.c.b16 %v2097, %v2081
    %v2658 = vpack.c.b16 %v2098, %v2082
    %v2659 = vpack.c.b16 %v2099, %v2083
    %v2660 = vpack.c.b16 %v2100, %v2084
    %v2661 = vpack.c.b16 %v2101, %v2085
    %v2662 = vpack.c.b16 %v2102, %v2086
    %v2663 = vpack.c.b16 %v2103, %v2087
    %v2664 = vpack.c.b16 %v2104, %v2088
    %v2665 = vpack.c.b16 %v2105, %v2089
    %v2666 = vpack.c.b16 %v2106, %v2090
    %v2667 = vpack.c.b16 %v2107, %v2091
    %v2668 = vpack.c.b16 %v2108, %v2092
    %v2669 = vpack.c.b16 %v2109, %v2093
    %v2670 = vpack.c.b16 %v2110, %v2094
    %v2671 = vpack.c.b16 %v2111, %v2095
    %v2672 = vpack.c.b16 %v2112, %v2096
    %v2673 = vpack.c.b16 %v2129, %v2113
    %v2674 = vpack.c.b16 %v2130, %v2114
    %v2675 = vpack.c.b16 %v2131, %v2115
    %v2676 = vpack.c.b16 %v2132, %v2116
    %v2677 = vpack.c.b16 %v2133, %v2117
    %v2678 = vpack.c.b16 %v2134, %v2118
    %v2679 = vpack.c.b16 %v2135, %v2119
    %v2680 = vpack.c.b16 %v2136, %v2120
    %v2681 = vpack.c.b16 %v2137, %v2121
    %v2682 = vpack.c.b16 %v2138, %v2122
    %v2683 = vpack.c.b16 %v2139, %v2123
    %v2684 = vpack.c.b16 %v2140, %v2124
    %v2685 = vpack.c.b16 %v2141, %v2125
    %v2686 = vpack.c.b16 %v2142, %v2126
    %v2687 = vpack.c.b16 %v2143, %v2127
    %v2688 = vpack.c.b16 %v2144, %v2128
    %v2689 = vpack.c.b16 %v2161, %v2145
    %v2690 = vpack.c.b16 %v2162, %v2146
    %v2691 = vpack.c.b16 %v2163, %v2147
    %v2692 = vpack.c.b16 %v2164, %v2148
    %v2693 = vpack.c.b16 %v2165, %v2149
    %v2694 = vpack.c.b16 %v2166, %v2150
    %v2695 = vpack.c.b16 %v2167, %v2151
    %v2696 = vpack.c.b16 %v2168, %v2152
    %v2697 = vpack.c.b16 %v2169, %v2153
    %v2698 = vpack.c.b16 %v2170, %v2154
    %v2699 = vpack.c.b16 %v2171, %v2155
    %v2700 = vpack.c.b16 %v2172, %v2156
    %v2701 = vpack.c.b16 %v2173, %v2157
    %v2702 = vpack.c.b16 %v2174, %v2158
    %v2703 = vpack.c.b16 %v2175, %v2159
    %v2704 = vpack.c.b16 %v2176, %v2160
    %v2705 = vpack.c.b16 %v2193, %v2177
    %v2706 = vpack.c.b16 %v2194, %v2178
    %v2707 = vpack.c.b16 %v2195, %v2179
    %v2708 = vpack.c.b16 %v2196, %v2180
    %v2709 = vpack.c.b16 %v2197, %v2181
    %v2710 = vpack.c.b16 %v2198, %v2182
    %v2711 = vpack.c.b16 %v2199, %v2183
    %v2712 = vpack.c.b16 %v2200, %v2184
    %v2713 = vpack.c.b16 %v2201, %v2185
    %v2714 = vpack.c.b16 %v2202, %v2186
    %v2715 = vpack.c.b16 %v2203, %v2187
    %v2716 = vpack.c.b16 %v2204, %v2188
    %v2717 = vpack.c.b16 %v2205, %v2189
    %v2718 = vpack.c.b16 %v2206, %v2190
    %v2719 = vpack.c.b16 %v2207, %v2191
    %v2720 = vpack.c.b16 %v2208, %v2192
    %3233 = vmatprep.subr.bf16.mxu0 %v2210
    %3234 = vmatpush1.bf16.msra.mxu0 %v2209
    %3235 = vmatprep.subr.bf16.mxu0 %v2226
    %3236 = vmatpush1.bf16.msra.mxu0 %v2225
    %3237 = vmatprep.subr.bf16.mxu0 %v2242
    %3238 = vmatpush1.bf16.msra.mxu0 %v2241
    %3239 = vmatprep.subr.bf16.mxu0 %v2258
    %3240 = vmatpush1.bf16.msra.mxu0 %v2257
    %3241 = vmatprep.subr.bf16.mxu0 %v2274
    %3242 = vmatpush1.bf16.msra.mxu0 %v2273
    %3243 = vmatprep.subr.bf16.mxu0 %v2290
    %3244 = vmatpush1.bf16.msra.mxu0 %v2289
    %3245 = vmatprep.subr.bf16.mxu0 %v2306
    %3246 = vmatpush1.bf16.msra.mxu0 %v2305
    %3247 = vmatprep.subr.bf16.mxu0 %v2322
    %3248 = vmatpush1.bf16.msra.mxu0 %v2321
    %3249 = vmatprep.subr.bf16.mxu0 %v2338
    %3250 = vmatpush1.bf16.msra.mxu0 %v2337
    %3251 = vmatprep.subr.bf16.mxu0 %v2354
    %3252 = vmatpush1.bf16.msra.mxu0 %v2353
    %3253 = vmatprep.subr.bf16.mxu0 %v2370
    %3254 = vmatpush1.bf16.msra.mxu0 %v2369
    %3255 = vmatprep.subr.bf16.mxu0 %v2386
    %3256 = vmatpush1.bf16.msra.mxu0 %v2385
    %3257 = vmatprep.subr.bf16.mxu0 %v2402
    %3258 = vmatpush1.bf16.msra.mxu0 %v2401
    %3259 = vmatprep.subr.bf16.mxu0 %v2418
    %3260 = vmatpush1.bf16.msra.mxu0 %v2417
    %3261 = vmatprep.subr.bf16.mxu0 %v2434
    %3262 = vmatpush1.bf16.msra.mxu0 %v2433
    %3263 = vmatprep.subr.bf16.mxu0 %v2450
    %3264 = vmatpush1.bf16.msra.mxu0 %v2449
    %3265 = vmatprep.mubr.bf16.mxu0 %v658
    %3266 = vmatmul.mubr.bf16.gmra.mrb[0].mxu0 %v657
    %v3267 = vpop.f32.mrb[0].mxu0
    %v3268 = vadd.f32 0.0, %v3267
    %v3269 = vpop.f32.mrb[0].mxu0
    %v3270 = vadd.f32 0.0, %v3269
    %v3271 = vpop.f32.mrb[0].mxu0
    %v3272 = vadd.f32 0.0, %v3271
    %v3273 = vpop.f32.mrb[0].mxu0
    %v3274 = vadd.f32 0.0, %v3273
    %3275 = vmatprep.mubr.bf16.mxu0 %v662
    %3276 = vmatmul.mubr.bf16.gmra.mrb[0].mxu0 %v661
    %v3277 = vpop.f32.mrb[0].mxu0
    %v3278 = vadd.f32 0.0, %v3277
    %v3279 = vpop.f32.mrb[0].mxu0
    %v3280 = vadd.f32 0.0, %v3279
    %v3281 = vpop.f32.mrb[0].mxu0
    %v3282 = vadd.f32 0.0, %v3281
    %v3283 = vpop.f32.mrb[0].mxu0
    %v3284 = vadd.f32 0.0, %v3283
    %3285 = vdwg.mxu0
    %3286 = vmatprep.subr.bf16.mxu0 %v2466
    %3287 = vmatpush1.bf16.msra.mxu0 %v2465
    %3288 = vmatprep.subr.bf16.mxu0 %v2482
    %3289 = vmatpush1.bf16.msra.mxu0 %v2481
    %3290 = vmatprep.subr.bf16.mxu0 %v2498
    %3291 = vmatpush1.bf16.msra.mxu0 %v2497
    %3292 = vmatprep.subr.bf16.mxu0 %v2514
    %3293 = vmatpush1.bf16.msra.mxu0 %v2513
    %3294 = vmatprep.subr.bf16.mxu0 %v2530
    %3295 = vmatpush1.bf16.msra.mxu0 %v2529
    %3296 = vmatprep.subr.bf16.mxu0 %v2546
    %3297 = vmatpush1.bf16.msra.mxu0 %v2545
    %3298 = vmatprep.subr.bf16.mxu0 %v2562
    %3299 = vmatpush1.bf16.msra.mxu0 %v2561
    %3300 = vmatprep.subr.bf16.mxu0 %v2578
    %3301 = vmatpush1.bf16.msra.mxu0 %v2577
    %3302 = vmatprep.subr.bf16.mxu0 %v2594
    %3303 = vmatpush1.bf16.msra.mxu0 %v2593
    %3304 = vmatprep.subr.bf16.mxu0 %v2610
    %3305 = vmatpush1.bf16.msra.mxu0 %v2609
    %3306 = vmatprep.subr.bf16.mxu0 %v2626
    %3307 = vmatpush1.bf16.msra.mxu0 %v2625
    %3308 = vmatprep.subr.bf16.mxu0 %v2642
    %3309 = vmatpush1.bf16.msra.mxu0 %v2641
    %3310 = vmatprep.subr.bf16.mxu0 %v2658
    %3311 = vmatpush1.bf16.msra.mxu0 %v2657
    %3312 = vmatprep.subr.bf16.mxu0 %v2674
    %3313 = vmatpush1.bf16.msra.mxu0 %v2673
    %3314 = vmatprep.subr.bf16.mxu0 %v2690
    %3315 = vmatpush1.bf16.msra.mxu0 %v2689
    %3316 = vmatprep.subr.bf16.mxu0 %v2706
    %3317 = vmatpush1.bf16.msra.mxu0 %v2705
    %3318 = vmatprep.mubr.bf16.mxu0 %v660
    %3319 = vmatmul.mubr.bf16.gmra.mrb[0].mxu0 %v659
    %v3320 = vpop.f32.mrb[0].mxu0
    %v3321 = vadd.f32 %v3268, %v3320
    %v3322 = vpop.f32.mrb[0].mxu0
    %v3323 = vadd.f32 %v3270, %v3322
    %v3324 = vpop.f32.mrb[0].mxu0
    %v3325 = vadd.f32 %v3272, %v3324
    %v3326 = vpop.f32.mrb[0].mxu0
    %v3327 = vadd.f32 %v3274, %v3326
    %3328 = vmatprep.mubr.bf16.mxu0 %v664
    %3329 = vmatmul.mubr.bf16.gmra.mrb[0].mxu0 %v663
    %v3330 = vpop.f32.mrb[0].mxu0
    %v3331 = vadd.f32 %v3278, %v3330
    %v3332 = vpop.f32.mrb[0].mxu0
    %v3333 = vadd.f32 %v3280, %v3332
    %v3334 = vpop.f32.mrb[0].mxu0
    %v3335 = vadd.f32 %v3282, %v3334
    %v3336 = vpop.f32.mrb[0].mxu0
    %v3337 = vadd.f32 %v3284, %v3336
    %3338 = vdwg.mxu0
    %3339 = vmatprep.subr.bf16.mxu0 %v2212
    %3340 = vmatpush1.bf16.msra.mxu0 %v2211
    %3341 = vmatprep.subr.bf16.mxu0 %v2228
    %3342 = vmatpush1.bf16.msra.mxu0 %v2227
    %3343 = vmatprep.subr.bf16.mxu0 %v2244
    %3344 = vmatpush1.bf16.msra.mxu0 %v2243
    %3345 = vmatprep.subr.bf16.mxu0 %v2260
    %3346 = vmatpush1.bf16.msra.mxu0 %v2259
    %3347 = vmatprep.subr.bf16.mxu0 %v2276
    %3348 = vmatpush1.bf16.msra.mxu0 %v2275
    %3349 = vmatprep.subr.bf16.mxu0 %v2292
    %3350 = vmatpush1.bf16.msra.mxu0 %v2291
    %3351 = vmatprep.subr.bf16.mxu0 %v2308
    %3352 = vmatpush1.bf16.msra.mxu0 %v2307
    %3353 = vmatprep.subr.bf16.mxu0 %v2324
    %3354 = vmatpush1.bf16.msra.mxu0 %v2323
    %3355 = vmatprep.subr.bf16.mxu0 %v2340
    %3356 = vmatpush1.bf16.msra.mxu0 %v2339
    %3357 = vmatprep.subr.bf16.mxu0 %v2356
    %3358 = vmatpush1.bf16.msra.mxu0 %v2355
    %3359 = vmatprep.subr.bf16.mxu0 %v2372
    %3360 = vmatpush1.bf16.msra.mxu0 %v2371
    %3361 = vmatprep.subr.bf16.mxu0 %v2388
    %3362 = vmatpush1.bf16.msra.mxu0 %v2387
    %3363 = vmatprep.subr.bf16.mxu0 %v2404
    %3364 = vmatpush1.bf16.msra.mxu0 %v2403
    %3365 = vmatprep.subr.bf16.mxu0 %v2420
    %3366 = vmatpush1.bf16.msra.mxu0 %v2419
    %3367 = vmatprep.subr.bf16.mxu0 %v2436
    %3368 = vmatpush1.bf16.msra.mxu0 %v2435
    %3369 = vmatprep.subr.bf16.mxu0 %v2452
    %3370 = vmatpush1.bf16.msra.mxu0 %v2451
    %3371 = vmatprep.mubr.bf16.mxu0 %v658
    %3372 = vmatmul.mubr.bf16.gmra.mrb[0].mxu0 %v657
    %v3373 = vpop.f32.mrb[0].mxu0
    %v3374 = vadd.f32 0.0, %v3373
    %v3375 = vpop.f32.mrb[0].mxu0
    %v3376 = vadd.f32 0.0, %v3375
    %v3377 = vpop.f32.mrb[0].mxu0
    %v3378 = vadd.f32 0.0, %v3377
    %v3379 = vpop.f32.mrb[0].mxu0
    %v3380 = vadd.f32 0.0, %v3379
    %3381 = vmatprep.mubr.bf16.mxu0 %v662
    %3382 = vmatmul.mubr.bf16.gmra.mrb[0].mxu0 %v661
    %v3383 = vpop.f32.mrb[0].mxu0
    %v3384 = vadd.f32 0.0, %v3383
    %v3385 = vpop.f32.mrb[0].mxu0
    %v3386 = vadd.f32 0.0, %v3385
    %v3387 = vpop.f32.mrb[0].mxu0
    %v3388 = vadd.f32 0.0, %v3387
    %v3389 = vpop.f32.mrb[0].mxu0
    %v3390 = vadd.f32 0.0, %v3389
    %3391 = vdwg.mxu0
    %3392 = vmatprep.subr.bf16.mxu0 %v2468
    %3393 = vmatpush1.bf16.msra.mxu0 %v2467
    %3394 = vmatprep.subr.bf16.mxu0 %v2484
    %3395 = vmatpush1.bf16.msra.mxu0 %v2483
    %3396 = vmatprep.subr.bf16.mxu0 %v2500
    %3397 = vmatpush1.bf16.msra.mxu0 %v2499
    %3398 = vmatprep.subr.bf16.mxu0 %v2516
    %3399 = vmatpush1.bf16.msra.mxu0 %v2515
    %3400 = vmatprep.subr.bf16.mxu0 %v2532
    %3401 = vmatpush1.bf16.msra.mxu0 %v2531
    %3402 = vmatprep.subr.bf16.mxu0 %v2548
    %3403 = vmatpush1.bf16.msra.mxu0 %v2547
    %3404 = vmatprep.subr.bf16.mxu0 %v2564
    %3405 = vmatpush1.bf16.msra.mxu0 %v2563
    %3406 = vmatprep.subr.bf16.mxu0 %v2580
    %3407 = vmatpush1.bf16.msra.mxu0 %v2579
    %3408 = vmatprep.subr.bf16.mxu0 %v2596
    %3409 = vmatpush1.bf16.msra.mxu0 %v2595
    %3410 = vmatprep.subr.bf16.mxu0 %v2612
    %3411 = vmatpush1.bf16.msra.mxu0 %v2611
    %3412 = vmatprep.subr.bf16.mxu0 %v2628
    %3413 = vmatpush1.bf16.msra.mxu0 %v2627
    %3414 = vmatprep.subr.bf16.mxu0 %v2644
    %3415 = vmatpush1.bf16.msra.mxu0 %v2643
    %3416 = vmatprep.subr.bf16.mxu0 %v2660
    %3417 = vmatpush1.bf16.msra.mxu0 %v2659
    %3418 = vmatprep.subr.bf16.mxu0 %v2676
    %3419 = vmatpush1.bf16.msra.mxu0 %v2675
    %3420 = vmatprep.subr.bf16.mxu0 %v2692
    %3421 = vmatpush1.bf16.msra.mxu0 %v2691
    %3422 = vmatprep.subr.bf16.mxu0 %v2708
    %3423 = vmatpush1.bf16.msra.mxu0 %v2707
    %3424 = vmatprep.mubr.bf16.mxu0 %v660
    %3425 = vmatmul.mubr.bf16.gmra.mrb[0].mxu0 %v659
    %v3426 = vpop.f32.mrb[0].mxu0
    %v3427 = vadd.f32 %v3374, %v3426
    %v3428 = vpop.f32.mrb[0].mxu0
    %v3429 = vadd.f32 %v3376, %v3428
    %v3430 = vpop.f32.mrb[0].mxu0
    %v3431 = vadd.f32 %v3378, %v3430
    %v3432 = vpop.f32.mrb[0].mxu0
    %v3433 = vadd.f32 %v3380, %v3432
    %3434 = vmatprep.mubr.bf16.mxu0 %v664
    %3435 = vmatmul.mubr.bf16.gmra.mrb[0].mxu0 %v663
    %v3436 = vpop.f32.mrb[0].mxu0
    %v3437 = vadd.f32 %v3384, %v3436
    %v3438 = vpop.f32.mrb[0].mxu0
    %v3439 = vadd.f32 %v3386, %v3438
    %v3440 = vpop.f32.mrb[0].mxu0
    %v3441 = vadd.f32 %v3388, %v3440
    %v3442 = vpop.f32.mrb[0].mxu0
    %v3443 = vadd.f32 %v3390, %v3442
    %3444 = vdwg.mxu0
    %3445 = vmatprep.subr.bf16.mxu0 %v2214
    %3446 = vmatpush1.bf16.msra.mxu0 %v2213
    %3447 = vmatprep.subr.bf16.mxu0 %v2230
    %3448 = vmatpush1.bf16.msra.mxu0 %v2229
    %3449 = vmatprep.subr.bf16.mxu0 %v2246
    %3450 = vmatpush1.bf16.msra.mxu0 %v2245
    %3451 = vmatprep.subr.bf16.mxu0 %v2262
    %3452 = vmatpush1.bf16.msra.mxu0 %v2261
    %3453 = vmatprep.subr.bf16.mxu0 %v2278
    %3454 = vmatpush1.bf16.msra.mxu0 %v2277
    %3455 = vmatprep.subr.bf16.mxu0 %v2294
    %3456 = vmatpush1.bf16.msra.mxu0 %v2293
    %3457 = vmatprep.subr.bf16.mxu0 %v2310
    %3458 = vmatpush1.bf16.msra.mxu0 %v2309
    %3459 = vmatprep.subr.bf16.mxu0 %v2326
    %3460 = vmatpush1.bf16.msra.mxu0 %v2325
    %3461 = vmatprep.subr.bf16.mxu0 %v2342
    %3462 = vmatpush1.bf16.msra.mxu0 %v2341
    %3463 = vmatprep.subr.bf16.mxu0 %v2358
    %3464 = vmatpush1.bf16.msra.mxu0 %v2357
    %3465 = vmatprep.subr.bf16.mxu0 %v2374
    %3466 = vmatpush1.bf16.msra.mxu0 %v2373
    %3467 = vmatprep.subr.bf16.mxu0 %v2390
    %3468 = vmatpush1.bf16.msra.mxu0 %v2389
    %3469 = vmatprep.subr.bf16.mxu0 %v2406
    %3470 = vmatpush1.bf16.msra.mxu0 %v2405
    %3471 = vmatprep.subr.bf16.mxu0 %v2422
    %3472 = vmatpush1.bf16.msra.mxu0 %v2421
    %3473 = vmatprep.subr.bf16.mxu0 %v2438
    %3474 = vmatpush1.bf16.msra.mxu0 %v2437
    %3475 = vmatprep.subr.bf16.mxu0 %v2454
    %3476 = vmatpush1.bf16.msra.mxu0 %v2453
    %3477 = vmatprep.mubr.bf16.mxu0 %v658
    %3478 = vmatmul.mubr.bf16.gmra.mrb[0].mxu0 %v657
    %v3479 = vpop.f32.mrb[0].mxu0
    %v3480 = vadd.f32 0.0, %v3479
    %v3481 = vpop.f32.mrb[0].mxu0
    %v3482 = vadd.f32 0.0, %v3481
    %v3483 = vpop.f32.mrb[0].mxu0
    %v3484 = vadd.f32 0.0, %v3483
    %v3485 = vpop.f32.mrb[0].mxu0
    %v3486 = vadd.f32 0.0, %v3485
    %3487 = vmatprep.mubr.bf16.mxu0 %v662
    %3488 = vmatmul.mubr.bf16.gmra.mrb[0].mxu0 %v661
    %v3489 = vpop.f32.mrb[0].mxu0
    %v3490 = vadd.f32 0.0, %v3489
    %v3491 = vpop.f32.mrb[0].mxu0
    %v3492 = vadd.f32 0.0, %v3491
    %v3493 = vpop.f32.mrb[0].mxu0
    %v3494 = vadd.f32 0.0, %v3493
    %v3495 = vpop.f32.mrb[0].mxu0
    %v3496 = vadd.f32 0.0, %v3495
    %3497 = vdwg.mxu0
    %3498 = vmatprep.subr.bf16.mxu0 %v2470
    %3499 = vmatpush1.bf16.msra.mxu0 %v2469
    %3500 = vmatprep.subr.bf16.mxu0 %v2486
    %3501 = vmatpush1.bf16.msra.mxu0 %v2485
    %3502 = vmatprep.subr.bf16.mxu0 %v2502
    %3503 = vmatpush1.bf16.msra.mxu0 %v2501
    %3504 = vmatprep.subr.bf16.mxu0 %v2518
    %3505 = vmatpush1.bf16.msra.mxu0 %v2517
    %3506 = vmatprep.subr.bf16.mxu0 %v2534
    %3507 = vmatpush1.bf16.msra.mxu0 %v2533
    %3508 = vmatprep.subr.bf16.mxu0 %v2550
    %3509 = vmatpush1.bf16.msra.mxu0 %v2549
    %3510 = vmatprep.subr.bf16.mxu0 %v2566
    %3511 = vmatpush1.bf16.msra.mxu0 %v2565
    %3512 = vmatprep.subr.bf16.mxu0 %v2582
    %3513 = vmatpush1.bf16.msra.mxu0 %v2581
    %3514 = vmatprep.subr.bf16.mxu0 %v2598
    %3515 = vmatpush1.bf16.msra.mxu0 %v2597
    %3516 = vmatprep.subr.bf16.mxu0 %v2614
    %3517 = vmatpush1.bf16.msra.mxu0 %v2613
    %3518 = vmatprep.subr.bf16.mxu0 %v2630
    %3519 = vmatpush1.bf16.msra.mxu0 %v2629
    %3520 = vmatprep.subr.bf16.mxu0 %v2646
    %3521 = vmatpush1.bf16.msra.mxu0 %v2645
    %3522 = vmatprep.subr.bf16.mxu0 %v2662
    %3523 = vmatpush1.bf16.msra.mxu0 %v2661
    %3524 = vmatprep.subr.bf16.mxu0 %v2678
    %3525 = vmatpush1.bf16.msra.mxu0 %v2677
    %3526 = vmatprep.subr.bf16.mxu0 %v2694
    %3527 = vmatpush1.bf16.msra.mxu0 %v2693
    %3528 = vmatprep.subr.bf16.mxu0 %v2710
    %3529 = vmatpush1.bf16.msra.mxu0 %v2709
    %3530 = vmatprep.mubr.bf16.mxu0 %v660
    %3531 = vmatmul.mubr.bf16.gmra.mrb[0].mxu0 %v659
    %v3532 = vpop.f32.mrb[0].mxu0
    %v3533 = vadd.f32 %v3480, %v3532
    %v3534 = vpop.f32.mrb[0].mxu0
    %v3535 = vadd.f32 %v3482, %v3534
    %v3536 = vpop.f32.mrb[0].mxu0
    %v3537 = vadd.f32 %v3484, %v3536
    %v3538 = vpop.f32.mrb[0].mxu0
    %v3539 = vadd.f32 %v3486, %v3538
    %3540 = vmatprep.mubr.bf16.mxu0 %v664
    %3541 = vmatmul.mubr.bf16.gmra.mrb[0].mxu0 %v663
    %v3542 = vpop.f32.mrb[0].mxu0
    %v3543 = vadd.f32 %v3490, %v3542
    %v3544 = vpop.f32.mrb[0].mxu0
    %v3545 = vadd.f32 %v3492, %v3544
    %v3546 = vpop.f32.mrb[0].mxu0
    %v3547 = vadd.f32 %v3494, %v3546
    %v3548 = vpop.f32.mrb[0].mxu0
    %v3549 = vadd.f32 %v3496, %v3548
    %3550 = vdwg.mxu0
    %3551 = vmatprep.subr.bf16.mxu0 %v2216
    %3552 = vmatpush1.bf16.msra.mxu0 %v2215
    %3553 = vmatprep.subr.bf16.mxu0 %v2232
    %3554 = vmatpush1.bf16.msra.mxu0 %v2231
    %3555 = vmatprep.subr.bf16.mxu0 %v2248
    %3556 = vmatpush1.bf16.msra.mxu0 %v2247
    %3557 = vmatprep.subr.bf16.mxu0 %v2264
    %3558 = vmatpush1.bf16.msra.mxu0 %v2263
    %3559 = vmatprep.subr.bf16.mxu0 %v2280
    %3560 = vmatpush1.bf16.msra.mxu0 %v2279
    %3561 = vmatprep.subr.bf16.mxu0 %v2296
    %3562 = vmatpush1.bf16.msra.mxu0 %v2295
    %3563 = vmatprep.subr.bf16.mxu0 %v2312
    %3564 = vmatpush1.bf16.msra.mxu0 %v2311
    %3565 = vmatprep.subr.bf16.mxu0 %v2328
    %3566 = vmatpush1.bf16.msra.mxu0 %v2327
    %3567 = vmatprep.subr.bf16.mxu0 %v2344
    %3568 = vmatpush1.bf16.msra.mxu0 %v2343
    %3569 = vmatprep.subr.bf16.mxu0 %v2360
    %3570 = vmatpush1.bf16.msra.mxu0 %v2359
    %3571 = vmatprep.subr.bf16.mxu0 %v2376
    %3572 = vmatpush1.bf16.msra.mxu0 %v2375
    %3573 = vmatprep.subr.bf16.mxu0 %v2392
    %3574 = vmatpush1.bf16.msra.mxu0 %v2391
    %3575 = vmatprep.subr.bf16.mxu0 %v2408
    %3576 = vmatpush1.bf16.msra.mxu0 %v2407
    %3577 = vmatprep.subr.bf16.mxu0 %v2424
    %3578 = vmatpush1.bf16.msra.mxu0 %v2423
    %3579 = vmatprep.subr.bf16.mxu0 %v2440
    %3580 = vmatpush1.bf16.msra.mxu0 %v2439
    %3581 = vmatprep.subr.bf16.mxu0 %v2456
    %3582 = vmatpush1.bf16.msra.mxu0 %v2455
    %3583 = vmatprep.mubr.bf16.mxu0 %v658
    %3584 = vmatmul.mubr.bf16.gmra.mrb[0].mxu0 %v657
    %v3585 = vpop.f32.mrb[0].mxu0
    %v3586 = vadd.f32 0.0, %v3585
    %v3587 = vpop.f32.mrb[0].mxu0
    %v3588 = vadd.f32 0.0, %v3587
    %v3589 = vpop.f32.mrb[0].mxu0
    %v3590 = vadd.f32 0.0, %v3589
    %v3591 = vpop.f32.mrb[0].mxu0
    %v3592 = vadd.f32 0.0, %v3591
    %3593 = vmatprep.mubr.bf16.mxu0 %v662
    %3594 = vmatmul.mubr.bf16.gmra.mrb[0].mxu0 %v661
    %v3595 = vpop.f32.mrb[0].mxu0
    %v3596 = vadd.f32 0.0, %v3595
    %v3597 = vpop.f32.mrb[0].mxu0
    %v3598 = vadd.f32 0.0, %v3597
    %v3599 = vpop.f32.mrb[0].mxu0
    %v3600 = vadd.f32 0.0, %v3599
    %v3601 = vpop.f32.mrb[0].mxu0
    %v3602 = vadd.f32 0.0, %v3601
    %3603 = vdwg.mxu0
    %3604 = vmatprep.subr.bf16.mxu0 %v2472
    %3605 = vmatpush1.bf16.msra.mxu0 %v2471
    %3606 = vmatprep.subr.bf16.mxu0 %v2488
    %3607 = vmatpush1.bf16.msra.mxu0 %v2487
    %3608 = vmatprep.subr.bf16.mxu0 %v2504
    %3609 = vmatpush1.bf16.msra.mxu0 %v2503
    %3610 = vmatprep.subr.bf16.mxu0 %v2520
    %3611 = vmatpush1.bf16.msra.mxu0 %v2519
    %3612 = vmatprep.subr.bf16.mxu0 %v2536
    %3613 = vmatpush1.bf16.msra.mxu0 %v2535
    %3614 = vmatprep.subr.bf16.mxu0 %v2552
    %3615 = vmatpush1.bf16.msra.mxu0 %v2551
    %3616 = vmatprep.subr.bf16.mxu0 %v2568
    %3617 = vmatpush1.bf16.msra.mxu0 %v2567
    %3618 = vmatprep.subr.bf16.mxu0 %v2584
    %3619 = vmatpush1.bf16.msra.mxu0 %v2583
    %3620 = vmatprep.subr.bf16.mxu0 %v2600
    %3621 = vmatpush1.bf16.msra.mxu0 %v2599
    %3622 = vmatprep.subr.bf16.mxu0 %v2616
    %3623 = vmatpush1.bf16.msra.mxu0 %v2615
    %3624 = vmatprep.subr.bf16.mxu0 %v2632
    %3625 = vmatpush1.bf16.msra.mxu0 %v2631
    %3626 = vmatprep.subr.bf16.mxu0 %v2648
    %3627 = vmatpush1.bf16.msra.mxu0 %v2647
    %3628 = vmatprep.subr.bf16.mxu0 %v2664
    %3629 = vmatpush1.bf16.msra.mxu0 %v2663
    %3630 = vmatprep.subr.bf16.mxu0 %v2680
    %3631 = vmatpush1.bf16.msra.mxu0 %v2679
    %3632 = vmatprep.subr.bf16.mxu0 %v2696
    %3633 = vmatpush1.bf16.msra.mxu0 %v2695
    %3634 = vmatprep.subr.bf16.mxu0 %v2712
    %3635 = vmatpush1.bf16.msra.mxu0 %v2711
    %3636 = vmatprep.mubr.bf16.mxu0 %v660
    %3637 = vmatmul.mubr.bf16.gmra.mrb[0].mxu0 %v659
    %v3638 = vpop.f32.mrb[0].mxu0
    %v3639 = vadd.f32 %v3586, %v3638
    %v3640 = vpop.f32.mrb[0].mxu0
    %v3641 = vadd.f32 %v3588, %v3640
    %v3642 = vpop.f32.mrb[0].mxu0
    %v3643 = vadd.f32 %v3590, %v3642
    %v3644 = vpop.f32.mrb[0].mxu0
    %v3645 = vadd.f32 %v3592, %v3644
    %3646 = vmatprep.mubr.bf16.mxu0 %v664
    %3647 = vmatmul.mubr.bf16.gmra.mrb[0].mxu0 %v663
    %v3648 = vpop.f32.mrb[0].mxu0
    %v3649 = vadd.f32 %v3596, %v3648
    %v3650 = vpop.f32.mrb[0].mxu0
    %v3651 = vadd.f32 %v3598, %v3650
    %v3652 = vpop.f32.mrb[0].mxu0
    %v3653 = vadd.f32 %v3600, %v3652
    %v3654 = vpop.f32.mrb[0].mxu0
    %v3655 = vadd.f32 %v3602, %v3654
    %3656 = vdwg.mxu0
    %3657 = vmatprep.subr.bf16.mxu0 %v2218
    %3658 = vmatpush1.bf16.msra.mxu0 %v2217
    %3659 = vmatprep.subr.bf16.mxu0 %v2234
    %3660 = vmatpush1.bf16.msra.mxu0 %v2233
    %3661 = vmatprep.subr.bf16.mxu0 %v2250
    %3662 = vmatpush1.bf16.msra.mxu0 %v2249
    %3663 = vmatprep.subr.bf16.mxu0 %v2266
    %3664 = vmatpush1.bf16.msra.mxu0 %v2265
    %3665 = vmatprep.subr.bf16.mxu0 %v2282
    %3666 = vmatpush1.bf16.msra.mxu0 %v2281
    %3667 = vmatprep.subr.bf16.mxu0 %v2298
    %3668 = vmatpush1.bf16.msra.mxu0 %v2297
    %3669 = vmatprep.subr.bf16.mxu0 %v2314
    %3670 = vmatpush1.bf16.msra.mxu0 %v2313
    %3671 = vmatprep.subr.bf16.mxu0 %v2330
    %3672 = vmatpush1.bf16.msra.mxu0 %v2329
    %3673 = vmatprep.subr.bf16.mxu0 %v2346
    %3674 = vmatpush1.bf16.msra.mxu0 %v2345
    %3675 = vmatprep.subr.bf16.mxu0 %v2362
    %3676 = vmatpush1.bf16.msra.mxu0 %v2361
    %3677 = vmatprep.subr.bf16.mxu0 %v2378
    %3678 = vmatpush1.bf16.msra.mxu0 %v2377
    %3679 = vmatprep.subr.bf16.mxu0 %v2394
    %3680 = vmatpush1.bf16.msra.mxu0 %v2393
    %3681 = vmatprep.subr.bf16.mxu0 %v2410
    %3682 = vmatpush1.bf16.msra.mxu0 %v2409
    %3683 = vmatprep.subr.bf16.mxu0 %v2426
    %3684 = vmatpush1.bf16.msra.mxu0 %v2425
    %3685 = vmatprep.subr.bf16.mxu0 %v2442
    %3686 = vmatpush1.bf16.msra.mxu0 %v2441
    %3687 = vmatprep.subr.bf16.mxu0 %v2458
    %3688 = vmatpush1.bf16.msra.mxu0 %v2457
    %3689 = vmatprep.mubr.bf16.mxu0 %v658
    %3690 = vmatmul.mubr.bf16.gmra.mrb[0].mxu0 %v657
    %v3691 = vpop.f32.mrb[0].mxu0
    %v3692 = vadd.f32 0.0, %v3691
    %v3693 = vpop.f32.mrb[0].mxu0
    %v3694 = vadd.f32 0.0, %v3693
    %v3695 = vpop.f32.mrb[0].mxu0
    %v3696 = vadd.f32 0.0, %v3695
    %v3697 = vpop.f32.mrb[0].mxu0
    %v3698 = vadd.f32 0.0, %v3697
    %3699 = vmatprep.mubr.bf16.mxu0 %v662
    %3700 = vmatmul.mubr.bf16.gmra.mrb[0].mxu0 %v661
    %v3701 = vpop.f32.mrb[0].mxu0
    %v3702 = vadd.f32 0.0, %v3701
    %v3703 = vpop.f32.mrb[0].mxu0
    %v3704 = vadd.f32 0.0, %v3703
    %v3705 = vpop.f32.mrb[0].mxu0
    %v3706 = vadd.f32 0.0, %v3705
    %v3707 = vpop.f32.mrb[0].mxu0
    %v3708 = vadd.f32 0.0, %v3707
    %3709 = vdwg.mxu0
    %3710 = vmatprep.subr.bf16.mxu0 %v2474
    %3711 = vmatpush1.bf16.msra.mxu0 %v2473
    %3712 = vmatprep.subr.bf16.mxu0 %v2490
    %3713 = vmatpush1.bf16.msra.mxu0 %v2489
    %3714 = vmatprep.subr.bf16.mxu0 %v2506
    %3715 = vmatpush1.bf16.msra.mxu0 %v2505
    %3716 = vmatprep.subr.bf16.mxu0 %v2522
    %3717 = vmatpush1.bf16.msra.mxu0 %v2521
    %3718 = vmatprep.subr.bf16.mxu0 %v2538
    %3719 = vmatpush1.bf16.msra.mxu0 %v2537
    %3720 = vmatprep.subr.bf16.mxu0 %v2554
    %3721 = vmatpush1.bf16.msra.mxu0 %v2553
    %3722 = vmatprep.subr.bf16.mxu0 %v2570
    %3723 = vmatpush1.bf16.msra.mxu0 %v2569
    %3724 = vmatprep.subr.bf16.mxu0 %v2586
    %3725 = vmatpush1.bf16.msra.mxu0 %v2585
    %3726 = vmatprep.subr.bf16.mxu0 %v2602
    %3727 = vmatpush1.bf16.msra.mxu0 %v2601
    %3728 = vmatprep.subr.bf16.mxu0 %v2618
    %3729 = vmatpush1.bf16.msra.mxu0 %v2617
    %3730 = vmatprep.subr.bf16.mxu0 %v2634
    %3731 = vmatpush1.bf16.msra.mxu0 %v2633
    %3732 = vmatprep.subr.bf16.mxu0 %v2650
    %3733 = vmatpush1.bf16.msra.mxu0 %v2649
    %3734 = vmatprep.subr.bf16.mxu0 %v2666
    %3735 = vmatpush1.bf16.msra.mxu0 %v2665
    %3736 = vmatprep.subr.bf16.mxu0 %v2682
    %3737 = vmatpush1.bf16.msra.mxu0 %v2681
    %3738 = vmatprep.subr.bf16.mxu0 %v2698
    %3739 = vmatpush1.bf16.msra.mxu0 %v2697
    %3740 = vmatprep.subr.bf16.mxu0 %v2714
    %3741 = vmatpush1.bf16.msra.mxu0 %v2713
    %3742 = vmatprep.mubr.bf16.mxu0 %v660
    %3743 = vmatmul.mubr.bf16.gmra.mrb[0].mxu0 %v659
    %v3744 = vpop.f32.mrb[0].mxu0
    %v3745 = vadd.f32 %v3692, %v3744
    %v3746 = vpop.f32.mrb[0].mxu0
    %v3747 = vadd.f32 %v3694, %v3746
    %v3748 = vpop.f32.mrb[0].mxu0
    %v3749 = vadd.f32 %v3696, %v3748
    %v3750 = vpop.f32.mrb[0].mxu0
    %v3751 = vadd.f32 %v3698, %v3750
    %3752 = vmatprep.mubr.bf16.mxu0 %v664
    %3753 = vmatmul.mubr.bf16.gmra.mrb[0].mxu0 %v663
    %v3754 = vpop.f32.mrb[0].mxu0
    %v3755 = vadd.f32 %v3702, %v3754
    %v3756 = vpop.f32.mrb[0].mxu0
    %v3757 = vadd.f32 %v3704, %v3756
    %v3758 = vpop.f32.mrb[0].mxu0
    %v3759 = vadd.f32 %v3706, %v3758
    %v3760 = vpop.f32.mrb[0].mxu0
    %v3761 = vadd.f32 %v3708, %v3760
    %3762 = vdwg.mxu0
    %3763 = vmatprep.subr.bf16.mxu0 %v2220
    %3764 = vmatpush1.bf16.msra.mxu0 %v2219
    %3765 = vmatprep.subr.bf16.mxu0 %v2236
    %3766 = vmatpush1.bf16.msra.mxu0 %v2235
    %3767 = vmatprep.subr.bf16.mxu0 %v2252
    %3768 = vmatpush1.bf16.msra.mxu0 %v2251
    %3769 = vmatprep.subr.bf16.mxu0 %v2268
    %3770 = vmatpush1.bf16.msra.mxu0 %v2267
    %3771 = vmatprep.subr.bf16.mxu0 %v2284
    %3772 = vmatpush1.bf16.msra.mxu0 %v2283
    %3773 = vmatprep.subr.bf16.mxu0 %v2300
    %3774 = vmatpush1.bf16.msra.mxu0 %v2299
    %3775 = vmatprep.subr.bf16.mxu0 %v2316
    %3776 = vmatpush1.bf16.msra.mxu0 %v2315
    %3777 = vmatprep.subr.bf16.mxu0 %v2332
    %3778 = vmatpush1.bf16.msra.mxu0 %v2331
    %3779 = vmatprep.subr.bf16.mxu0 %v2348
    %3780 = vmatpush1.bf16.msra.mxu0 %v2347
    %3781 = vmatprep.subr.bf16.mxu0 %v2364
    %3782 = vmatpush1.bf16.msra.mxu0 %v2363
    %3783 = vmatprep.subr.bf16.mxu0 %v2380
    %3784 = vmatpush1.bf16.msra.mxu0 %v2379
    %3785 = vmatprep.subr.bf16.mxu0 %v2396
    %3786 = vmatpush1.bf16.msra.mxu0 %v2395
    %3787 = vmatprep.subr.bf16.mxu0 %v2412
    %3788 = vmatpush1.bf16.msra.mxu0 %v2411
    %3789 = vmatprep.subr.bf16.mxu0 %v2428
    %3790 = vmatpush1.bf16.msra.mxu0 %v2427
    %3791 = vmatprep.subr.bf16.mxu0 %v2444
    %3792 = vmatpush1.bf16.msra.mxu0 %v2443
    %3793 = vmatprep.subr.bf16.mxu0 %v2460
    %3794 = vmatpush1.bf16.msra.mxu0 %v2459
    %3795 = vmatprep.mubr.bf16.mxu0 %v658
    %3796 = vmatmul.mubr.bf16.gmra.mrb[0].mxu0 %v657
    %v3797 = vpop.f32.mrb[0].mxu0
    %v3798 = vadd.f32 0.0, %v3797
    %v3799 = vpop.f32.mrb[0].mxu0
    %v3800 = vadd.f32 0.0, %v3799
    %v3801 = vpop.f32.mrb[0].mxu0
    %v3802 = vadd.f32 0.0, %v3801
    %v3803 = vpop.f32.mrb[0].mxu0
    %v3804 = vadd.f32 0.0, %v3803
    %3805 = vmatprep.mubr.bf16.mxu0 %v662
    %3806 = vmatmul.mubr.bf16.gmra.mrb[0].mxu0 %v661
    %v3807 = vpop.f32.mrb[0].mxu0
    %v3808 = vadd.f32 0.0, %v3807
    %v3809 = vpop.f32.mrb[0].mxu0
    %v3810 = vadd.f32 0.0, %v3809
    %v3811 = vpop.f32.mrb[0].mxu0
    %v3812 = vadd.f32 0.0, %v3811
    %v3813 = vpop.f32.mrb[0].mxu0
    %v3814 = vadd.f32 0.0, %v3813
    %3815 = vdwg.mxu0
    %3816 = vmatprep.subr.bf16.mxu0 %v2476
    %3817 = vmatpush1.bf16.msra.mxu0 %v2475
    %3818 = vmatprep.subr.bf16.mxu0 %v2492
    %3819 = vmatpush1.bf16.msra.mxu0 %v2491
    %3820 = vmatprep.subr.bf16.mxu0 %v2508
    %3821 = vmatpush1.bf16.msra.mxu0 %v2507
    %3822 = vmatprep.subr.bf16.mxu0 %v2524
    %3823 = vmatpush1.bf16.msra.mxu0 %v2523
    %3824 = vmatprep.subr.bf16.mxu0 %v2540
    %3825 = vmatpush1.bf16.msra.mxu0 %v2539
    %3826 = vmatprep.subr.bf16.mxu0 %v2556
    %3827 = vmatpush1.bf16.msra.mxu0 %v2555
    %3828 = vmatprep.subr.bf16.mxu0 %v2572
    %3829 = vmatpush1.bf16.msra.mxu0 %v2571
    %3830 = vmatprep.subr.bf16.mxu0 %v2588
    %3831 = vmatpush1.bf16.msra.mxu0 %v2587
    %3832 = vmatprep.subr.bf16.mxu0 %v2604
    %3833 = vmatpush1.bf16.msra.mxu0 %v2603
    %3834 = vmatprep.subr.bf16.mxu0 %v2620
    %3835 = vmatpush1.bf16.msra.mxu0 %v2619
    %3836 = vmatprep.subr.bf16.mxu0 %v2636
    %3837 = vmatpush1.bf16.msra.mxu0 %v2635
    %3838 = vmatprep.subr.bf16.mxu0 %v2652
    %3839 = vmatpush1.bf16.msra.mxu0 %v2651
    %3840 = vmatprep.subr.bf16.mxu0 %v2668
    %3841 = vmatpush1.bf16.msra.mxu0 %v2667
    %3842 = vmatprep.subr.bf16.mxu0 %v2684
    %3843 = vmatpush1.bf16.msra.mxu0 %v2683
    %3844 = vmatprep.subr.bf16.mxu0 %v2700
    %3845 = vmatpush1.bf16.msra.mxu0 %v2699
    %3846 = vmatprep.subr.bf16.mxu0 %v2716
    %3847 = vmatpush1.bf16.msra.mxu0 %v2715
    %3848 = vmatprep.mubr.bf16.mxu0 %v660
    %3849 = vmatmul.mubr.bf16.gmra.mrb[0].mxu0 %v659
    %v3850 = vpop.f32.mrb[0].mxu0
    %v3851 = vadd.f32 %v3798, %v3850
    %v3852 = vpop.f32.mrb[0].mxu0
    %v3853 = vadd.f32 %v3800, %v3852
    %v3854 = vpop.f32.mrb[0].mxu0
    %v3855 = vadd.f32 %v3802, %v3854
    %v3856 = vpop.f32.mrb[0].mxu0
    %v3857 = vadd.f32 %v3804, %v3856
    %3858 = vmatprep.mubr.bf16.mxu0 %v664
    %3859 = vmatmul.mubr.bf16.gmra.mrb[0].mxu0 %v663
    %v3860 = vpop.f32.mrb[0].mxu0
    %v3861 = vadd.f32 %v3808, %v3860
    %v3862 = vpop.f32.mrb[0].mxu0
    %v3863 = vadd.f32 %v3810, %v3862
    %v3864 = vpop.f32.mrb[0].mxu0
    %v3865 = vadd.f32 %v3812, %v3864
    %v3866 = vpop.f32.mrb[0].mxu0
    %v3867 = vadd.f32 %v3814, %v3866
    %3868 = vdwg.mxu0
    %3869 = vmatprep.subr.bf16.mxu0 %v2222
    %3870 = vmatpush1.bf16.msra.mxu0 %v2221
    %3871 = vmatprep.subr.bf16.mxu0 %v2238
    %3872 = vmatpush1.bf16.msra.mxu0 %v2237
    %3873 = vmatprep.subr.bf16.mxu0 %v2254
    %3874 = vmatpush1.bf16.msra.mxu0 %v2253
    %3875 = vmatprep.subr.bf16.mxu0 %v2270
    %3876 = vmatpush1.bf16.msra.mxu0 %v2269
    %3877 = vmatprep.subr.bf16.mxu0 %v2286
    %3878 = vmatpush1.bf16.msra.mxu0 %v2285
    %3879 = vmatprep.subr.bf16.mxu0 %v2302
    %3880 = vmatpush1.bf16.msra.mxu0 %v2301
    %3881 = vmatprep.subr.bf16.mxu0 %v2318
    %3882 = vmatpush1.bf16.msra.mxu0 %v2317
    %3883 = vmatprep.subr.bf16.mxu0 %v2334
    %3884 = vmatpush1.bf16.msra.mxu0 %v2333
    %3885 = vmatprep.subr.bf16.mxu0 %v2350
    %3886 = vmatpush1.bf16.msra.mxu0 %v2349
    %3887 = vmatprep.subr.bf16.mxu0 %v2366
    %3888 = vmatpush1.bf16.msra.mxu0 %v2365
    %3889 = vmatprep.subr.bf16.mxu0 %v2382
    %3890 = vmatpush1.bf16.msra.mxu0 %v2381
    %3891 = vmatprep.subr.bf16.mxu0 %v2398
    %3892 = vmatpush1.bf16.msra.mxu0 %v2397
    %3893 = vmatprep.subr.bf16.mxu0 %v2414
    %3894 = vmatpush1.bf16.msra.mxu0 %v2413
    %3895 = vmatprep.subr.bf16.mxu0 %v2430
    %3896 = vmatpush1.bf16.msra.mxu0 %v2429
    %3897 = vmatprep.subr.bf16.mxu0 %v2446
    %3898 = vmatpush1.bf16.msra.mxu0 %v2445
    %3899 = vmatprep.subr.bf16.mxu0 %v2462
    %3900 = vmatpush1.bf16.msra.mxu0 %v2461
    %3901 = vmatprep.mubr.bf16.mxu0 %v658
    %3902 = vmatmul.mubr.bf16.gmra.mrb[0].mxu0 %v657
    %v3903 = vpop.f32.mrb[0].mxu0
    %v3904 = vadd.f32 0.0, %v3903
    %v3905 = vpop.f32.mrb[0].mxu0
    %v3906 = vadd.f32 0.0, %v3905
    %v3907 = vpop.f32.mrb[0].mxu0
    %v3908 = vadd.f32 0.0, %v3907
    %v3909 = vpop.f32.mrb[0].mxu0
    %v3910 = vadd.f32 0.0, %v3909
    %3911 = vmatprep.mubr.bf16.mxu0 %v662
    %3912 = vmatmul.mubr.bf16.gmra.mrb[0].mxu0 %v661
    %v3913 = vpop.f32.mrb[0].mxu0
    %v3914 = vadd.f32 0.0, %v3913
    %v3915 = vpop.f32.mrb[0].mxu0
    %v3916 = vadd.f32 0.0, %v3915
    %v3917 = vpop.f32.mrb[0].mxu0
    %v3918 = vadd.f32 0.0, %v3917
    %v3919 = vpop.f32.mrb[0].mxu0
    %v3920 = vadd.f32 0.0, %v3919
    %3921 = vdwg.mxu0
    %3922 = vmatprep.subr.bf16.mxu0 %v2478
    %3923 = vmatpush1.bf16.msra.mxu0 %v2477
    %3924 = vmatprep.subr.bf16.mxu0 %v2494
    %3925 = vmatpush1.bf16.msra.mxu0 %v2493
    %3926 = vmatprep.subr.bf16.mxu0 %v2510
    %3927 = vmatpush1.bf16.msra.mxu0 %v2509
    %3928 = vmatprep.subr.bf16.mxu0 %v2526
    %3929 = vmatpush1.bf16.msra.mxu0 %v2525
    %3930 = vmatprep.subr.bf16.mxu0 %v2542
    %3931 = vmatpush1.bf16.msra.mxu0 %v2541
    %3932 = vmatprep.subr.bf16.mxu0 %v2558
    %3933 = vmatpush1.bf16.msra.mxu0 %v2557
    %3934 = vmatprep.subr.bf16.mxu0 %v2574
    %3935 = vmatpush1.bf16.msra.mxu0 %v2573
    %3936 = vmatprep.subr.bf16.mxu0 %v2590
    %3937 = vmatpush1.bf16.msra.mxu0 %v2589
    %3938 = vmatprep.subr.bf16.mxu0 %v2606
    %3939 = vmatpush1.bf16.msra.mxu0 %v2605
    %3940 = vmatprep.subr.bf16.mxu0 %v2622
    %3941 = vmatpush1.bf16.msra.mxu0 %v2621
    %3942 = vmatprep.subr.bf16.mxu0 %v2638
    %3943 = vmatpush1.bf16.msra.mxu0 %v2637
    %3944 = vmatprep.subr.bf16.mxu0 %v2654
    %3945 = vmatpush1.bf16.msra.mxu0 %v2653
    %3946 = vmatprep.subr.bf16.mxu0 %v2670
    %3947 = vmatpush1.bf16.msra.mxu0 %v2669
    %3948 = vmatprep.subr.bf16.mxu0 %v2686
    %3949 = vmatpush1.bf16.msra.mxu0 %v2685
    %3950 = vmatprep.subr.bf16.mxu0 %v2702
    %3951 = vmatpush1.bf16.msra.mxu0 %v2701
    %3952 = vmatprep.subr.bf16.mxu0 %v2718
    %3953 = vmatpush1.bf16.msra.mxu0 %v2717
    %3954 = vmatprep.mubr.bf16.mxu0 %v660
    %3955 = vmatmul.mubr.bf16.gmra.mrb[0].mxu0 %v659
    %v3956 = vpop.f32.mrb[0].mxu0
    %v3957 = vadd.f32 %v3904, %v3956
    %v3958 = vpop.f32.mrb[0].mxu0
    %v3959 = vadd.f32 %v3906, %v3958
    %v3960 = vpop.f32.mrb[0].mxu0
    %v3961 = vadd.f32 %v3908, %v3960
    %v3962 = vpop.f32.mrb[0].mxu0
    %v3963 = vadd.f32 %v3910, %v3962
    %3964 = vmatprep.mubr.bf16.mxu0 %v664
    %3965 = vmatmul.mubr.bf16.gmra.mrb[0].mxu0 %v663
    %v3966 = vpop.f32.mrb[0].mxu0
    %v3967 = vadd.f32 %v3914, %v3966
    %v3968 = vpop.f32.mrb[0].mxu0
    %v3969 = vadd.f32 %v3916, %v3968
    %v3970 = vpop.f32.mrb[0].mxu0
    %v3971 = vadd.f32 %v3918, %v3970
    %v3972 = vpop.f32.mrb[0].mxu0
    %v3973 = vadd.f32 %v3920, %v3972
    %3974 = vdwg.mxu0
    %3975 = vmatprep.subr.bf16.mxu0 %v2224
    %3976 = vmatpush1.bf16.msra.mxu0 %v2223
    %3977 = vmatprep.subr.bf16.mxu0 %v2240
    %3978 = vmatpush1.bf16.msra.mxu0 %v2239
    %3979 = vmatprep.subr.bf16.mxu0 %v2256
    %3980 = vmatpush1.bf16.msra.mxu0 %v2255
    %3981 = vmatprep.subr.bf16.mxu0 %v2272
    %3982 = vmatpush1.bf16.msra.mxu0 %v2271
    %3983 = vmatprep.subr.bf16.mxu0 %v2288
    %3984 = vmatpush1.bf16.msra.mxu0 %v2287
    %3985 = vmatprep.subr.bf16.mxu0 %v2304
    %3986 = vmatpush1.bf16.msra.mxu0 %v2303
    %3987 = vmatprep.subr.bf16.mxu0 %v2320
    %3988 = vmatpush1.bf16.msra.mxu0 %v2319
    %3989 = vmatprep.subr.bf16.mxu0 %v2336
    %3990 = vmatpush1.bf16.msra.mxu0 %v2335
    %3991 = vmatprep.subr.bf16.mxu0 %v2352
    %3992 = vmatpush1.bf16.msra.mxu0 %v2351
    %3993 = vmatprep.subr.bf16.mxu0 %v2368
    %3994 = vmatpush1.bf16.msra.mxu0 %v2367
    %3995 = vmatprep.subr.bf16.mxu0 %v2384
    %3996 = vmatpush1.bf16.msra.mxu0 %v2383
    %3997 = vmatprep.subr.bf16.mxu0 %v2400
    %3998 = vmatpush1.bf16.msra.mxu0 %v2399
    %3999 = vmatprep.subr.bf16.mxu0 %v2416
    %4000 = vmatpush1.bf16.msra.mxu0 %v2415
    %4001 = vmatprep.subr.bf16.mxu0 %v2432
    %4002 = vmatpush1.bf16.msra.mxu0 %v2431
    %4003 = vmatprep.subr.bf16.mxu0 %v2448
    %4004 = vmatpush1.bf16.msra.mxu0 %v2447
    %4005 = vmatprep.subr.bf16.mxu0 %v2464
    %4006 = vmatpush1.bf16.msra.mxu0 %v2463
    %4007 = vmatprep.mubr.bf16.mxu0 %v658
    %4008 = vmatmul.mubr.bf16.gmra.mrb[0].mxu0 %v657
    %v4009 = vpop.f32.mrb[0].mxu0
    %v4010 = vadd.f32 0.0, %v4009
    %v4011 = vpop.f32.mrb[0].mxu0
    %v4012 = vadd.f32 0.0, %v4011
    %v4013 = vpop.f32.mrb[0].mxu0
    %v4014 = vadd.f32 0.0, %v4013
    %v4015 = vpop.f32.mrb[0].mxu0
    %v4016 = vadd.f32 0.0, %v4015
    %4017 = vmatprep.mubr.bf16.mxu0 %v662
    %4018 = vmatmul.mubr.bf16.gmra.mrb[0].mxu0 %v661
    %v4019 = vpop.f32.mrb[0].mxu0
    %v4020 = vadd.f32 0.0, %v4019
    %v4021 = vpop.f32.mrb[0].mxu0
    %v4022 = vadd.f32 0.0, %v4021
    %v4023 = vpop.f32.mrb[0].mxu0
    %v4024 = vadd.f32 0.0, %v4023
    %v4025 = vpop.f32.mrb[0].mxu0
    %v4026 = vadd.f32 0.0, %v4025
    %4027 = vdwg.mxu0
    %4028 = vmatprep.subr.bf16.mxu0 %v2480
    %4029 = vmatpush1.bf16.msra.mxu0 %v2479
    %4030 = vmatprep.subr.bf16.mxu0 %v2496
    %4031 = vmatpush1.bf16.msra.mxu0 %v2495
    %4032 = vmatprep.subr.bf16.mxu0 %v2512
    %4033 = vmatpush1.bf16.msra.mxu0 %v2511
    %4034 = vmatprep.subr.bf16.mxu0 %v2528
    %4035 = vmatpush1.bf16.msra.mxu0 %v2527
    %4036 = vmatprep.subr.bf16.mxu0 %v2544
    %4037 = vmatpush1.bf16.msra.mxu0 %v2543
    %4038 = vmatprep.subr.bf16.mxu0 %v2560
    %4039 = vmatpush1.bf16.msra.mxu0 %v2559
    %4040 = vmatprep.subr.bf16.mxu0 %v2576
    %4041 = vmatpush1.bf16.msra.mxu0 %v2575
    %4042 = vmatprep.subr.bf16.mxu0 %v2592
    %4043 = vmatpush1.bf16.msra.mxu0 %v2591
    %4044 = vmatprep.subr.bf16.mxu0 %v2608
    %4045 = vmatpush1.bf16.msra.mxu0 %v2607
    %4046 = vmatprep.subr.bf16.mxu0 %v2624
    %4047 = vmatpush1.bf16.msra.mxu0 %v2623
    %4048 = vmatprep.subr.bf16.mxu0 %v2640
    %4049 = vmatpush1.bf16.msra.mxu0 %v2639
    %4050 = vmatprep.subr.bf16.mxu0 %v2656
    %4051 = vmatpush1.bf16.msra.mxu0 %v2655
    %4052 = vmatprep.subr.bf16.mxu0 %v2672
    %4053 = vmatpush1.bf16.msra.mxu0 %v2671
    %4054 = vmatprep.subr.bf16.mxu0 %v2688
    %4055 = vmatpush1.bf16.msra.mxu0 %v2687
    %4056 = vmatprep.subr.bf16.mxu0 %v2704
    %4057 = vmatpush1.bf16.msra.mxu0 %v2703
    %4058 = vmatprep.subr.bf16.mxu0 %v2720
    %4059 = vmatpush1.bf16.msra.mxu0 %v2719
    %4060 = vmatprep.mubr.bf16.mxu0 %v660
    %4061 = vmatmul.mubr.bf16.gmra.mrb[0].mxu0 %v659
    %v4062 = vpop.f32.mrb[0].mxu0
    %v4063 = vadd.f32 %v4010, %v4062
    %v4064 = vpop.f32.mrb[0].mxu0
    %v4065 = vadd.f32 %v4012, %v4064
    %v4066 = vpop.f32.mrb[0].mxu0
    %v4067 = vadd.f32 %v4014, %v4066
    %v4068 = vpop.f32.mrb[0].mxu0
    %v4069 = vadd.f32 %v4016, %v4068
    %4070 = vmatprep.mubr.bf16.mxu0 %v664
    %4071 = vmatmul.mubr.bf16.gmra.mrb[0].mxu0 %v663
    %v4072 = vpop.f32.mrb[0].mxu0
    %v4073 = vadd.f32 %v4020, %v4072
    %v4074 = vpop.f32.mrb[0].mxu0
    %v4075 = vadd.f32 %v4022, %v4074
    %v4076 = vpop.f32.mrb[0].mxu0
    %v4077 = vadd.f32 %v4024, %v4076
    %v4078 = vpop.f32.mrb[0].mxu0
    %v4079 = vadd.f32 %v4026, %v4078
    %4080 = vdwg.mxu0
    %v4081 = vld [vmem:[#allocation8] sm:$0xff]
    %v4082 = vld [vmem:[#allocation8 + $0x8] sm:$0xff]
    %v4085 = vlaneseq
    %v4086 = vshrl.u32 %v4085, 7
    %v4087 = vsub.s32 0, %v4086
    %v4088 = vrot.slane %v4081, %v4087
    %v4089 = vlaneseq
    %v4090 = vshrl.u32 %v4089, 7
    %v4091 = vsub.s32 1, %v4090
    %v4092 = vrot.slane %v4081, %v4091
    %v4093 = vlaneseq
    %v4094 = vshrl.u32 %v4093, 7
    %v4095 = vsub.s32 2, %v4094
    %v4096 = vrot.slane %v4081, %v4095
    %v4097 = vlaneseq
    %v4098 = vshrl.u32 %v4097, 7
    %v4099 = vsub.s32 3, %v4098
    %v4100 = vrot.slane %v4081, %v4099
    %v4101 = vlaneseq
    %v4102 = vshrl.u32 %v4101, 7
    %v4103 = vsub.s32 4, %v4102
    %v4104 = vrot.slane %v4081, %v4103
    %v4105 = vlaneseq
    %v4106 = vshrl.u32 %v4105, 7
    %v4107 = vsub.s32 5, %v4106
    %v4108 = vrot.slane %v4081, %v4107
    %v4109 = vlaneseq
    %v4110 = vshrl.u32 %v4109, 7
    %v4111 = vsub.s32 6, %v4110
    %v4112 = vrot.slane %v4081, %v4111
    %v4113 = vlaneseq
    %v4114 = vshrl.u32 %v4113, 7
    %v4115 = vsub.s32 7, %v4114
    %v4116 = vrot.slane %v4081, %v4115
    %v4117 = vlaneseq
    %v4118 = vshrl.u32 %v4117, 7
    %v4119 = vsub.s32 0, %v4118
    %v4120 = vrot.slane %v4082, %v4119
    %v4121 = vlaneseq
    %v4122 = vshrl.u32 %v4121, 7
    %v4123 = vsub.s32 1, %v4122
    %v4124 = vrot.slane %v4082, %v4123
    %v4125 = vlaneseq
    %v4126 = vshrl.u32 %v4125, 7
    %v4127 = vsub.s32 2, %v4126
    %v4128 = vrot.slane %v4082, %v4127
    %v4129 = vlaneseq
    %v4130 = vshrl.u32 %v4129, 7
    %v4131 = vsub.s32 3, %v4130
    %v4132 = vrot.slane %v4082, %v4131
    %v4133 = vlaneseq
    %v4134 = vshrl.u32 %v4133, 7
    %v4135 = vsub.s32 4, %v4134
    %v4136 = vrot.slane %v4082, %v4135
    %v4137 = vlaneseq
    %v4138 = vshrl.u32 %v4137, 7
    %v4139 = vsub.s32 5, %v4138
    %v4140 = vrot.slane %v4082, %v4139
    %v4141 = vlaneseq
    %v4142 = vshrl.u32 %v4141, 7
    %v4143 = vsub.s32 6, %v4142
    %v4144 = vrot.slane %v4082, %v4143
    %v4145 = vlaneseq
    %v4146 = vshrl.u32 %v4145, 7
    %v4147 = vsub.s32 7, %v4146
    %v4148 = vrot.slane %v4082, %v4147
    %v4165 = vmul.f32 %v3321, %v4088
    %v4166 = vmul.f32 %v3323, %v4092
    %v4167 = vmul.f32 %v3427, %v4096
    %v4168 = vmul.f32 %v3429, %v4100
    %v4169 = vmul.f32 %v3533, %v4104
    %v4170 = vmul.f32 %v3535, %v4108
    %v4171 = vmul.f32 %v3639, %v4112
    %v4172 = vmul.f32 %v3641, %v4116
    %v4173 = vmul.f32 %v3745, %v4120
    %v4174 = vmul.f32 %v3747, %v4124
    %v4175 = vmul.f32 %v3851, %v4128
    %v4176 = vmul.f32 %v3853, %v4132
    %v4177 = vmul.f32 %v3957, %v4136
    %v4178 = vmul.f32 %v3959, %v4140
    %v4179 = vmul.f32 %v4063, %v4144
    %v4180 = vmul.f32 %v4065, %v4148
    %v4181 = vmul.f32 %v3325, %v4088
    %v4182 = vmul.f32 %v3327, %v4092
    %v4183 = vmul.f32 %v3431, %v4096
    %v4184 = vmul.f32 %v3433, %v4100
    %v4185 = vmul.f32 %v3537, %v4104
    %v4186 = vmul.f32 %v3539, %v4108
    %v4187 = vmul.f32 %v3643, %v4112
    %v4188 = vmul.f32 %v3645, %v4116
    %v4189 = vmul.f32 %v3749, %v4120
    %v4190 = vmul.f32 %v3751, %v4124
    %v4191 = vmul.f32 %v3855, %v4128
    %v4192 = vmul.f32 %v3857, %v4132
    %v4193 = vmul.f32 %v3961, %v4136
    %v4194 = vmul.f32 %v3963, %v4140
    %v4195 = vmul.f32 %v4067, %v4144
    %v4196 = vmul.f32 %v4069, %v4148
    %v4197 = vmul.f32 %v3331, %v4088
    %v4198 = vmul.f32 %v3333, %v4092
    %v4199 = vmul.f32 %v3437, %v4096
    %v4200 = vmul.f32 %v3439, %v4100
    %v4201 = vmul.f32 %v3543, %v4104
    %v4202 = vmul.f32 %v3545, %v4108
    %v4203 = vmul.f32 %v3649, %v4112
    %v4204 = vmul.f32 %v3651, %v4116
    %v4205 = vmul.f32 %v3755, %v4120
    %v4206 = vmul.f32 %v3757, %v4124
    %v4207 = vmul.f32 %v3861, %v4128
    %v4208 = vmul.f32 %v3863, %v4132
    %v4209 = vmul.f32 %v3967, %v4136
    %v4210 = vmul.f32 %v3969, %v4140
    %v4211 = vmul.f32 %v4073, %v4144
    %v4212 = vmul.f32 %v4075, %v4148
    %v4213 = vmul.f32 %v3335, %v4088
    %v4214 = vmul.f32 %v3337, %v4092
    %v4215 = vmul.f32 %v3441, %v4096
    %v4216 = vmul.f32 %v3443, %v4100
    %v4217 = vmul.f32 %v3547, %v4104
    %v4218 = vmul.f32 %v3549, %v4108
    %v4219 = vmul.f32 %v3653, %v4112
    %v4220 = vmul.f32 %v3655, %v4116
    %v4221 = vmul.f32 %v3759, %v4120
    %v4222 = vmul.f32 %v3761, %v4124
    %v4223 = vmul.f32 %v3865, %v4128
    %v4224 = vmul.f32 %v3867, %v4132
    %v4225 = vmul.f32 %v3971, %v4136
    %v4226 = vmul.f32 %v3973, %v4140
    %v4227 = vmul.f32 %v4077, %v4144
    %v4228 = vmul.f32 %v4079, %v4148
    %v4229 = vld [vmem:[#allocation9] sm:$0xff]
    %v4230 = vld [vmem:[#allocation9 + $0x8] sm:$0xff]
    %v4233 = vlaneseq
    %v4234 = vshrl.u32 %v4233, 7
    %v4235 = vsub.s32 0, %v4234
    %v4236 = vrot.slane %v4229, %v4235
    %v4237 = vlaneseq
    %v4238 = vshrl.u32 %v4237, 7
    %v4239 = vsub.s32 1, %v4238
    %v4240 = vrot.slane %v4229, %v4239
    %v4241 = vlaneseq
    %v4242 = vshrl.u32 %v4241, 7
    %v4243 = vsub.s32 2, %v4242
    %v4244 = vrot.slane %v4229, %v4243
    %v4245 = vlaneseq
    %v4246 = vshrl.u32 %v4245, 7
    %v4247 = vsub.s32 3, %v4246
    %v4248 = vrot.slane %v4229, %v4247
    %v4249 = vlaneseq
    %v4250 = vshrl.u32 %v4249, 7
    %v4251 = vsub.s32 4, %v4250
    %v4252 = vrot.slane %v4229, %v4251
    %v4253 = vlaneseq
    %v4254 = vshrl.u32 %v4253, 7
    %v4255 = vsub.s32 5, %v4254
    %v4256 = vrot.slane %v4229, %v4255
    %v4257 = vlaneseq
    %v4258 = vshrl.u32 %v4257, 7
    %v4259 = vsub.s32 6, %v4258
    %v4260 = vrot.slane %v4229, %v4259
    %v4261 = vlaneseq
    %v4262 = vshrl.u32 %v4261, 7
    %v4263 = vsub.s32 7, %v4262
    %v4264 = vrot.slane %v4229, %v4263
    %v4265 = vlaneseq
    %v4266 = vshrl.u32 %v4265, 7
    %v4267 = vsub.s32 0, %v4266
    %v4268 = vrot.slane %v4230, %v4267
    %v4269 = vlaneseq
    %v4270 = vshrl.u32 %v4269, 7
    %v4271 = vsub.s32 1, %v4270
    %v4272 = vrot.slane %v4230, %v4271
    %v4273 = vlaneseq
    %v4274 = vshrl.u32 %v4273, 7
    %v4275 = vsub.s32 2, %v4274
    %v4276 = vrot.slane %v4230, %v4275
    %v4277 = vlaneseq
    %v4278 = vshrl.u32 %v4277, 7
    %v4279 = vsub.s32 3, %v4278
    %v4280 = vrot.slane %v4230, %v4279
    %v4281 = vlaneseq
    %v4282 = vshrl.u32 %v4281, 7
    %v4283 = vsub.s32 4, %v4282
    %v4284 = vrot.slane %v4230, %v4283
    %v4285 = vlaneseq
    %v4286 = vshrl.u32 %v4285, 7
    %v4287 = vsub.s32 5, %v4286
    %v4288 = vrot.slane %v4230, %v4287
    %v4289 = vlaneseq
    %v4290 = vshrl.u32 %v4289, 7
    %v4291 = vsub.s32 6, %v4290
    %v4292 = vrot.slane %v4230, %v4291
    %v4293 = vlaneseq
    %v4294 = vshrl.u32 %v4293, 7
    %v4295 = vsub.s32 7, %v4294
    %v4296 = vrot.slane %v4230, %v4295
    %v4313 = vadd.f32 %v4165, %v4236
    %v4314 = vadd.f32 %v4166, %v4240
    %v4315 = vadd.f32 %v4167, %v4244
    %v4316 = vadd.f32 %v4168, %v4248
    %v4317 = vadd.f32 %v4169, %v4252
    %v4318 = vadd.f32 %v4170, %v4256
    %v4319 = vadd.f32 %v4171, %v4260
    %v4320 = vadd.f32 %v4172, %v4264
    %v4321 = vadd.f32 %v4173, %v4268
    %v4322 = vadd.f32 %v4174, %v4272
    %v4323 = vadd.f32 %v4175, %v4276
    %v4324 = vadd.f32 %v4176, %v4280
    %v4325 = vadd.f32 %v4177, %v4284
    %v4326 = vadd.f32 %v4178, %v4288
    %v4327 = vadd.f32 %v4179, %v4292
    %v4328 = vadd.f32 %v4180, %v4296
    %v4329 = vadd.f32 %v4181, %v4236
    %v4330 = vadd.f32 %v4182, %v4240
    %v4331 = vadd.f32 %v4183, %v4244
    %v4332 = vadd.f32 %v4184, %v4248
    %v4333 = vadd.f32 %v4185, %v4252
    %v4334 = vadd.f32 %v4186, %v4256
    %v4335 = vadd.f32 %v4187, %v4260
    %v4336 = vadd.f32 %v4188, %v4264
    %v4337 = vadd.f32 %v4189, %v4268
    %v4338 = vadd.f32 %v4190, %v4272
    %v4339 = vadd.f32 %v4191, %v4276
    %v4340 = vadd.f32 %v4192, %v4280
    %v4341 = vadd.f32 %v4193, %v4284
    %v4342 = vadd.f32 %v4194, %v4288
    %v4343 = vadd.f32 %v4195, %v4292
    %v4344 = vadd.f32 %v4196, %v4296
    %v4345 = vadd.f32 %v4197, %v4236
    %v4346 = vadd.f32 %v4198, %v4240
    %v4347 = vadd.f32 %v4199, %v4244
    %v4348 = vadd.f32 %v4200, %v4248
    %v4349 = vadd.f32 %v4201, %v4252
    %v4350 = vadd.f32 %v4202, %v4256
    %v4351 = vadd.f32 %v4203, %v4260
    %v4352 = vadd.f32 %v4204, %v4264
    %v4353 = vadd.f32 %v4205, %v4268
    %v4354 = vadd.f32 %v4206, %v4272
    %v4355 = vadd.f32 %v4207, %v4276
    %v4356 = vadd.f32 %v4208, %v4280
    %v4357 = vadd.f32 %v4209, %v4284
    %v4358 = vadd.f32 %v4210, %v4288
    %v4359 = vadd.f32 %v4211, %v4292
    %v4360 = vadd.f32 %v4212, %v4296
    %v4361 = vadd.f32 %v4213, %v4236
    %v4362 = vadd.f32 %v4214, %v4240
    %v4363 = vadd.f32 %v4215, %v4244
    %v4364 = vadd.f32 %v4216, %v4248
    %v4365 = vadd.f32 %v4217, %v4252
    %v4366 = vadd.f32 %v4218, %v4256
    %v4367 = vadd.f32 %v4219, %v4260
    %v4368 = vadd.f32 %v4220, %v4264
    %v4369 = vadd.f32 %v4221, %v4268
    %v4370 = vadd.f32 %v4222, %v4272
    %v4371 = vadd.f32 %v4223, %v4276
    %v4372 = vadd.f32 %v4224, %v4280
    %v4373 = vadd.f32 %v4225, %v4284
    %v4374 = vadd.f32 %v4226, %v4288
    %v4375 = vadd.f32 %v4227, %v4292
    %v4376 = vadd.f32 %v4228, %v4296
    %v4377 = vxor.u32 %v4313, 2147483648
    %v4378 = vxor.u32 %v4314, 2147483648
    %v4379 = vxor.u32 %v4315, 2147483648
    %v4380 = vxor.u32 %v4316, 2147483648
    %v4381 = vxor.u32 %v4317, 2147483648
    %v4382 = vxor.u32 %v4318, 2147483648
    %v4383 = vxor.u32 %v4319, 2147483648
    %v4384 = vxor.u32 %v4320, 2147483648
    %v4385 = vxor.u32 %v4321, 2147483648
    %v4386 = vxor.u32 %v4322, 2147483648
    %v4387 = vxor.u32 %v4323, 2147483648
    %v4388 = vxor.u32 %v4324, 2147483648
    %v4389 = vxor.u32 %v4325, 2147483648
    %v4390 = vxor.u32 %v4326, 2147483648
    %v4391 = vxor.u32 %v4327, 2147483648
    %v4392 = vxor.u32 %v4328, 2147483648
    %v4393 = vxor.u32 %v4329, 2147483648
    %v4394 = vxor.u32 %v4330, 2147483648
    %v4395 = vxor.u32 %v4331, 2147483648
    %v4396 = vxor.u32 %v4332, 2147483648
    %v4397 = vxor.u32 %v4333, 2147483648
    %v4398 = vxor.u32 %v4334, 2147483648
    %v4399 = vxor.u32 %v4335, 2147483648
    %v4400 = vxor.u32 %v4336, 2147483648
    %v4401 = vxor.u32 %v4337, 2147483648
    %v4402 = vxor.u32 %v4338, 2147483648
    %v4403 = vxor.u32 %v4339, 2147483648
    %v4404 = vxor.u32 %v4340, 2147483648
    %v4405 = vxor.u32 %v4341, 2147483648
    %v4406 = vxor.u32 %v4342, 2147483648
    %v4407 = vxor.u32 %v4343, 2147483648
    %v4408 = vxor.u32 %v4344, 2147483648
    %v4409 = vxor.u32 %v4345, 2147483648
    %v4410 = vxor.u32 %v4346, 2147483648
    %v4411 = vxor.u32 %v4347, 2147483648
    %v4412 = vxor.u32 %v4348, 2147483648
    %v4413 = vxor.u32 %v4349, 2147483648
    %v4414 = vxor.u32 %v4350, 2147483648
    %v4415 = vxor.u32 %v4351, 2147483648
    %v4416 = vxor.u32 %v4352, 2147483648
    %v4417 = vxor.u32 %v4353, 2147483648
    %v4418 = vxor.u32 %v4354, 2147483648
    %v4419 = vxor.u32 %v4355, 2147483648
    %v4420 = vxor.u32 %v4356, 2147483648
    %v4421 = vxor.u32 %v4357, 2147483648
    %v4422 = vxor.u32 %v4358, 2147483648
    %v4423 = vxor.u32 %v4359, 2147483648
    %v4424 = vxor.u32 %v4360, 2147483648
    %v4425 = vxor.u32 %v4361, 2147483648
    %v4426 = vxor.u32 %v4362, 2147483648
    %v4427 = vxor.u32 %v4363, 2147483648
    %v4428 = vxor.u32 %v4364, 2147483648
    %v4429 = vxor.u32 %v4365, 2147483648
    %v4430 = vxor.u32 %v4366, 2147483648
    %v4431 = vxor.u32 %v4367, 2147483648
    %v4432 = vxor.u32 %v4368, 2147483648
    %v4433 = vxor.u32 %v4369, 2147483648
    %v4434 = vxor.u32 %v4370, 2147483648
    %v4435 = vxor.u32 %v4371, 2147483648
    %v4436 = vxor.u32 %v4372, 2147483648
    %v4437 = vxor.u32 %v4373, 2147483648
    %v4438 = vxor.u32 %v4374, 2147483648
    %v4439 = vxor.u32 %v4375, 2147483648
    %v4440 = vxor.u32 %v4376, 2147483648
    %v4441 = vmul.f32 %v4377, 1.442695
    %v4442 = vpow.pop %v4441
    %v4443 = vmul.f32 %v4378, 1.442695
    %v4444 = vpow.pop %v4443
    %v4445 = vmul.f32 %v4379, 1.442695
    %v4446 = vpow.pop %v4445
    %v4447 = vmul.f32 %v4380, 1.442695
    %v4448 = vpow.pop %v4447
    %v4449 = vmul.f32 %v4381, 1.442695
    %v4450 = vpow.pop %v4449
    %v4451 = vmul.f32 %v4382, 1.442695
    %v4452 = vpow.pop %v4451
    %v4453 = vmul.f32 %v4383, 1.442695
    %v4454 = vpow.pop %v4453
    %v4455 = vmul.f32 %v4384, 1.442695
    %v4456 = vpow.pop %v4455
    %v4457 = vmul.f32 %v4385, 1.442695
    %v4458 = vpow.pop %v4457
    %v4459 = vmul.f32 %v4386, 1.442695
    %v4460 = vpow.pop %v4459
    %v4461 = vmul.f32 %v4387, 1.442695
    %v4462 = vpow.pop %v4461
    %v4463 = vmul.f32 %v4388, 1.442695
    %v4464 = vpow.pop %v4463
    %v4465 = vmul.f32 %v4389, 1.442695
    %v4466 = vpow.pop %v4465
    %v4467 = vmul.f32 %v4390, 1.442695
    %v4468 = vpow.pop %v4467
    %v4469 = vmul.f32 %v4391, 1.442695
    %v4470 = vpow.pop %v4469
    %v4471 = vmul.f32 %v4392, 1.442695
    %v4472 = vpow.pop %v4471
    %v4473 = vmul.f32 %v4393, 1.442695
    %v4474 = vpow.pop %v4473
    %v4475 = vmul.f32 %v4394, 1.442695
    %v4476 = vpow.pop %v4475
    %v4477 = vmul.f32 %v4395, 1.442695
    %v4478 = vpow.pop %v4477
    %v4479 = vmul.f32 %v4396, 1.442695
    %v4480 = vpow.pop %v4479
    %v4481 = vmul.f32 %v4397, 1.442695
    %v4482 = vpow.pop %v4481
    %v4483 = vmul.f32 %v4398, 1.442695
    %v4484 = vpow.pop %v4483
    %v4485 = vmul.f32 %v4399, 1.442695
    %v4486 = vpow.pop %v4485
    %v4487 = vmul.f32 %v4400, 1.442695
    %v4488 = vpow.pop %v4487
    %v4489 = vmul.f32 %v4401, 1.442695
    %v4490 = vpow.pop %v4489
    %v4491 = vmul.f32 %v4402, 1.442695
    %v4492 = vpow.pop %v4491
    %v4493 = vmul.f32 %v4403, 1.442695
    %v4494 = vpow.pop %v4493
    %v4495 = vmul.f32 %v4404, 1.442695
    %v4496 = vpow.pop %v4495
    %v4497 = vmul.f32 %v4405, 1.442695
    %v4498 = vpow.pop %v4497
    %v4499 = vmul.f32 %v4406, 1.442695
    %v4500 = vpow.pop %v4499
    %v4501 = vmul.f32 %v4407, 1.442695
    %v4502 = vpow.pop %v4501
    %v4503 = vmul.f32 %v4408, 1.442695
    %v4504 = vpow.pop %v4503
    %v4505 = vmul.f32 %v4409, 1.442695
    %v4506 = vpow.pop %v4505
    %v4507 = vmul.f32 %v4410, 1.442695
    %v4508 = vpow.pop %v4507
    %v4509 = vmul.f32 %v4411, 1.442695
    %v4510 = vpow.pop %v4509
    %v4511 = vmul.f32 %v4412, 1.442695
    %v4512 = vpow.pop %v4511
    %v4513 = vmul.f32 %v4413, 1.442695
    %v4514 = vpow.pop %v4513
    %v4515 = vmul.f32 %v4414, 1.442695
    %v4516 = vpow.pop %v4515
    %v4517 = vmul.f32 %v4415, 1.442695
    %v4518 = vpow.pop %v4517
    %v4519 = vmul.f32 %v4416, 1.442695
    %v4520 = vpow.pop %v4519
    %v4521 = vmul.f32 %v4417, 1.442695
    %v4522 = vpow.pop %v4521
    %v4523 = vmul.f32 %v4418, 1.442695
    %v4524 = vpow.pop %v4523
    %v4525 = vmul.f32 %v4419, 1.442695
    %v4526 = vpow.pop %v4525
    %v4527 = vmul.f32 %v4420, 1.442695
    %v4528 = vpow.pop %v4527
    %v4529 = vmul.f32 %v4421, 1.442695
    %v4530 = vpow.pop %v4529
    %v4531 = vmul.f32 %v4422, 1.442695
    %v4532 = vpow.pop %v4531
    %v4533 = vmul.f32 %v4423, 1.442695
    %v4534 = vpow.pop %v4533
    %v4535 = vmul.f32 %v4424, 1.442695
    %v4536 = vpow.pop %v4535
    %v4537 = vmul.f32 %v4425, 1.442695
    %v4538 = vpow.pop %v4537
    %v4539 = vmul.f32 %v4426, 1.442695
    %v4540 = vpow.pop %v4539
    %v4541 = vmul.f32 %v4427, 1.442695
    %v4542 = vpow.pop %v4541
    %v4543 = vmul.f32 %v4428, 1.442695
    %v4544 = vpow.pop %v4543
    %v4545 = vmul.f32 %v4429, 1.442695
    %v4546 = vpow.pop %v4545
    %v4547 = vmul.f32 %v4430, 1.442695
    %v4548 = vpow.pop %v4547
    %v4549 = vmul.f32 %v4431, 1.442695
    %v4550 = vpow.pop %v4549
    %v4551 = vmul.f32 %v4432, 1.442695
    %v4552 = vpow.pop %v4551
    %v4553 = vmul.f32 %v4433, 1.442695
    %v4554 = vpow.pop %v4553
    %v4555 = vmul.f32 %v4434, 1.442695
    %v4556 = vpow.pop %v4555
    %v4557 = vmul.f32 %v4435, 1.442695
    %v4558 = vpow.pop %v4557
    %v4559 = vmul.f32 %v4436, 1.442695
    %v4560 = vpow.pop %v4559
    %v4561 = vmul.f32 %v4437, 1.442695
    %v4562 = vpow.pop %v4561
    %v4563 = vmul.f32 %v4438, 1.442695
    %v4564 = vpow.pop %v4563
    %v4565 = vmul.f32 %v4439, 1.442695
    %v4566 = vpow.pop %v4565
    %v4567 = vmul.f32 %v4440, 1.442695
    %v4568 = vpow.pop %v4567
    %v4569 = vadd.f32 %v4442, 1.0
    %v4570 = vadd.f32 %v4444, 1.0
    %v4571 = vadd.f32 %v4446, 1.0
    %v4572 = vadd.f32 %v4448, 1.0
    %v4573 = vadd.f32 %v4450, 1.0
    %v4574 = vadd.f32 %v4452, 1.0
    %v4575 = vadd.f32 %v4454, 1.0
    %v4576 = vadd.f32 %v4456, 1.0
    %v4577 = vadd.f32 %v4458, 1.0
    %v4578 = vadd.f32 %v4460, 1.0
    %v4579 = vadd.f32 %v4462, 1.0
    %v4580 = vadd.f32 %v4464, 1.0
    %v4581 = vadd.f32 %v4466, 1.0
    %v4582 = vadd.f32 %v4468, 1.0
    %v4583 = vadd.f32 %v4470, 1.0
    %v4584 = vadd.f32 %v4472, 1.0
    %v4585 = vadd.f32 %v4474, 1.0
    %v4586 = vadd.f32 %v4476, 1.0
    %v4587 = vadd.f32 %v4478, 1.0
    %v4588 = vadd.f32 %v4480, 1.0
    %v4589 = vadd.f32 %v4482, 1.0
    %v4590 = vadd.f32 %v4484, 1.0
    %v4591 = vadd.f32 %v4486, 1.0
    %v4592 = vadd.f32 %v4488, 1.0
    %v4593 = vadd.f32 %v4490, 1.0
    %v4594 = vadd.f32 %v4492, 1.0
    %v4595 = vadd.f32 %v4494, 1.0
    %v4596 = vadd.f32 %v4496, 1.0
    %v4597 = vadd.f32 %v4498, 1.0
    %v4598 = vadd.f32 %v4500, 1.0
    %v4599 = vadd.f32 %v4502, 1.0
    %v4600 = vadd.f32 %v4504, 1.0
    %v4601 = vadd.f32 %v4506, 1.0
    %v4602 = vadd.f32 %v4508, 1.0
    %v4603 = vadd.f32 %v4510, 1.0
    %v4604 = vadd.f32 %v4512, 1.0
    %v4605 = vadd.f32 %v4514, 1.0
    %v4606 = vadd.f32 %v4516, 1.0
    %v4607 = vadd.f32 %v4518, 1.0
    %v4608 = vadd.f32 %v4520, 1.0
    %v4609 = vadd.f32 %v4522, 1.0
    %v4610 = vadd.f32 %v4524, 1.0
    %v4611 = vadd.f32 %v4526, 1.0
    %v4612 = vadd.f32 %v4528, 1.0
    %v4613 = vadd.f32 %v4530, 1.0
    %v4614 = vadd.f32 %v4532, 1.0
    %v4615 = vadd.f32 %v4534, 1.0
    %v4616 = vadd.f32 %v4536, 1.0
    %v4617 = vadd.f32 %v4538, 1.0
    %v4618 = vadd.f32 %v4540, 1.0
    %v4619 = vadd.f32 %v4542, 1.0
    %v4620 = vadd.f32 %v4544, 1.0
    %v4621 = vadd.f32 %v4546, 1.0
    %v4622 = vadd.f32 %v4548, 1.0
    %v4623 = vadd.f32 %v4550, 1.0
    %v4624 = vadd.f32 %v4552, 1.0
    %v4625 = vadd.f32 %v4554, 1.0
    %v4626 = vadd.f32 %v4556, 1.0
    %v4627 = vadd.f32 %v4558, 1.0
    %v4628 = vadd.f32 %v4560, 1.0
    %v4629 = vadd.f32 %v4562, 1.0
    %v4630 = vadd.f32 %v4564, 1.0
    %v4631 = vadd.f32 %v4566, 1.0
    %v4632 = vadd.f32 %v4568, 1.0
    %v4633 = vrcp.pop %v4569
    %v4634 = vmul.f32 1.0, %v4633
    %v4635 = vrcp.pop %v4570
    %v4636 = vmul.f32 1.0, %v4635
    %v4637 = vrcp.pop %v4571
    %v4638 = vmul.f32 1.0, %v4637
    %v4639 = vrcp.pop %v4572
    %v4640 = vmul.f32 1.0, %v4639
    %v4641 = vrcp.pop %v4573
    %v4642 = vmul.f32 1.0, %v4641
    %v4643 = vrcp.pop %v4574
    %v4644 = vmul.f32 1.0, %v4643
    %v4645 = vrcp.pop %v4575
    %v4646 = vmul.f32 1.0, %v4645
    %v4647 = vrcp.pop %v4576
    %v4648 = vmul.f32 1.0, %v4647
    %v4649 = vrcp.pop %v4577
    %v4650 = vmul.f32 1.0, %v4649
    %v4651 = vrcp.pop %v4578
    %v4652 = vmul.f32 1.0, %v4651
    %v4653 = vrcp.pop %v4579
    %v4654 = vmul.f32 1.0, %v4653
    %v4655 = vrcp.pop %v4580
    %v4656 = vmul.f32 1.0, %v4655
    %v4657 = vrcp.pop %v4581
    %v4658 = vmul.f32 1.0, %v4657
    %v4659 = vrcp.pop %v4582
    %v4660 = vmul.f32 1.0, %v4659
    %v4661 = vrcp.pop %v4583
    %v4662 = vmul.f32 1.0, %v4661
    %v4663 = vrcp.pop %v4584
    %v4664 = vmul.f32 1.0, %v4663
    %v4665 = vrcp.pop %v4585
    %v4666 = vmul.f32 1.0, %v4665
    %v4667 = vrcp.pop %v4586
    %v4668 = vmul.f32 1.0, %v4667
    %v4669 = vrcp.pop %v4587
    %v4670 = vmul.f32 1.0, %v4669
    %v4671 = vrcp.pop %v4588
    %v4672 = vmul.f32 1.0, %v4671
    %v4673 = vrcp.pop %v4589
    %v4674 = vmul.f32 1.0, %v4673
    %v4675 = vrcp.pop %v4590
    %v4676 = vmul.f32 1.0, %v4675
    %v4677 = vrcp.pop %v4591
    %v4678 = vmul.f32 1.0, %v4677
    %v4679 = vrcp.pop %v4592
    %v4680 = vmul.f32 1.0, %v4679
    %v4681 = vrcp.pop %v4593
    %v4682 = vmul.f32 1.0, %v4681
    %v4683 = vrcp.pop %v4594
    %v4684 = vmul.f32 1.0, %v4683
    %v4685 = vrcp.pop %v4595
    %v4686 = vmul.f32 1.0, %v4685
    %v4687 = vrcp.pop %v4596
    %v4688 = vmul.f32 1.0, %v4687
    %v4689 = vrcp.pop %v4597
    %v4690 = vmul.f32 1.0, %v4689
    %v4691 = vrcp.pop %v4598
    %v4692 = vmul.f32 1.0, %v4691
    %v4693 = vrcp.pop %v4599
    %v4694 = vmul.f32 1.0, %v4693
    %v4695 = vrcp.pop %v4600
    %v4696 = vmul.f32 1.0, %v4695
    %v4697 = vrcp.pop %v4601
    %v4698 = vmul.f32 1.0, %v4697
    %v4699 = vrcp.pop %v4602
    %v4700 = vmul.f32 1.0, %v4699
    %v4701 = vrcp.pop %v4603
    %v4702 = vmul.f32 1.0, %v4701
    %v4703 = vrcp.pop %v4604
    %v4704 = vmul.f32 1.0, %v4703
    %v4705 = vrcp.pop %v4605
    %v4706 = vmul.f32 1.0, %v4705
    %v4707 = vrcp.pop %v4606
    %v4708 = vmul.f32 1.0, %v4707
    %v4709 = vrcp.pop %v4607
    %v4710 = vmul.f32 1.0, %v4709
    %v4711 = vrcp.pop %v4608
    %v4712 = vmul.f32 1.0, %v4711
    %v4713 = vrcp.pop %v4609
    %v4714 = vmul.f32 1.0, %v4713
    %v4715 = vrcp.pop %v4610
    %v4716 = vmul.f32 1.0, %v4715
    %v4717 = vrcp.pop %v4611
    %v4718 = vmul.f32 1.0, %v4717
    %v4719 = vrcp.pop %v4612
    %v4720 = vmul.f32 1.0, %v4719
    %v4721 = vrcp.pop %v4613
    %v4722 = vmul.f32 1.0, %v4721
    %v4723 = vrcp.pop %v4614
    %v4724 = vmul.f32 1.0, %v4723
    %v4725 = vrcp.pop %v4615
    %v4726 = vmul.f32 1.0, %v4725
    %v4727 = vrcp.pop %v4616
    %v4728 = vmul.f32 1.0, %v4727
    %v4729 = vrcp.pop %v4617
    %v4730 = vmul.f32 1.0, %v4729
    %v4731 = vrcp.pop %v4618
    %v4732 = vmul.f32 1.0, %v4731
    %v4733 = vrcp.pop %v4619
    %v4734 = vmul.f32 1.0, %v4733
    %v4735 = vrcp.pop %v4620
    %v4736 = vmul.f32 1.0, %v4735
    %v4737 = vrcp.pop %v4621
    %v4738 = vmul.f32 1.0, %v4737
    %v4739 = vrcp.pop %v4622
    %v4740 = vmul.f32 1.0, %v4739
    %v4741 = vrcp.pop %v4623
    %v4742 = vmul.f32 1.0, %v4741
    %v4743 = vrcp.pop %v4624
    %v4744 = vmul.f32 1.0, %v4743
    %v4745 = vrcp.pop %v4625
    %v4746 = vmul.f32 1.0, %v4745
    %v4747 = vrcp.pop %v4626
    %v4748 = vmul.f32 1.0, %v4747
    %v4749 = vrcp.pop %v4627
    %v4750 = vmul.f32 1.0, %v4749
    %v4751 = vrcp.pop %v4628
    %v4752 = vmul.f32 1.0, %v4751
    %v4753 = vrcp.pop %v4629
    %v4754 = vmul.f32 1.0, %v4753
    %v4755 = vrcp.pop %v4630
    %v4756 = vmul.f32 1.0, %v4755
    %v4757 = vrcp.pop %v4631
    %v4758 = vmul.f32 1.0, %v4757
    %v4759 = vrcp.pop %v4632
    %v4760 = vmul.f32 1.0, %v4759
    %v4761 = vmul.f32 %v4313, %v4634
    %v4762 = vmul.f32 %v4314, %v4636
    %v4763 = vmul.f32 %v4315, %v4638
    %v4764 = vmul.f32 %v4316, %v4640
    %v4765 = vmul.f32 %v4317, %v4642
    %v4766 = vmul.f32 %v4318, %v4644
    %v4767 = vmul.f32 %v4319, %v4646
    %v4768 = vmul.f32 %v4320, %v4648
    %v4769 = vmul.f32 %v4321, %v4650
    %v4770 = vmul.f32 %v4322, %v4652
    %v4771 = vmul.f32 %v4323, %v4654
    %v4772 = vmul.f32 %v4324, %v4656
    %v4773 = vmul.f32 %v4325, %v4658
    %v4774 = vmul.f32 %v4326, %v4660
    %v4775 = vmul.f32 %v4327, %v4662
    %v4776 = vmul.f32 %v4328, %v4664
    %v4777 = vmul.f32 %v4329, %v4666
    %v4778 = vmul.f32 %v4330, %v4668
    %v4779 = vmul.f32 %v4331, %v4670
    %v4780 = vmul.f32 %v4332, %v4672
    %v4781 = vmul.f32 %v4333, %v4674
    %v4782 = vmul.f32 %v4334, %v4676
    %v4783 = vmul.f32 %v4335, %v4678
    %v4784 = vmul.f32 %v4336, %v4680
    %v4785 = vmul.f32 %v4337, %v4682
    %v4786 = vmul.f32 %v4338, %v4684
    %v4787 = vmul.f32 %v4339, %v4686
    %v4788 = vmul.f32 %v4340, %v4688
    %v4789 = vmul.f32 %v4341, %v4690
    %v4790 = vmul.f32 %v4342, %v4692
    %v4791 = vmul.f32 %v4343, %v4694
    %v4792 = vmul.f32 %v4344, %v4696
    %v4793 = vmul.f32 %v4345, %v4698
    %v4794 = vmul.f32 %v4346, %v4700
    %v4795 = vmul.f32 %v4347, %v4702
    %v4796 = vmul.f32 %v4348, %v4704
    %v4797 = vmul.f32 %v4349, %v4706
    %v4798 = vmul.f32 %v4350, %v4708
    %v4799 = vmul.f32 %v4351, %v4710
    %v4800 = vmul.f32 %v4352, %v4712
    %v4801 = vmul.f32 %v4353, %v4714
    %v4802 = vmul.f32 %v4354, %v4716
    %v4803 = vmul.f32 %v4355, %v4718
    %v4804 = vmul.f32 %v4356, %v4720
    %v4805 = vmul.f32 %v4357, %v4722
    %v4806 = vmul.f32 %v4358, %v4724
    %v4807 = vmul.f32 %v4359, %v4726
    %v4808 = vmul.f32 %v4360, %v4728
    %v4809 = vmul.f32 %v4361, %v4730
    %v4810 = vmul.f32 %v4362, %v4732
    %v4811 = vmul.f32 %v4363, %v4734
    %v4812 = vmul.f32 %v4364, %v4736
    %v4813 = vmul.f32 %v4365, %v4738
    %v4814 = vmul.f32 %v4366, %v4740
    %v4815 = vmul.f32 %v4367, %v4742
    %v4816 = vmul.f32 %v4368, %v4744
    %v4817 = vmul.f32 %v4369, %v4746
    %v4818 = vmul.f32 %v4370, %v4748
    %v4819 = vmul.f32 %v4371, %v4750
    %v4820 = vmul.f32 %v4372, %v4752
    %v4821 = vmul.f32 %v4373, %v4754
    %v4822 = vmul.f32 %v4374, %v4756
    %v4823 = vmul.f32 %v4375, %v4758
    %v4824 = vmul.f32 %v4376, %v4760
    %v4825 = vadd.f32 %v4761, %v4777
    %v4826 = vrot.slane %v4825, 4
    %v4827 = vadd.f32 %v4825, %v4826
    %v4828 = vrot.slane %v4827, 2
    %v4829 = vadd.f32 %v4827, %v4828
    %v4830 = vrot.slane %v4829, 1
    %v4831 = vadd.f32 %v4829, %v4830
    %v4832 = vadd.f32 %v4762, %v4778
    %v4833 = vrot.slane %v4832, 4
    %v4834 = vadd.f32 %v4832, %v4833
    %v4835 = vrot.slane %v4834, 2
    %v4836 = vadd.f32 %v4834, %v4835
    %v4837 = vrot.slane %v4836, 1
    %v4838 = vadd.f32 %v4836, %v4837
    %v4839 = vadd.f32 %v4763, %v4779
    %v4840 = vrot.slane %v4839, 4
    %v4841 = vadd.f32 %v4839, %v4840
    %v4842 = vrot.slane %v4841, 2
    %v4843 = vadd.f32 %v4841, %v4842
    %v4844 = vrot.slane %v4843, 1
    %v4845 = vadd.f32 %v4843, %v4844
    %v4846 = vadd.f32 %v4764, %v4780
    %v4847 = vrot.slane %v4846, 4
    %v4848 = vadd.f32 %v4846, %v4847
    %v4849 = vrot.slane %v4848, 2
    %v4850 = vadd.f32 %v4848, %v4849
    %v4851 = vrot.slane %v4850, 1
    %v4852 = vadd.f32 %v4850, %v4851
    %v4853 = vadd.f32 %v4765, %v4781
    %v4854 = vrot.slane %v4853, 4
    %v4855 = vadd.f32 %v4853, %v4854
    %v4856 = vrot.slane %v4855, 2
    %v4857 = vadd.f32 %v4855, %v4856
    %v4858 = vrot.slane %v4857, 1
    %v4859 = vadd.f32 %v4857, %v4858
    %v4860 = vadd.f32 %v4766, %v4782
    %v4861 = vrot.slane %v4860, 4
    %v4862 = vadd.f32 %v4860, %v4861
    %v4863 = vrot.slane %v4862, 2
    %v4864 = vadd.f32 %v4862, %v4863
    %v4865 = vrot.slane %v4864, 1
    %v4866 = vadd.f32 %v4864, %v4865
    %v4867 = vadd.f32 %v4767, %v4783
    %v4868 = vrot.slane %v4867, 4
    %v4869 = vadd.f32 %v4867, %v4868
    %v4870 = vrot.slane %v4869, 2
    %v4871 = vadd.f32 %v4869, %v4870
    %v4872 = vrot.slane %v4871, 1
    %v4873 = vadd.f32 %v4871, %v4872
    %v4874 = vadd.f32 %v4768, %v4784
    %v4875 = vrot.slane %v4874, 4
    %v4876 = vadd.f32 %v4874, %v4875
    %v4877 = vrot.slane %v4876, 2
    %v4878 = vadd.f32 %v4876, %v4877
    %v4879 = vrot.slane %v4878, 1
    %v4880 = vadd.f32 %v4878, %v4879
    %v4881 = vadd.f32 %v4769, %v4785
    %v4882 = vrot.slane %v4881, 4
    %v4883 = vadd.f32 %v4881, %v4882
    %v4884 = vrot.slane %v4883, 2
    %v4885 = vadd.f32 %v4883, %v4884
    %v4886 = vrot.slane %v4885, 1
    %v4887 = vadd.f32 %v4885, %v4886
    %v4888 = vadd.f32 %v4770, %v4786
    %v4889 = vrot.slane %v4888, 4
    %v4890 = vadd.f32 %v4888, %v4889
    %v4891 = vrot.slane %v4890, 2
    %v4892 = vadd.f32 %v4890, %v4891
    %v4893 = vrot.slane %v4892, 1
    %v4894 = vadd.f32 %v4892, %v4893
    %v4895 = vadd.f32 %v4771, %v4787
    %v4896 = vrot.slane %v4895, 4
    %v4897 = vadd.f32 %v4895, %v4896
    %v4898 = vrot.slane %v4897, 2
    %v4899 = vadd.f32 %v4897, %v4898
    %v4900 = vrot.slane %v4899, 1
    %v4901 = vadd.f32 %v4899, %v4900
    %v4902 = vadd.f32 %v4772, %v4788
    %v4903 = vrot.slane %v4902, 4
    %v4904 = vadd.f32 %v4902, %v4903
    %v4905 = vrot.slane %v4904, 2
    %v4906 = vadd.f32 %v4904, %v4905
    %v4907 = vrot.slane %v4906, 1
    %v4908 = vadd.f32 %v4906, %v4907
    %v4909 = vadd.f32 %v4773, %v4789
    %v4910 = vrot.slane %v4909, 4
    %v4911 = vadd.f32 %v4909, %v4910
    %v4912 = vrot.slane %v4911, 2
    %v4913 = vadd.f32 %v4911, %v4912
    %v4914 = vrot.slane %v4913, 1
    %v4915 = vadd.f32 %v4913, %v4914
    %v4916 = vadd.f32 %v4774, %v4790
    %v4917 = vrot.slane %v4916, 4
    %v4918 = vadd.f32 %v4916, %v4917
    %v4919 = vrot.slane %v4918, 2
    %v4920 = vadd.f32 %v4918, %v4919
    %v4921 = vrot.slane %v4920, 1
    %v4922 = vadd.f32 %v4920, %v4921
    %v4923 = vadd.f32 %v4775, %v4791
    %v4924 = vrot.slane %v4923, 4
    %v4925 = vadd.f32 %v4923, %v4924
    %v4926 = vrot.slane %v4925, 2
    %v4927 = vadd.f32 %v4925, %v4926
    %v4928 = vrot.slane %v4927, 1
    %v4929 = vadd.f32 %v4927, %v4928
    %v4930 = vadd.f32 %v4776, %v4792
    %v4931 = vrot.slane %v4930, 4
    %v4932 = vadd.f32 %v4930, %v4931
    %v4933 = vrot.slane %v4932, 2
    %v4934 = vadd.f32 %v4932, %v4933
    %v4935 = vrot.slane %v4934, 1
    %v4936 = vadd.f32 %v4934, %v4935
    %v4937 = vadd.f32 %v4793, %v4809
    %v4938 = vrot.slane %v4937, 4
    %v4939 = vadd.f32 %v4937, %v4938
    %v4940 = vrot.slane %v4939, 2
    %v4941 = vadd.f32 %v4939, %v4940
    %v4942 = vrot.slane %v4941, 1
    %v4943 = vadd.f32 %v4941, %v4942
    %v4944 = vadd.f32 %v4794, %v4810
    %v4945 = vrot.slane %v4944, 4
    %v4946 = vadd.f32 %v4944, %v4945
    %v4947 = vrot.slane %v4946, 2
    %v4948 = vadd.f32 %v4946, %v4947
    %v4949 = vrot.slane %v4948, 1
    %v4950 = vadd.f32 %v4948, %v4949
    %v4951 = vadd.f32 %v4795, %v4811
    %v4952 = vrot.slane %v4951, 4
    %v4953 = vadd.f32 %v4951, %v4952
    %v4954 = vrot.slane %v4953, 2
    %v4955 = vadd.f32 %v4953, %v4954
    %v4956 = vrot.slane %v4955, 1
    %v4957 = vadd.f32 %v4955, %v4956
    %v4958 = vadd.f32 %v4796, %v4812
    %v4959 = vrot.slane %v4958, 4
    %v4960 = vadd.f32 %v4958, %v4959
    %v4961 = vrot.slane %v4960, 2
    %v4962 = vadd.f32 %v4960, %v4961
    %v4963 = vrot.slane %v4962, 1
    %v4964 = vadd.f32 %v4962, %v4963
    %v4965 = vadd.f32 %v4797, %v4813
    %v4966 = vrot.slane %v4965, 4
    %v4967 = vadd.f32 %v4965, %v4966
    %v4968 = vrot.slane %v4967, 2
    %v4969 = vadd.f32 %v4967, %v4968
    %v4970 = vrot.slane %v4969, 1
    %v4971 = vadd.f32 %v4969, %v4970
    %v4972 = vadd.f32 %v4798, %v4814
    %v4973 = vrot.slane %v4972, 4
    %v4974 = vadd.f32 %v4972, %v4973
    %v4975 = vrot.slane %v4974, 2
    %v4976 = vadd.f32 %v4974, %v4975
    %v4977 = vrot.slane %v4976, 1
    %v4978 = vadd.f32 %v4976, %v4977
    %v4979 = vadd.f32 %v4799, %v4815
    %v4980 = vrot.slane %v4979, 4
    %v4981 = vadd.f32 %v4979, %v4980
    %v4982 = vrot.slane %v4981, 2
    %v4983 = vadd.f32 %v4981, %v4982
    %v4984 = vrot.slane %v4983, 1
    %v4985 = vadd.f32 %v4983, %v4984
    %v4986 = vadd.f32 %v4800, %v4816
    %v4987 = vrot.slane %v4986, 4
    %v4988 = vadd.f32 %v4986, %v4987
    %v4989 = vrot.slane %v4988, 2
    %v4990 = vadd.f32 %v4988, %v4989
    %v4991 = vrot.slane %v4990, 1
    %v4992 = vadd.f32 %v4990, %v4991
    %v4993 = vadd.f32 %v4801, %v4817
    %v4994 = vrot.slane %v4993, 4
    %v4995 = vadd.f32 %v4993, %v4994
    %v4996 = vrot.slane %v4995, 2
    %v4997 = vadd.f32 %v4995, %v4996
    %v4998 = vrot.slane %v4997, 1
    %v4999 = vadd.f32 %v4997, %v4998
    %v5000 = vadd.f32 %v4802, %v4818
    %v5001 = vrot.slane %v5000, 4
    %v5002 = vadd.f32 %v5000, %v5001
    %v5003 = vrot.slane %v5002, 2
    %v5004 = vadd.f32 %v5002, %v5003
    %v5005 = vrot.slane %v5004, 1
    %v5006 = vadd.f32 %v5004, %v5005
    %v5007 = vadd.f32 %v4803, %v4819
    %v5008 = vrot.slane %v5007, 4
    %v5009 = vadd.f32 %v5007, %v5008
    %v5010 = vrot.slane %v5009, 2
    %v5011 = vadd.f32 %v5009, %v5010
    %v5012 = vrot.slane %v5011, 1
    %v5013 = vadd.f32 %v5011, %v5012
    %v5014 = vadd.f32 %v4804, %v4820
    %v5015 = vrot.slane %v5014, 4
    %v5016 = vadd.f32 %v5014, %v5015
    %v5017 = vrot.slane %v5016, 2
    %v5018 = vadd.f32 %v5016, %v5017
    %v5019 = vrot.slane %v5018, 1
    %v5020 = vadd.f32 %v5018, %v5019
    %v5021 = vadd.f32 %v4805, %v4821
    %v5022 = vrot.slane %v5021, 4
    %v5023 = vadd.f32 %v5021, %v5022
    %v5024 = vrot.slane %v5023, 2
    %v5025 = vadd.f32 %v5023, %v5024
    %v5026 = vrot.slane %v5025, 1
    %v5027 = vadd.f32 %v5025, %v5026
    %v5028 = vadd.f32 %v4806, %v4822
    %v5029 = vrot.slane %v5028, 4
    %v5030 = vadd.f32 %v5028, %v5029
    %v5031 = vrot.slane %v5030, 2
    %v5032 = vadd.f32 %v5030, %v5031
    %v5033 = vrot.slane %v5032, 1
    %v5034 = vadd.f32 %v5032, %v5033
    %v5035 = vadd.f32 %v4807, %v4823
    %v5036 = vrot.slane %v5035, 4
    %v5037 = vadd.f32 %v5035, %v5036
    %v5038 = vrot.slane %v5037, 2
    %v5039 = vadd.f32 %v5037, %v5038
    %v5040 = vrot.slane %v5039, 1
    %v5041 = vadd.f32 %v5039, %v5040
    %v5042 = vadd.f32 %v4808, %v4824
    %v5043 = vrot.slane %v5042, 4
    %v5044 = vadd.f32 %v5042, %v5043
    %v5045 = vrot.slane %v5044, 2
    %v5046 = vadd.f32 %v5044, %v5045
    %v5047 = vrot.slane %v5046, 1
    %v5048 = vadd.f32 %v5046, %v5047
    %v5049 = vld [vmem:[#allocation2] sm:$0x3]
    %v5050 = vpack.c.bf16 %v4831, %v4831
    %v5051 = vpack.c.bf16 %v4838, %v4838
    %v5052 = vpack.c.bf16 %v4845, %v4845
    %v5053 = vpack.c.bf16 %v4852, %v4852
    %v5054 = vpack.c.bf16 %v4859, %v4859
    %v5055 = vpack.c.bf16 %v4866, %v4866
    %v5056 = vpack.c.bf16 %v4873, %v4873
    %v5057 = vpack.c.bf16 %v4880, %v4880
    %v5058 = vpack.c.bf16 %v4887, %v4887
    %v5059 = vpack.c.bf16 %v4894, %v4894
    %v5060 = vpack.c.bf16 %v4901, %v4901
    %v5061 = vpack.c.bf16 %v4908, %v4908
    %v5062 = vpack.c.bf16 %v4915, %v4915
    %v5063 = vpack.c.bf16 %v4922, %v4922
    %v5064 = vpack.c.bf16 %v4929, %v4929
    %v5065 = vpack.c.bf16 %v4936, %v4936
    %v5066 = vpack.c.bf16 %v4943, %v4943
    %v5067 = vpack.c.bf16 %v4950, %v4950
    %v5068 = vpack.c.bf16 %v4957, %v4957
    %v5069 = vpack.c.bf16 %v4964, %v4964
    %v5070 = vpack.c.bf16 %v4971, %v4971
    %v5071 = vpack.c.bf16 %v4978, %v4978
    %v5072 = vpack.c.bf16 %v4985, %v4985
    %v5073 = vpack.c.bf16 %v4992, %v4992
    %v5074 = vpack.c.bf16 %v4999, %v4999
    %v5075 = vpack.c.bf16 %v5006, %v5006
    %v5076 = vpack.c.bf16 %v5013, %v5013
    %v5077 = vpack.c.bf16 %v5020, %v5020
    %v5078 = vpack.c.bf16 %v5027, %v5027
    %v5079 = vpack.c.bf16 %v5034, %v5034
    %v5080 = vpack.c.bf16 %v5041, %v5041
    %v5081 = vpack.c.bf16 %v5048, %v5048
    %v5082 = vld [vmem:[#allocation11] sm:$0xf]
    %v5083 = vld [vmem:[#allocation11 + $0x4] sm:$0xf]
    %v5084 = vld [vmem:[#allocation11 + $0x8] sm:$0xf]
    %v5085 = vld [vmem:[#allocation11 + $0xc] sm:$0xf]
    %v5086 = vld [vmem:[#allocation11 + $0x10] sm:$0xf]
    %v5087 = vld [vmem:[#allocation11 + $0x14] sm:$0xf]
    %v5088 = vld [vmem:[#allocation11 + $0x18] sm:$0xf]
    %v5089 = vld [vmem:[#allocation11 + $0x1c] sm:$0xf]
    %v5090 = vld [vmem:[#allocation11 + $0x20] sm:$0xf]
    %v5091 = vld [vmem:[#allocation11 + $0x24] sm:$0xf]
    %v5092 = vld [vmem:[#allocation11 + $0x28] sm:$0xf]
    %v5093 = vld [vmem:[#allocation11 + $0x2c] sm:$0xf]
    %v5094 = vld [vmem:[#allocation11 + $0x30] sm:$0xf]
    %v5095 = vld [vmem:[#allocation11 + $0x34] sm:$0xf]
    %v5096 = vld [vmem:[#allocation11 + $0x38] sm:$0xf]
    %v5097 = vld [vmem:[#allocation11 + $0x3c] sm:$0xf]
    %v5098 = vld [vmem:[#allocation11 + $0x40] sm:$0xf]
    %v5099 = vld [vmem:[#allocation11 + $0x44] sm:$0xf]
    %v5100 = vld [vmem:[#allocation11 + $0x48] sm:$0xf]
    %v5101 = vld [vmem:[#allocation11 + $0x4c] sm:$0xf]
    %v5102 = vld [vmem:[#allocation11 + $0x50] sm:$0xf]
    %v5103 = vld [vmem:[#allocation11 + $0x54] sm:$0xf]
    %v5104 = vld [vmem:[#allocation11 + $0x58] sm:$0xf]
    %v5105 = vld [vmem:[#allocation11 + $0x5c] sm:$0xf]
    %v5106 = vld [vmem:[#allocation11 + $0x60] sm:$0xf]
    %v5107 = vld [vmem:[#allocation11 + $0x64] sm:$0xf]
    %v5108 = vld [vmem:[#allocation11 + $0x68] sm:$0xf]
    %v5109 = vld [vmem:[#allocation11 + $0x6c] sm:$0xf]
    %v5110 = vld [vmem:[#allocation11 + $0x70] sm:$0xf]
    %v5111 = vld [vmem:[#allocation11 + $0x74] sm:$0xf]
    %v5112 = vld [vmem:[#allocation11 + $0x78] sm:$0xf]
    %v5113 = vld [vmem:[#allocation11 + $0x7c] sm:$0xf]
    %v5114 = vld [vmem:[#allocation11 + $0x80] sm:$0xf]
    %v5115 = vld [vmem:[#allocation11 + $0x84] sm:$0xf]
    %v5116 = vld [vmem:[#allocation11 + $0x88] sm:$0xf]
    %v5117 = vld [vmem:[#allocation11 + $0x8c] sm:$0xf]
    %v5118 = vld [vmem:[#allocation11 + $0x90] sm:$0xf]
    %v5119 = vld [vmem:[#allocation11 + $0x94] sm:$0xf]
    %v5120 = vld [vmem:[#allocation11 + $0x98] sm:$0xf]
    %v5121 = vld [vmem:[#allocation11 + $0x9c] sm:$0xf]
    %v5122 = vld [vmem:[#allocation11 + $0xa0] sm:$0xf]
    %v5123 = vld [vmem:[#allocation11 + $0xa4] sm:$0xf]
    %v5124 = vld [vmem:[#allocation11 + $0xa8] sm:$0xf]
    %v5125 = vld [vmem:[#allocation11 + $0xac] sm:$0xf]
    %v5126 = vld [vmem:[#allocation11 + $0xb0] sm:$0xf]
    %v5127 = vld [vmem:[#allocation11 + $0xb4] sm:$0xf]
    %v5128 = vld [vmem:[#allocation11 + $0xb8] sm:$0xf]
    %v5129 = vld [vmem:[#allocation11 + $0xbc] sm:$0xf]
    %v5130 = vld [vmem:[#allocation11 + $0xc0] sm:$0xf]
    %v5131 = vld [vmem:[#allocation11 + $0xc4] sm:$0xf]
    %v5132 = vld [vmem:[#allocation11 + $0xc8] sm:$0xf]
    %v5133 = vld [vmem:[#allocation11 + $0xcc] sm:$0xf]
    %v5134 = vld [vmem:[#allocation11 + $0xd0] sm:$0xf]
    %v5135 = vld [vmem:[#allocation11 + $0xd4] sm:$0xf]
    %v5136 = vld [vmem:[#allocation11 + $0xd8] sm:$0xf]
    %v5137 = vld [vmem:[#allocation11 + $0xdc] sm:$0xf]
    %v5138 = vld [vmem:[#allocation11 + $0xe0] sm:$0xf]
    %v5139 = vld [vmem:[#allocation11 + $0xe4] sm:$0xf]
    %v5140 = vld [vmem:[#allocation11 + $0xe8] sm:$0xf]
    %v5141 = vld [vmem:[#allocation11 + $0xec] sm:$0xf]
    %v5142 = vld [vmem:[#allocation11 + $0xf0] sm:$0xf]
    %v5143 = vld [vmem:[#allocation11 + $0xf4] sm:$0xf]
    %v5144 = vld [vmem:[#allocation11 + $0xf8] sm:$0xf]
    %v5145 = vld [vmem:[#allocation11 + $0xfc] sm:$0xf]
    %v5146 = vld [vmem:[#allocation11 + $0x100] sm:$0xf]
    %v5147 = vld [vmem:[#allocation11 + $0x104] sm:$0xf]
    %v5148 = vld [vmem:[#allocation11 + $0x108] sm:$0xf]
    %v5149 = vld [vmem:[#allocation11 + $0x10c] sm:$0xf]
    %v5150 = vld [vmem:[#allocation11 + $0x110] sm:$0xf]
    %v5151 = vld [vmem:[#allocation11 + $0x114] sm:$0xf]
    %v5152 = vld [vmem:[#allocation11 + $0x118] sm:$0xf]
    %v5153 = vld [vmem:[#allocation11 + $0x11c] sm:$0xf]
    %v5154 = vld [vmem:[#allocation11 + $0x120] sm:$0xf]
    %v5155 = vld [vmem:[#allocation11 + $0x124] sm:$0xf]
    %v5156 = vld [vmem:[#allocation11 + $0x128] sm:$0xf]
    %v5157 = vld [vmem:[#allocation11 + $0x12c] sm:$0xf]
    %v5158 = vld [vmem:[#allocation11 + $0x130] sm:$0xf]
    %v5159 = vld [vmem:[#allocation11 + $0x134] sm:$0xf]
    %v5160 = vld [vmem:[#allocation11 + $0x138] sm:$0xf]
    %v5161 = vld [vmem:[#allocation11 + $0x13c] sm:$0xf]
    %v5162 = vld [vmem:[#allocation11 + $0x140] sm:$0xf]
    %v5163 = vld [vmem:[#allocation11 + $0x144] sm:$0xf]
    %v5164 = vld [vmem:[#allocation11 + $0x148] sm:$0xf]
    %v5165 = vld [vmem:[#allocation11 + $0x14c] sm:$0xf]
    %v5166 = vld [vmem:[#allocation11 + $0x150] sm:$0xf]
    %v5167 = vld [vmem:[#allocation11 + $0x154] sm:$0xf]
    %v5168 = vld [vmem:[#allocation11 + $0x158] sm:$0xf]
    %v5169 = vld [vmem:[#allocation11 + $0x15c] sm:$0xf]
    %v5170 = vld [vmem:[#allocation11 + $0x160] sm:$0xf]
    %v5171 = vld [vmem:[#allocation11 + $0x164] sm:$0xf]
    %v5172 = vld [vmem:[#allocation11 + $0x168] sm:$0xf]
    %v5173 = vld [vmem:[#allocation11 + $0x16c] sm:$0xf]
    %v5174 = vld [vmem:[#allocation11 + $0x170] sm:$0xf]
    %v5175 = vld [vmem:[#allocation11 + $0x174] sm:$0xf]
    %v5176 = vld [vmem:[#allocation11 + $0x178] sm:$0xf]
    %v5177 = vld [vmem:[#allocation11 + $0x17c] sm:$0xf]
    %v5178 = vld [vmem:[#allocation11 + $0x180] sm:$0xf]
    %v5179 = vld [vmem:[#allocation11 + $0x184] sm:$0xf]
    %v5180 = vld [vmem:[#allocation11 + $0x188] sm:$0xf]
    %v5181 = vld [vmem:[#allocation11 + $0x18c] sm:$0xf]
    %v5182 = vld [vmem:[#allocation11 + $0x190] sm:$0xf]
    %v5183 = vld [vmem:[#allocation11 + $0x194] sm:$0xf]
    %v5184 = vld [vmem:[#allocation11 + $0x198] sm:$0xf]
    %v5185 = vld [vmem:[#allocation11 + $0x19c] sm:$0xf]
    %v5186 = vld [vmem:[#allocation11 + $0x1a0] sm:$0xf]
    %v5187 = vld [vmem:[#allocation11 + $0x1a4] sm:$0xf]
    %v5188 = vld [vmem:[#allocation11 + $0x1a8] sm:$0xf]
    %v5189 = vld [vmem:[#allocation11 + $0x1ac] sm:$0xf]
    %v5190 = vld [vmem:[#allocation11 + $0x1b0] sm:$0xf]
    %v5191 = vld [vmem:[#allocation11 + $0x1b4] sm:$0xf]
    %v5192 = vld [vmem:[#allocation11 + $0x1b8] sm:$0xf]
    %v5193 = vld [vmem:[#allocation11 + $0x1bc] sm:$0xf]
    %v5194 = vld [vmem:[#allocation11 + $0x1c0] sm:$0xf]
    %v5195 = vld [vmem:[#allocation11 + $0x1c4] sm:$0xf]
    %v5196 = vld [vmem:[#allocation11 + $0x1c8] sm:$0xf]
    %v5197 = vld [vmem:[#allocation11 + $0x1cc] sm:$0xf]
    %v5198 = vld [vmem:[#allocation11 + $0x1d0] sm:$0xf]
    %v5199 = vld [vmem:[#allocation11 + $0x1d4] sm:$0xf]
    %v5200 = vld [vmem:[#allocation11 + $0x1d8] sm:$0xf]
    %v5201 = vld [vmem:[#allocation11 + $0x1dc] sm:$0xf]
    %v5202 = vld [vmem:[#allocation11 + $0x1e0] sm:$0xf]
    %v5203 = vld [vmem:[#allocation11 + $0x1e4] sm:$0xf]
    %v5204 = vld [vmem:[#allocation11 + $0x1e8] sm:$0xf]
    %v5205 = vld [vmem:[#allocation11 + $0x1ec] sm:$0xf]
    %v5206 = vld [vmem:[#allocation11 + $0x1f0] sm:$0xf]
    %v5207 = vld [vmem:[#allocation11 + $0x1f4] sm:$0xf]
    %v5208 = vld [vmem:[#allocation11 + $0x1f8] sm:$0xf]
    %v5209 = vld [vmem:[#allocation11 + $0x1fc] sm:$0xf]
    %v5210 = vld [vmem:[#allocation11 + $0x200] sm:$0xf]
    %v5211 = vld [vmem:[#allocation11 + $0x204] sm:$0xf]
    %v5212 = vld [vmem:[#allocation11 + $0x208] sm:$0xf]
    %v5213 = vld [vmem:[#allocation11 + $0x20c] sm:$0xf]
    %v5214 = vld [vmem:[#allocation11 + $0x210] sm:$0xf]
    %v5215 = vld [vmem:[#allocation11 + $0x214] sm:$0xf]
    %v5216 = vld [vmem:[#allocation11 + $0x218] sm:$0xf]
    %v5217 = vld [vmem:[#allocation11 + $0x21c] sm:$0xf]
    %v5218 = vld [vmem:[#allocation11 + $0x220] sm:$0xf]
    %v5219 = vld [vmem:[#allocation11 + $0x224] sm:$0xf]
    %v5220 = vld [vmem:[#allocation11 + $0x228] sm:$0xf]
    %v5221 = vld [vmem:[#allocation11 + $0x22c] sm:$0xf]
    %v5222 = vld [vmem:[#allocation11 + $0x230] sm:$0xf]
    %v5223 = vld [vmem:[#allocation11 + $0x234] sm:$0xf]
    %v5224 = vld [vmem:[#allocation11 + $0x238] sm:$0xf]
    %v5225 = vld [vmem:[#allocation11 + $0x23c] sm:$0xf]
    %v5226 = vld [vmem:[#allocation11 + $0x240] sm:$0xf]
    %v5227 = vld [vmem:[#allocation11 + $0x244] sm:$0xf]
    %v5228 = vld [vmem:[#allocation11 + $0x248] sm:$0xf]
    %v5229 = vld [vmem:[#allocation11 + $0x24c] sm:$0xf]
    %v5230 = vld [vmem:[#allocation11 + $0x250] sm:$0xf]
    %v5231 = vld [vmem:[#allocation11 + $0x254] sm:$0xf]
    %v5232 = vld [vmem:[#allocation11 + $0x258] sm:$0xf]
    %v5233 = vld [vmem:[#allocation11 + $0x25c] sm:$0xf]
    %v5234 = vld [vmem:[#allocation11 + $0x260] sm:$0xf]
    %v5235 = vld [vmem:[#allocation11 + $0x264] sm:$0xf]
    %v5236 = vld [vmem:[#allocation11 + $0x268] sm:$0xf]
    %v5237 = vld [vmem:[#allocation11 + $0x26c] sm:$0xf]
    %v5238 = vld [vmem:[#allocation11 + $0x270] sm:$0xf]
    %v5239 = vld [vmem:[#allocation11 + $0x274] sm:$0xf]
    %v5240 = vld [vmem:[#allocation11 + $0x278] sm:$0xf]
    %v5241 = vld [vmem:[#allocation11 + $0x27c] sm:$0xf]
    %v5242 = vld [vmem:[#allocation11 + $0x280] sm:$0xf]
    %v5243 = vld [vmem:[#allocation11 + $0x284] sm:$0xf]
    %v5244 = vld [vmem:[#allocation11 + $0x288] sm:$0xf]
    %v5245 = vld [vmem:[#allocation11 + $0x28c] sm:$0xf]
    %v5246 = vld [vmem:[#allocation11 + $0x290] sm:$0xf]
    %v5247 = vld [vmem:[#allocation11 + $0x294] sm:$0xf]
    %v5248 = vld [vmem:[#allocation11 + $0x298] sm:$0xf]
    %v5249 = vld [vmem:[#allocation11 + $0x29c] sm:$0xf]
    %v5250 = vld [vmem:[#allocation11 + $0x2a0] sm:$0xf]
    %v5251 = vld [vmem:[#allocation11 + $0x2a4] sm:$0xf]
    %v5252 = vld [vmem:[#allocation11 + $0x2a8] sm:$0xf]
    %v5253 = vld [vmem:[#allocation11 + $0x2ac] sm:$0xf]
    %v5254 = vld [vmem:[#allocation11 + $0x2b0] sm:$0xf]
    %v5255 = vld [vmem:[#allocation11 + $0x2b4] sm:$0xf]
    %v5256 = vld [vmem:[#allocation11 + $0x2b8] sm:$0xf]
    %v5257 = vld [vmem:[#allocation11 + $0x2bc] sm:$0xf]
    %v5258 = vld [vmem:[#allocation11 + $0x2c0] sm:$0xf]
    %v5259 = vld [vmem:[#allocation11 + $0x2c4] sm:$0xf]
    %v5260 = vld [vmem:[#allocation11 + $0x2c8] sm:$0xf]
    %v5261 = vld [vmem:[#allocation11 + $0x2cc] sm:$0xf]
    %v5262 = vld [vmem:[#allocation11 + $0x2d0] sm:$0xf]
    %v5263 = vld [vmem:[#allocation11 + $0x2d4] sm:$0xf]
    %v5264 = vld [vmem:[#allocation11 + $0x2d8] sm:$0xf]
    %v5265 = vld [vmem:[#allocation11 + $0x2dc] sm:$0xf]
    %v5266 = vld [vmem:[#allocation11 + $0x2e0] sm:$0xf]
    %v5267 = vld [vmem:[#allocation11 + $0x2e4] sm:$0xf]
    %v5268 = vld [vmem:[#allocation11 + $0x2e8] sm:$0xf]
    %v5269 = vld [vmem:[#allocation11 + $0x2ec] sm:$0xf]
    %v5270 = vld [vmem:[#allocation11 + $0x2f0] sm:$0xf]
    %v5271 = vld [vmem:[#allocation11 + $0x2f4] sm:$0xf]
    %v5272 = vld [vmem:[#allocation11 + $0x2f8] sm:$0xf]
    %v5273 = vld [vmem:[#allocation11 + $0x2fc] sm:$0xf]
    %v5274 = vld [vmem:[#allocation11 + $0x300] sm:$0xf]
    %v5275 = vld [vmem:[#allocation11 + $0x304] sm:$0xf]
    %v5276 = vld [vmem:[#allocation11 + $0x308] sm:$0xf]
    %v5277 = vld [vmem:[#allocation11 + $0x30c] sm:$0xf]
    %v5278 = vld [vmem:[#allocation11 + $0x310] sm:$0xf]
    %v5279 = vld [vmem:[#allocation11 + $0x314] sm:$0xf]
    %v5280 = vld [vmem:[#allocation11 + $0x318] sm:$0xf]
    %v5281 = vld [vmem:[#allocation11 + $0x31c] sm:$0xf]
    %v5282 = vld [vmem:[#allocation11 + $0x320] sm:$0xf]
    %v5283 = vld [vmem:[#allocation11 + $0x324] sm:$0xf]
    %v5284 = vld [vmem:[#allocation11 + $0x328] sm:$0xf]
    %v5285 = vld [vmem:[#allocation11 + $0x32c] sm:$0xf]
    %v5286 = vld [vmem:[#allocation11 + $0x330] sm:$0xf]
    %v5287 = vld [vmem:[#allocation11 + $0x334] sm:$0xf]
    %v5288 = vld [vmem:[#allocation11 + $0x338] sm:$0xf]
    %v5289 = vld [vmem:[#allocation11 + $0x33c] sm:$0xf]
    %v5290 = vld [vmem:[#allocation11 + $0x340] sm:$0xf]
    %v5291 = vld [vmem:[#allocation11 + $0x344] sm:$0xf]
    %v5292 = vld [vmem:[#allocation11 + $0x348] sm:$0xf]
    %v5293 = vld [vmem:[#allocation11 + $0x34c] sm:$0xf]
    %v5294 = vld [vmem:[#allocation11 + $0x350] sm:$0xf]
    %v5295 = vld [vmem:[#allocation11 + $0x354] sm:$0xf]
    %v5296 = vld [vmem:[#allocation11 + $0x358] sm:$0xf]
    %v5297 = vld [vmem:[#allocation11 + $0x35c] sm:$0xf]
    %v5298 = vld [vmem:[#allocation11 + $0x360] sm:$0xf]
    %v5299 = vld [vmem:[#allocation11 + $0x364] sm:$0xf]
    %v5300 = vld [vmem:[#allocation11 + $0x368] sm:$0xf]
    %v5301 = vld [vmem:[#allocation11 + $0x36c] sm:$0xf]
    %v5302 = vld [vmem:[#allocation11 + $0x370] sm:$0xf]
    %v5303 = vld [vmem:[#allocation11 + $0x374] sm:$0xf]
    %v5304 = vld [vmem:[#allocation11 + $0x378] sm:$0xf]
    %v5305 = vld [vmem:[#allocation11 + $0x37c] sm:$0xf]
    %v5306 = vld [vmem:[#allocation11 + $0x380] sm:$0xf]
    %v5307 = vld [vmem:[#allocation11 + $0x384] sm:$0xf]
    %v5308 = vld [vmem:[#allocation11 + $0x388] sm:$0xf]
    %v5309 = vld [vmem:[#allocation11 + $0x38c] sm:$0xf]
    %v5310 = vld [vmem:[#allocation11 + $0x390] sm:$0xf]
    %v5311 = vld [vmem:[#allocation11 + $0x394] sm:$0xf]
    %v5312 = vld [vmem:[#allocation11 + $0x398] sm:$0xf]
    %v5313 = vld [vmem:[#allocation11 + $0x39c] sm:$0xf]
    %v5314 = vld [vmem:[#allocation11 + $0x3a0] sm:$0xf]
    %v5315 = vld [vmem:[#allocation11 + $0x3a4] sm:$0xf]
    %v5316 = vld [vmem:[#allocation11 + $0x3a8] sm:$0xf]
    %v5317 = vld [vmem:[#allocation11 + $0x3ac] sm:$0xf]
    %v5318 = vld [vmem:[#allocation11 + $0x3b0] sm:$0xf]
    %v5319 = vld [vmem:[#allocation11 + $0x3b4] sm:$0xf]
    %v5320 = vld [vmem:[#allocation11 + $0x3b8] sm:$0xf]
    %v5321 = vld [vmem:[#allocation11 + $0x3bc] sm:$0xf]
    %v5322 = vld [vmem:[#allocation11 + $0x3c0] sm:$0xf]
    %v5323 = vld [vmem:[#allocation11 + $0x3c4] sm:$0xf]
    %v5324 = vld [vmem:[#allocation11 + $0x3c8] sm:$0xf]
    %v5325 = vld [vmem:[#allocation11 + $0x3cc] sm:$0xf]
    %v5326 = vld [vmem:[#allocation11 + $0x3d0] sm:$0xf]
    %v5327 = vld [vmem:[#allocation11 + $0x3d4] sm:$0xf]
    %v5328 = vld [vmem:[#allocation11 + $0x3d8] sm:$0xf]
    %v5329 = vld [vmem:[#allocation11 + $0x3dc] sm:$0xf]
    %v5330 = vld [vmem:[#allocation11 + $0x3e0] sm:$0xf]
    %v5331 = vld [vmem:[#allocation11 + $0x3e4] sm:$0xf]
    %v5332 = vld [vmem:[#allocation11 + $0x3e8] sm:$0xf]
    %v5333 = vld [vmem:[#allocation11 + $0x3ec] sm:$0xf]
    %v5334 = vld [vmem:[#allocation11 + $0x3f0] sm:$0xf]
    %v5335 = vld [vmem:[#allocation11 + $0x3f4] sm:$0xf]
    %v5336 = vld [vmem:[#allocation11 + $0x3f8] sm:$0xf]
    %v5337 = vld [vmem:[#allocation11 + $0x3fc] sm:$0xf]
    %v5370 = vunpack.c.l.b16 %v5050
    %v5371 = vunpack.c.l.b16 %v5051
    %v5372 = vunpack.c.l.b16 %v5052
    %v5373 = vunpack.c.l.b16 %v5053
    %v5374 = vunpack.c.l.b16 %v5054
    %v5375 = vunpack.c.l.b16 %v5055
    %v5376 = vunpack.c.l.b16 %v5056
    %v5377 = vunpack.c.l.b16 %v5057
    %v5378 = vunpack.c.l.b16 %v5058
    %v5379 = vunpack.c.l.b16 %v5059
    %v5380 = vunpack.c.l.b16 %v5060
    %v5381 = vunpack.c.l.b16 %v5061
    %v5382 = vunpack.c.l.b16 %v5062
    %v5383 = vunpack.c.l.b16 %v5063
    %v5384 = vunpack.c.l.b16 %v5064
    %v5385 = vunpack.c.l.b16 %v5065
    %v5386 = vunpack.c.l.b16 %v5066
    %v5387 = vunpack.c.l.b16 %v5067
    %v5388 = vunpack.c.l.b16 %v5068
    %v5389 = vunpack.c.l.b16 %v5069
    %v5390 = vunpack.c.l.b16 %v5070
    %v5391 = vunpack.c.l.b16 %v5071
    %v5392 = vunpack.c.l.b16 %v5072
    %v5393 = vunpack.c.l.b16 %v5073
    %v5394 = vunpack.c.l.b16 %v5074
    %v5395 = vunpack.c.l.b16 %v5075
    %v5396 = vunpack.c.l.b16 %v5076
    %v5397 = vunpack.c.l.b16 %v5077
    %v5398 = vunpack.c.l.b16 %v5078
    %v5399 = vunpack.c.l.b16 %v5079
    %v5400 = vunpack.c.l.b16 %v5080
    %v5401 = vunpack.c.l.b16 %v5081
    %vm5402 = vcmask 1041409
    %v5403 = vsel %vm5402, %v5386, %v5370
    %v5404 = vsel %vm5402, %v5387, %v5371
    %v5405 = vsel %vm5402, %v5388, %v5372
    %v5406 = vsel %vm5402, %v5389, %v5373
    %v5407 = vsel %vm5402, %v5390, %v5374
    %v5408 = vsel %vm5402, %v5391, %v5375
    %v5409 = vsel %vm5402, %v5392, %v5376
    %v5410 = vsel %vm5402, %v5393, %v5377
    %v5411 = vsel %vm5402, %v5394, %v5378
    %v5412 = vsel %vm5402, %v5395, %v5379
    %v5413 = vsel %vm5402, %v5396, %v5380
    %v5414 = vsel %vm5402, %v5397, %v5381
    %v5415 = vsel %vm5402, %v5398, %v5382
    %v5416 = vsel %vm5402, %v5399, %v5383
    %v5417 = vsel %vm5402, %v5400, %v5384
    %v5418 = vsel %vm5402, %v5401, %v5385
    %v5419 = vpack.c.b16 %v5403, %v5403
    %v5420 = vpack.c.b16 %v5404, %v5404
    %v5421 = vpack.c.b16 %v5405, %v5405
    %v5422 = vpack.c.b16 %v5406, %v5406
    %v5423 = vpack.c.b16 %v5407, %v5407
    %v5424 = vpack.c.b16 %v5408, %v5408
    %v5425 = vpack.c.b16 %v5409, %v5409
    %v5426 = vpack.c.b16 %v5410, %v5410
    %v5427 = vpack.c.b16 %v5411, %v5411
    %v5428 = vpack.c.b16 %v5412, %v5412
    %v5429 = vpack.c.b16 %v5413, %v5413
    %v5430 = vpack.c.b16 %v5414, %v5414
    %v5431 = vpack.c.b16 %v5415, %v5415
    %v5432 = vpack.c.b16 %v5416, %v5416
    %v5433 = vpack.c.b16 %v5417, %v5417
    %v5434 = vpack.c.b16 %v5418, %v5418
    %v5707 = vunpack.c.l.b16 %v5082
    %v5708 = vunpack.c.l.b16 %v5083
    %v5709 = vunpack.c.l.b16 %v5084
    %v5710 = vunpack.c.l.b16 %v5085
    %v5711 = vunpack.c.l.b16 %v5086
    %v5712 = vunpack.c.l.b16 %v5087
    %v5713 = vunpack.c.l.b16 %v5088
    %v5714 = vunpack.c.l.b16 %v5089
    %v5715 = vunpack.c.l.b16 %v5090
    %v5716 = vunpack.c.l.b16 %v5091
    %v5717 = vunpack.c.l.b16 %v5092
    %v5718 = vunpack.c.l.b16 %v5093
    %v5719 = vunpack.c.l.b16 %v5094
    %v5720 = vunpack.c.l.b16 %v5095
    %v5721 = vunpack.c.l.b16 %v5096
    %v5722 = vunpack.c.l.b16 %v5097
    %v5723 = vunpack.c.l.b16 %v5098
    %v5724 = vunpack.c.l.b16 %v5099
    %v5725 = vunpack.c.l.b16 %v5100
    %v5726 = vunpack.c.l.b16 %v5101
    %v5727 = vunpack.c.l.b16 %v5102
    %v5728 = vunpack.c.l.b16 %v5103
    %v5729 = vunpack.c.l.b16 %v5104
    %v5730 = vunpack.c.l.b16 %v5105
    %v5731 = vunpack.c.l.b16 %v5106
    %v5732 = vunpack.c.l.b16 %v5107
    %v5733 = vunpack.c.l.b16 %v5108
    %v5734 = vunpack.c.l.b16 %v5109
    %v5735 = vunpack.c.l.b16 %v5110
    %v5736 = vunpack.c.l.b16 %v5111
    %v5737 = vunpack.c.l.b16 %v5112
    %v5738 = vunpack.c.l.b16 %v5113
    %v5739 = vunpack.c.l.b16 %v5114
    %v5740 = vunpack.c.l.b16 %v5115
    %v5741 = vunpack.c.l.b16 %v5116
    %v5742 = vunpack.c.l.b16 %v5117
    %v5743 = vunpack.c.l.b16 %v5118
    %v5744 = vunpack.c.l.b16 %v5119
    %v5745 = vunpack.c.l.b16 %v5120
    %v5746 = vunpack.c.l.b16 %v5121
    %v5747 = vunpack.c.l.b16 %v5122
    %v5748 = vunpack.c.l.b16 %v5123
    %v5749 = vunpack.c.l.b16 %v5124
    %v5750 = vunpack.c.l.b16 %v5125
    %v5751 = vunpack.c.l.b16 %v5126
    %v5752 = vunpack.c.l.b16 %v5127
    %v5753 = vunpack.c.l.b16 %v5128
    %v5754 = vunpack.c.l.b16 %v5129
    %v5755 = vunpack.c.l.b16 %v5130
    %v5756 = vunpack.c.l.b16 %v5131
    %v5757 = vunpack.c.l.b16 %v5132
    %v5758 = vunpack.c.l.b16 %v5133
    %v5759 = vunpack.c.l.b16 %v5134
    %v5760 = vunpack.c.l.b16 %v5135
    %v5761 = vunpack.c.l.b16 %v5136
    %v5762 = vunpack.c.l.b16 %v5137
    %v5763 = vunpack.c.l.b16 %v5138
    %v5764 = vunpack.c.l.b16 %v5139
    %v5765 = vunpack.c.l.b16 %v5140
    %v5766 = vunpack.c.l.b16 %v5141
    %v5767 = vunpack.c.l.b16 %v5142
    %v5768 = vunpack.c.l.b16 %v5143
    %v5769 = vunpack.c.l.b16 %v5144
    %v5770 = vunpack.c.l.b16 %v5145
    %v5771 = vunpack.c.l.b16 %v5146
    %v5772 = vunpack.c.l.b16 %v5147
    %v5773 = vunpack.c.l.b16 %v5148
    %v5774 = vunpack.c.l.b16 %v5149
    %v5775 = vunpack.c.l.b16 %v5150
    %v5776 = vunpack.c.l.b16 %v5151
    %v5777 = vunpack.c.l.b16 %v5152
    %v5778 = vunpack.c.l.b16 %v5153
    %v5779 = vunpack.c.l.b16 %v5154
    %v5780 = vunpack.c.l.b16 %v5155
    %v5781 = vunpack.c.l.b16 %v5156
    %v5782 = vunpack.c.l.b16 %v5157
    %v5783 = vunpack.c.l.b16 %v5158
    %v5784 = vunpack.c.l.b16 %v5159
    %v5785 = vunpack.c.l.b16 %v5160
    %v5786 = vunpack.c.l.b16 %v5161
    %v5787 = vunpack.c.l.b16 %v5162
    %v5788 = vunpack.c.l.b16 %v5163
    %v5789 = vunpack.c.l.b16 %v5164
    %v5790 = vunpack.c.l.b16 %v5165
    %v5791 = vunpack.c.l.b16 %v5166
    %v5792 = vunpack.c.l.b16 %v5167
    %v5793 = vunpack.c.l.b16 %v5168
    %v5794 = vunpack.c.l.b16 %v5169
    %v5795 = vunpack.c.l.b16 %v5170
    %v5796 = vunpack.c.l.b16 %v5171
    %v5797 = vunpack.c.l.b16 %v5172
    %v5798 = vunpack.c.l.b16 %v5173
    %v5799 = vunpack.c.l.b16 %v5174
    %v5800 = vunpack.c.l.b16 %v5175
    %v5801 = vunpack.c.l.b16 %v5176
    %v5802 = vunpack.c.l.b16 %v5177
    %v5803 = vunpack.c.l.b16 %v5178
    %v5804 = vunpack.c.l.b16 %v5179
    %v5805 = vunpack.c.l.b16 %v5180
    %v5806 = vunpack.c.l.b16 %v5181
    %v5807 = vunpack.c.l.b16 %v5182
    %v5808 = vunpack.c.l.b16 %v5183
    %v5809 = vunpack.c.l.b16 %v5184
    %v5810 = vunpack.c.l.b16 %v5185
    %v5811 = vunpack.c.l.b16 %v5186
    %v5812 = vunpack.c.l.b16 %v5187
    %v5813 = vunpack.c.l.b16 %v5188
    %v5814 = vunpack.c.l.b16 %v5189
    %v5815 = vunpack.c.l.b16 %v5190
    %v5816 = vunpack.c.l.b16 %v5191
    %v5817 = vunpack.c.l.b16 %v5192
    %v5818 = vunpack.c.l.b16 %v5193
    %v5819 = vunpack.c.l.b16 %v5194
    %v5820 = vunpack.c.l.b16 %v5195
    %v5821 = vunpack.c.l.b16 %v5196
    %v5822 = vunpack.c.l.b16 %v5197
    %v5823 = vunpack.c.l.b16 %v5198
    %v5824 = vunpack.c.l.b16 %v5199
    %v5825 = vunpack.c.l.b16 %v5200
    %v5826 = vunpack.c.l.b16 %v5201
    %v5827 = vunpack.c.l.b16 %v5202
    %v5828 = vunpack.c.l.b16 %v5203
    %v5829 = vunpack.c.l.b16 %v5204
    %v5830 = vunpack.c.l.b16 %v5205
    %v5831 = vunpack.c.l.b16 %v5206
    %v5832 = vunpack.c.l.b16 %v5207
    %v5833 = vunpack.c.l.b16 %v5208
    %v5834 = vunpack.c.l.b16 %v5209
    %v5835 = vunpack.c.l.b16 %v5210
    %v5836 = vunpack.c.l.b16 %v5211
    %v5837 = vunpack.c.l.b16 %v5212
    %v5838 = vunpack.c.l.b16 %v5213
    %v5839 = vunpack.c.l.b16 %v5214
    %v5840 = vunpack.c.l.b16 %v5215
    %v5841 = vunpack.c.l.b16 %v5216
    %v5842 = vunpack.c.l.b16 %v5217
    %v5843 = vunpack.c.l.b16 %v5218
    %v5844 = vunpack.c.l.b16 %v5219
    %v5845 = vunpack.c.l.b16 %v5220
    %v5846 = vunpack.c.l.b16 %v5221
    %v5847 = vunpack.c.l.b16 %v5222
    %v5848 = vunpack.c.l.b16 %v5223
    %v5849 = vunpack.c.l.b16 %v5224
    %v5850 = vunpack.c.l.b16 %v5225
    %v5851 = vunpack.c.l.b16 %v5226
    %v5852 = vunpack.c.l.b16 %v5227
    %v5853 = vunpack.c.l.b16 %v5228
    %v5854 = vunpack.c.l.b16 %v5229
    %v5855 = vunpack.c.l.b16 %v5230
    %v5856 = vunpack.c.l.b16 %v5231
    %v5857 = vunpack.c.l.b16 %v5232
    %v5858 = vunpack.c.l.b16 %v5233
    %v5859 = vunpack.c.l.b16 %v5234
    %v5860 = vunpack.c.l.b16 %v5235
    %v5861 = vunpack.c.l.b16 %v5236
    %v5862 = vunpack.c.l.b16 %v5237
    %v5863 = vunpack.c.l.b16 %v5238
    %v5864 = vunpack.c.l.b16 %v5239
    %v5865 = vunpack.c.l.b16 %v5240
    %v5866 = vunpack.c.l.b16 %v5241
    %v5867 = vunpack.c.l.b16 %v5242
    %v5868 = vunpack.c.l.b16 %v5243
    %v5869 = vunpack.c.l.b16 %v5244
    %v5870 = vunpack.c.l.b16 %v5245
    %v5871 = vunpack.c.l.b16 %v5246
    %v5872 = vunpack.c.l.b16 %v5247
    %v5873 = vunpack.c.l.b16 %v5248
    %v5874 = vunpack.c.l.b16 %v5249
    %v5875 = vunpack.c.l.b16 %v5250
    %v5876 = vunpack.c.l.b16 %v5251
    %v5877 = vunpack.c.l.b16 %v5252
    %v5878 = vunpack.c.l.b16 %v5253
    %v5879 = vunpack.c.l.b16 %v5254
    %v5880 = vunpack.c.l.b16 %v5255
    %v5881 = vunpack.c.l.b16 %v5256
    %v5882 = vunpack.c.l.b16 %v5257
    %v5883 = vunpack.c.l.b16 %v5258
    %v5884 = vunpack.c.l.b16 %v5259
    %v5885 = vunpack.c.l.b16 %v5260
    %v5886 = vunpack.c.l.b16 %v5261
    %v5887 = vunpack.c.l.b16 %v5262
    %v5888 = vunpack.c.l.b16 %v5263
    %v5889 = vunpack.c.l.b16 %v5264
    %v5890 = vunpack.c.l.b16 %v5265
    %v5891 = vunpack.c.l.b16 %v5266
    %v5892 = vunpack.c.l.b16 %v5267
    %v5893 = vunpack.c.l.b16 %v5268
    %v5894 = vunpack.c.l.b16 %v5269
    %v5895 = vunpack.c.l.b16 %v5270
    %v5896 = vunpack.c.l.b16 %v5271
    %v5897 = vunpack.c.l.b16 %v5272
    %v5898 = vunpack.c.l.b16 %v5273
    %v5899 = vunpack.c.l.b16 %v5274
    %v5900 = vunpack.c.l.b16 %v5275
    %v5901 = vunpack.c.l.b16 %v5276
    %v5902 = vunpack.c.l.b16 %v5277
    %v5903 = vunpack.c.l.b16 %v5278
    %v5904 = vunpack.c.l.b16 %v5279
    %v5905 = vunpack.c.l.b16 %v5280
    %v5906 = vunpack.c.l.b16 %v5281
    %v5907 = vunpack.c.l.b16 %v5282
    %v5908 = vunpack.c.l.b16 %v5283
    %v5909 = vunpack.c.l.b16 %v5284
    %v5910 = vunpack.c.l.b16 %v5285
    %v5911 = vunpack.c.l.b16 %v5286
    %v5912 = vunpack.c.l.b16 %v5287
    %v5913 = vunpack.c.l.b16 %v5288
    %v5914 = vunpack.c.l.b16 %v5289
    %v5915 = vunpack.c.l.b16 %v5290
    %v5916 = vunpack.c.l.b16 %v5291
    %v5917 = vunpack.c.l.b16 %v5292
    %v5918 = vunpack.c.l.b16 %v5293
    %v5919 = vunpack.c.l.b16 %v5294
    %v5920 = vunpack.c.l.b16 %v5295
    %v5921 = vunpack.c.l.b16 %v5296
    %v5922 = vunpack.c.l.b16 %v5297
    %v5923 = vunpack.c.l.b16 %v5298
    %v5924 = vunpack.c.l.b16 %v5299
    %v5925 = vunpack.c.l.b16 %v5300
    %v5926 = vunpack.c.l.b16 %v5301
    %v5927 = vunpack.c.l.b16 %v5302
    %v5928 = vunpack.c.l.b16 %v5303
    %v5929 = vunpack.c.l.b16 %v5304
    %v5930 = vunpack.c.l.b16 %v5305
    %v5931 = vunpack.c.l.b16 %v5306
    %v5932 = vunpack.c.l.b16 %v5307
    %v5933 = vunpack.c.l.b16 %v5308
    %v5934 = vunpack.c.l.b16 %v5309
    %v5935 = vunpack.c.l.b16 %v5310
    %v5936 = vunpack.c.l.b16 %v5311
    %v5937 = vunpack.c.l.b16 %v5312
    %v5938 = vunpack.c.l.b16 %v5313
    %v5939 = vunpack.c.l.b16 %v5314
    %v5940 = vunpack.c.l.b16 %v5315
    %v5941 = vunpack.c.l.b16 %v5316
    %v5942 = vunpack.c.l.b16 %v5317
    %v5943 = vunpack.c.l.b16 %v5318
    %v5944 = vunpack.c.l.b16 %v5319
    %v5945 = vunpack.c.l.b16 %v5320
    %v5946 = vunpack.c.l.b16 %v5321
    %v5947 = vunpack.c.l.b16 %v5322
    %v5948 = vunpack.c.l.b16 %v5323
    %v5949 = vunpack.c.l.b16 %v5324
    %v5950 = vunpack.c.l.b16 %v5325
    %v5951 = vunpack.c.l.b16 %v5326
    %v5952 = vunpack.c.l.b16 %v5327
    %v5953 = vunpack.c.l.b16 %v5328
    %v5954 = vunpack.c.l.b16 %v5329
    %v5955 = vunpack.c.l.b16 %v5330
    %v5956 = vunpack.c.l.b16 %v5331
    %v5957 = vunpack.c.l.b16 %v5332
    %v5958 = vunpack.c.l.b16 %v5333
    %v5959 = vunpack.c.l.b16 %v5334
    %v5960 = vunpack.c.l.b16 %v5335
    %v5961 = vunpack.c.l.b16 %v5336
    %v5962 = vunpack.c.l.b16 %v5337
    %v5963 = vpack.c.b16 %v5708, %v5707
    %v5964 = vpack.c.b16 %v5710, %v5709
    %v5965 = vpack.c.b16 %v5712, %v5711
    %v5966 = vpack.c.b16 %v5714, %v5713
    %v5967 = vpack.c.b16 %v5716, %v5715
    %v5968 = vpack.c.b16 %v5718, %v5717
    %v5969 = vpack.c.b16 %v5720, %v5719
    %v5970 = vpack.c.b16 %v5722, %v5721
    %v5971 = vpack.c.b16 %v5724, %v5723
    %v5972 = vpack.c.b16 %v5726, %v5725
    %v5973 = vpack.c.b16 %v5728, %v5727
    %v5974 = vpack.c.b16 %v5730, %v5729
    %v5975 = vpack.c.b16 %v5732, %v5731
    %v5976 = vpack.c.b16 %v5734, %v5733
    %v5977 = vpack.c.b16 %v5736, %v5735
    %v5978 = vpack.c.b16 %v5738, %v5737
    %v5979 = vpack.c.b16 %v5740, %v5739
    %v5980 = vpack.c.b16 %v5742, %v5741
    %v5981 = vpack.c.b16 %v5744, %v5743
    %v5982 = vpack.c.b16 %v5746, %v5745
    %v5983 = vpack.c.b16 %v5748, %v5747
    %v5984 = vpack.c.b16 %v5750, %v5749
    %v5985 = vpack.c.b16 %v5752, %v5751
    %v5986 = vpack.c.b16 %v5754, %v5753
    %v5987 = vpack.c.b16 %v5756, %v5755
    %v5988 = vpack.c.b16 %v5758, %v5757
    %v5989 = vpack.c.b16 %v5760, %v5759
    %v5990 = vpack.c.b16 %v5762, %v5761
    %v5991 = vpack.c.b16 %v5764, %v5763
    %v5992 = vpack.c.b16 %v5766, %v5765
    %v5993 = vpack.c.b16 %v5768, %v5767
    %v5994 = vpack.c.b16 %v5770, %v5769
    %v5995 = vpack.c.b16 %v5772, %v5771
    %v5996 = vpack.c.b16 %v5774, %v5773
    %v5997 = vpack.c.b16 %v5776, %v5775
    %v5998 = vpack.c.b16 %v5778, %v5777
    %v5999 = vpack.c.b16 %v5780, %v5779
    %v6000 = vpack.c.b16 %v5782, %v5781
    %v6001 = vpack.c.b16 %v5784, %v5783
    %v6002 = vpack.c.b16 %v5786, %v5785
    %v6003 = vpack.c.b16 %v5788, %v5787
    %v6004 = vpack.c.b16 %v5790, %v5789
    %v6005 = vpack.c.b16 %v5792, %v5791
    %v6006 = vpack.c.b16 %v5794, %v5793
    %v6007 = vpack.c.b16 %v5796, %v5795
    %v6008 = vpack.c.b16 %v5798, %v5797
    %v6009 = vpack.c.b16 %v5800, %v5799
    %v6010 = vpack.c.b16 %v5802, %v5801
    %v6011 = vpack.c.b16 %v5804, %v5803
    %v6012 = vpack.c.b16 %v5806, %v5805
    %v6013 = vpack.c.b16 %v5808, %v5807
    %v6014 = vpack.c.b16 %v5810, %v5809
    %v6015 = vpack.c.b16 %v5812, %v5811
    %v6016 = vpack.c.b16 %v5814, %v5813
    %v6017 = vpack.c.b16 %v5816, %v5815
    %v6018 = vpack.c.b16 %v5818, %v5817
    %v6019 = vpack.c.b16 %v5820, %v5819
    %v6020 = vpack.c.b16 %v5822, %v5821
    %v6021 = vpack.c.b16 %v5824, %v5823
    %v6022 = vpack.c.b16 %v5826, %v5825
    %v6023 = vpack.c.b16 %v5828, %v5827
    %v6024 = vpack.c.b16 %v5830, %v5829
    %v6025 = vpack.c.b16 %v5832, %v5831
    %v6026 = vpack.c.b16 %v5834, %v5833
    %v6027 = vpack.c.b16 %v5836, %v5835
    %v6028 = vpack.c.b16 %v5838, %v5837
    %v6029 = vpack.c.b16 %v5840, %v5839
    %v6030 = vpack.c.b16 %v5842, %v5841
    %v6031 = vpack.c.b16 %v5844, %v5843
    %v6032 = vpack.c.b16 %v5846, %v5845
    %v6033 = vpack.c.b16 %v5848, %v5847
    %v6034 = vpack.c.b16 %v5850, %v5849
    %v6035 = vpack.c.b16 %v5852, %v5851
    %v6036 = vpack.c.b16 %v5854, %v5853
    %v6037 = vpack.c.b16 %v5856, %v5855
    %v6038 = vpack.c.b16 %v5858, %v5857
    %v6039 = vpack.c.b16 %v5860, %v5859
    %v6040 = vpack.c.b16 %v5862, %v5861
    %v6041 = vpack.c.b16 %v5864, %v5863
    %v6042 = vpack.c.b16 %v5866, %v5865
    %v6043 = vpack.c.b16 %v5868, %v5867
    %v6044 = vpack.c.b16 %v5870, %v5869
    %v6045 = vpack.c.b16 %v5872, %v5871
    %v6046 = vpack.c.b16 %v5874, %v5873
    %v6047 = vpack.c.b16 %v5876, %v5875
    %v6048 = vpack.c.b16 %v5878, %v5877
    %v6049 = vpack.c.b16 %v5880, %v5879
    %v6050 = vpack.c.b16 %v5882, %v5881
    %v6051 = vpack.c.b16 %v5884, %v5883
    %v6052 = vpack.c.b16 %v5886, %v5885
    %v6053 = vpack.c.b16 %v5888, %v5887
    %v6054 = vpack.c.b16 %v5890, %v5889
    %v6055 = vpack.c.b16 %v5892, %v5891
    %v6056 = vpack.c.b16 %v5894, %v5893
    %v6057 = vpack.c.b16 %v5896, %v5895
    %v6058 = vpack.c.b16 %v5898, %v5897
    %v6059 = vpack.c.b16 %v5900, %v5899
    %v6060 = vpack.c.b16 %v5902, %v5901
    %v6061 = vpack.c.b16 %v5904, %v5903
    %v6062 = vpack.c.b16 %v5906, %v5905
    %v6063 = vpack.c.b16 %v5908, %v5907
    %v6064 = vpack.c.b16 %v5910, %v5909
    %v6065 = vpack.c.b16 %v5912, %v5911
    %v6066 = vpack.c.b16 %v5914, %v5913
    %v6067 = vpack.c.b16 %v5916, %v5915
    %v6068 = vpack.c.b16 %v5918, %v5917
    %v6069 = vpack.c.b16 %v5920, %v5919
    %v6070 = vpack.c.b16 %v5922, %v5921
    %v6071 = vpack.c.b16 %v5924, %v5923
    %v6072 = vpack.c.b16 %v5926, %v5925
    %v6073 = vpack.c.b16 %v5928, %v5927
    %v6074 = vpack.c.b16 %v5930, %v5929
    %v6075 = vpack.c.b16 %v5932, %v5931
    %v6076 = vpack.c.b16 %v5934, %v5933
    %v6077 = vpack.c.b16 %v5936, %v5935
    %v6078 = vpack.c.b16 %v5938, %v5937
    %v6079 = vpack.c.b16 %v5940, %v5939
    %v6080 = vpack.c.b16 %v5942, %v5941
    %v6081 = vpack.c.b16 %v5944, %v5943
    %v6082 = vpack.c.b16 %v5946, %v5945
    %v6083 = vpack.c.b16 %v5948, %v5947
    %v6084 = vpack.c.b16 %v5950, %v5949
    %v6085 = vpack.c.b16 %v5952, %v5951
    %v6086 = vpack.c.b16 %v5954, %v5953
    %v6087 = vpack.c.b16 %v5956, %v5955
    %v6088 = vpack.c.b16 %v5958, %v5957
    %v6089 = vpack.c.b16 %v5960, %v5959
    %v6090 = vpack.c.b16 %v5962, %v5961
    %6219 = vmatprep.subr.bf16.mxu0 0
    %6220 = vmatpush1.bf16.msra.mxu0 %v5963
    %6221 = vmatprep.subr.bf16.mxu0 0
    %6222 = vmatpush1.bf16.msra.mxu0 %v5964
    %6223 = vmatprep.subr.bf16.mxu0 0
    %6224 = vmatpush1.bf16.msra.mxu0 %v5965
    %6225 = vmatprep.subr.bf16.mxu0 0
    %6226 = vmatpush1.bf16.msra.mxu0 %v5966
    %6227 = vmatprep.subr.bf16.mxu0 0
    %6228 = vmatpush1.bf16.msra.mxu0 %v5967
    %6229 = vmatprep.subr.bf16.mxu0 0
    %6230 = vmatpush1.bf16.msra.mxu0 %v5968
    %6231 = vmatprep.subr.bf16.mxu0 0
    %6232 = vmatpush1.bf16.msra.mxu0 %v5969
    %6233 = vmatprep.subr.bf16.mxu0 0
    %6234 = vmatpush1.bf16.msra.mxu0 %v5970
    %6235 = vmatprep.subr.bf16.mxu0 0
    %6236 = vmatpush1.bf16.msra.mxu0 %v5971
    %6237 = vmatprep.subr.bf16.mxu0 0
    %6238 = vmatpush1.bf16.msra.mxu0 %v5972
    %6239 = vmatprep.subr.bf16.mxu0 0
    %6240 = vmatpush1.bf16.msra.mxu0 %v5973
    %6241 = vmatprep.subr.bf16.mxu0 0
    %6242 = vmatpush1.bf16.msra.mxu0 %v5974
    %6243 = vmatprep.subr.bf16.mxu0 0
    %6244 = vmatpush1.bf16.msra.mxu0 %v5975
    %6245 = vmatprep.subr.bf16.mxu0 0
    %6246 = vmatpush1.bf16.msra.mxu0 %v5976
    %6247 = vmatprep.subr.bf16.mxu0 0
    %6248 = vmatpush1.bf16.msra.mxu0 %v5977
    %6249 = vmatprep.subr.bf16.mxu0 0
    %6250 = vmatpush1.bf16.msra.mxu0 %v5978
    %6251 = vmatprep.mubr.bf16.mxu0 %v5420
    %6252 = vmatmul.mubr.bf16.gmra.mrb[0].mxu0 %v5419
    %v6253 = vpop.f32.mrb[0].mxu0
    %v6254 = vadd.f32 0.0, %v6253
    %v6255 = vpop.f32.mrb[0].mxu0
    %v6256 = vpop.f32.mrb[0].mxu0
    %v6257 = vpop.f32.mrb[0].mxu0
    %6258 = vdwg.mxu0
    %6259 = vmatprep.subr.bf16.mxu0 0
    %6260 = vmatpush1.bf16.msra.mxu0 %v5979
    %6261 = vmatprep.subr.bf16.mxu0 0
    %6262 = vmatpush1.bf16.msra.mxu0 %v5980
    %6263 = vmatprep.subr.bf16.mxu0 0
    %6264 = vmatpush1.bf16.msra.mxu0 %v5981
    %6265 = vmatprep.subr.bf16.mxu0 0
    %6266 = vmatpush1.bf16.msra.mxu0 %v5982
    %6267 = vmatprep.subr.bf16.mxu0 0
    %6268 = vmatpush1.bf16.msra.mxu0 %v5983
    %6269 = vmatprep.subr.bf16.mxu0 0
    %6270 = vmatpush1.bf16.msra.mxu0 %v5984
    %6271 = vmatprep.subr.bf16.mxu0 0
    %6272 = vmatpush1.bf16.msra.mxu0 %v5985
    %6273 = vmatprep.subr.bf16.mxu0 0
    %6274 = vmatpush1.bf16.msra.mxu0 %v5986
    %6275 = vmatprep.subr.bf16.mxu0 0
    %6276 = vmatpush1.bf16.msra.mxu0 %v5987
    %6277 = vmatprep.subr.bf16.mxu0 0
    %6278 = vmatpush1.bf16.msra.mxu0 %v5988
    %6279 = vmatprep.subr.bf16.mxu0 0
    %6280 = vmatpush1.bf16.msra.mxu0 %v5989
    %6281 = vmatprep.subr.bf16.mxu0 0
    %6282 = vmatpush1.bf16.msra.mxu0 %v5990
    %6283 = vmatprep.subr.bf16.mxu0 0
    %6284 = vmatpush1.bf16.msra.mxu0 %v5991
    %6285 = vmatprep.subr.bf16.mxu0 0
    %6286 = vmatpush1.bf16.msra.mxu0 %v5992
    %6287 = vmatprep.subr.bf16.mxu0 0
    %6288 = vmatpush1.bf16.msra.mxu0 %v5993
    %6289 = vmatprep.subr.bf16.mxu0 0
    %6290 = vmatpush1.bf16.msra.mxu0 %v5994
    %6291 = vmatprep.mubr.bf16.mxu0 %v5422
    %6292 = vmatmul.mubr.bf16.gmra.mrb[0].mxu0 %v5421
    %v6293 = vpop.f32.mrb[0].mxu0
    %v6294 = vadd.f32 %v6254, %v6293
    %v6295 = vpop.f32.mrb[0].mxu0
    %v6296 = vpop.f32.mrb[0].mxu0
    %v6297 = vpop.f32.mrb[0].mxu0
    %6298 = vdwg.mxu0
    %6299 = vmatprep.subr.bf16.mxu0 0
    %6300 = vmatpush1.bf16.msra.mxu0 %v5995
    %6301 = vmatprep.subr.bf16.mxu0 0
    %6302 = vmatpush1.bf16.msra.mxu0 %v5996
    %6303 = vmatprep.subr.bf16.mxu0 0
    %6304 = vmatpush1.bf16.msra.mxu0 %v5997
    %6305 = vmatprep.subr.bf16.mxu0 0
    %6306 = vmatpush1.bf16.msra.mxu0 %v5998
    %6307 = vmatprep.subr.bf16.mxu0 0
    %6308 = vmatpush1.bf16.msra.mxu0 %v5999
    %6309 = vmatprep.subr.bf16.mxu0 0
    %6310 = vmatpush1.bf16.msra.mxu0 %v6000
    %6311 = vmatprep.subr.bf16.mxu0 0
    %6312 = vmatpush1.bf16.msra.mxu0 %v6001
    %6313 = vmatprep.subr.bf16.mxu0 0
    %6314 = vmatpush1.bf16.msra.mxu0 %v6002
    %6315 = vmatprep.subr.bf16.mxu0 0
    %6316 = vmatpush1.bf16.msra.mxu0 %v6003
    %6317 = vmatprep.subr.bf16.mxu0 0
    %6318 = vmatpush1.bf16.msra.mxu0 %v6004
    %6319 = vmatprep.subr.bf16.mxu0 0
    %6320 = vmatpush1.bf16.msra.mxu0 %v6005
    %6321 = vmatprep.subr.bf16.mxu0 0
    %6322 = vmatpush1.bf16.msra.mxu0 %v6006
    %6323 = vmatprep.subr.bf16.mxu0 0
    %6324 = vmatpush1.bf16.msra.mxu0 %v6007
    %6325 = vmatprep.subr.bf16.mxu0 0
    %6326 = vmatpush1.bf16.msra.mxu0 %v6008
    %6327 = vmatprep.subr.bf16.mxu0 0
    %6328 = vmatpush1.bf16.msra.mxu0 %v6009
    %6329 = vmatprep.subr.bf16.mxu0 0
    %6330 = vmatpush1.bf16.msra.mxu0 %v6010
    %6331 = vmatprep.mubr.bf16.mxu0 %v5424
    %6332 = vmatmul.mubr.bf16.gmra.mrb[0].mxu0 %v5423
    %v6333 = vpop.f32.mrb[0].mxu0
    %v6334 = vadd.f32 %v6294, %v6333
    %v6335 = vpop.f32.mrb[0].mxu0
    %v6336 = vpop.f32.mrb[0].mxu0
    %v6337 = vpop.f32.mrb[0].mxu0
    %6338 = vdwg.mxu0
    %6339 = vmatprep.subr.bf16.mxu0 0
    %6340 = vmatpush1.bf16.msra.mxu0 %v6011
    %6341 = vmatprep.subr.bf16.mxu0 0
    %6342 = vmatpush1.bf16.msra.mxu0 %v6012
    %6343 = vmatprep.subr.bf16.mxu0 0
    %6344 = vmatpush1.bf16.msra.mxu0 %v6013
    %6345 = vmatprep.subr.bf16.mxu0 0
    %6346 = vmatpush1.bf16.msra.mxu0 %v6014
    %6347 = vmatprep.subr.bf16.mxu0 0
    %6348 = vmatpush1.bf16.msra.mxu0 %v6015
    %6349 = vmatprep.subr.bf16.mxu0 0
    %6350 = vmatpush1.bf16.msra.mxu0 %v6016
    %6351 = vmatprep.subr.bf16.mxu0 0
    %6352 = vmatpush1.bf16.msra.mxu0 %v6017
    %6353 = vmatprep.subr.bf16.mxu0 0
    %6354 = vmatpush1.bf16.msra.mxu0 %v6018
    %6355 = vmatprep.subr.bf16.mxu0 0
    %6356 = vmatpush1.bf16.msra.mxu0 %v6019
    %6357 = vmatprep.subr.bf16.mxu0 0
    %6358 = vmatpush1.bf16.msra.mxu0 %v6020
    %6359 = vmatprep.subr.bf16.mxu0 0
    %6360 = vmatpush1.bf16.msra.mxu0 %v6021
    %6361 = vmatprep.subr.bf16.mxu0 0
    %6362 = vmatpush1.bf16.msra.mxu0 %v6022
    %6363 = vmatprep.subr.bf16.mxu0 0
    %6364 = vmatpush1.bf16.msra.mxu0 %v6023
    %6365 = vmatprep.subr.bf16.mxu0 0
    %6366 = vmatpush1.bf16.msra.mxu0 %v6024
    %6367 = vmatprep.subr.bf16.mxu0 0
    %6368 = vmatpush1.bf16.msra.mxu0 %v6025
    %6369 = vmatprep.subr.bf16.mxu0 0
    %6370 = vmatpush1.bf16.msra.mxu0 %v6026
    %6371 = vmatprep.mubr.bf16.mxu0 %v5426
    %6372 = vmatmul.mubr.bf16.gmra.mrb[0].mxu0 %v5425
    %v6373 = vpop.f32.mrb[0].mxu0
    %v6374 = vadd.f32 %v6334, %v6373
    %v6375 = vpop.f32.mrb[0].mxu0
    %v6376 = vpop.f32.mrb[0].mxu0
    %v6377 = vpop.f32.mrb[0].mxu0
    %6378 = vdwg.mxu0
    %6379 = vmatprep.subr.bf16.mxu0 0
    %6380 = vmatpush1.bf16.msra.mxu0 %v6027
    %6381 = vmatprep.subr.bf16.mxu0 0
    %6382 = vmatpush1.bf16.msra.mxu0 %v6028
    %6383 = vmatprep.subr.bf16.mxu0 0
    %6384 = vmatpush1.bf16.msra.mxu0 %v6029
    %6385 = vmatprep.subr.bf16.mxu0 0
    %6386 = vmatpush1.bf16.msra.mxu0 %v6030
    %6387 = vmatprep.subr.bf16.mxu0 0
    %6388 = vmatpush1.bf16.msra.mxu0 %v6031
    %6389 = vmatprep.subr.bf16.mxu0 0
    %6390 = vmatpush1.bf16.msra.mxu0 %v6032
    %6391 = vmatprep.subr.bf16.mxu0 0
    %6392 = vmatpush1.bf16.msra.mxu0 %v6033
    %6393 = vmatprep.subr.bf16.mxu0 0
    %6394 = vmatpush1.bf16.msra.mxu0 %v6034
    %6395 = vmatprep.subr.bf16.mxu0 0
    %6396 = vmatpush1.bf16.msra.mxu0 %v6035
    %6397 = vmatprep.subr.bf16.mxu0 0
    %6398 = vmatpush1.bf16.msra.mxu0 %v6036
    %6399 = vmatprep.subr.bf16.mxu0 0
    %6400 = vmatpush1.bf16.msra.mxu0 %v6037
    %6401 = vmatprep.subr.bf16.mxu0 0
    %6402 = vmatpush1.bf16.msra.mxu0 %v6038
    %6403 = vmatprep.subr.bf16.mxu0 0
    %6404 = vmatpush1.bf16.msra.mxu0 %v6039
    %6405 = vmatprep.subr.bf16.mxu0 0
    %6406 = vmatpush1.bf16.msra.mxu0 %v6040
    %6407 = vmatprep.subr.bf16.mxu0 0
    %6408 = vmatpush1.bf16.msra.mxu0 %v6041
    %6409 = vmatprep.subr.bf16.mxu0 0
    %6410 = vmatpush1.bf16.msra.mxu0 %v6042
    %6411 = vmatprep.mubr.bf16.mxu0 %v5428
    %6412 = vmatmul.mubr.bf16.gmra.mrb[0].mxu0 %v5427
    %v6413 = vpop.f32.mrb[0].mxu0
    %v6414 = vadd.f32 %v6374, %v6413
    %v6415 = vpop.f32.mrb[0].mxu0
    %v6416 = vpop.f32.mrb[0].mxu0
    %v6417 = vpop.f32.mrb[0].mxu0
    %6418 = vdwg.mxu0
    %6419 = vmatprep.subr.bf16.mxu0 0
    %6420 = vmatpush1.bf16.msra.mxu0 %v6043
    %6421 = vmatprep.subr.bf16.mxu0 0
    %6422 = vmatpush1.bf16.msra.mxu0 %v6044
    %6423 = vmatprep.subr.bf16.mxu0 0
    %6424 = vmatpush1.bf16.msra.mxu0 %v6045
    %6425 = vmatprep.subr.bf16.mxu0 0
    %6426 = vmatpush1.bf16.msra.mxu0 %v6046
    %6427 = vmatprep.subr.bf16.mxu0 0
    %6428 = vmatpush1.bf16.msra.mxu0 %v6047
    %6429 = vmatprep.subr.bf16.mxu0 0
    %6430 = vmatpush1.bf16.msra.mxu0 %v6048
    %6431 = vmatprep.subr.bf16.mxu0 0
    %6432 = vmatpush1.bf16.msra.mxu0 %v6049
    %6433 = vmatprep.subr.bf16.mxu0 0
    %6434 = vmatpush1.bf16.msra.mxu0 %v6050
    %6435 = vmatprep.subr.bf16.mxu0 0
    %6436 = vmatpush1.bf16.msra.mxu0 %v6051
    %6437 = vmatprep.subr.bf16.mxu0 0
    %6438 = vmatpush1.bf16.msra.mxu0 %v6052
    %6439 = vmatprep.subr.bf16.mxu0 0
    %6440 = vmatpush1.bf16.msra.mxu0 %v6053
    %6441 = vmatprep.subr.bf16.mxu0 0
    %6442 = vmatpush1.bf16.msra.mxu0 %v6054
    %6443 = vmatprep.subr.bf16.mxu0 0
    %6444 = vmatpush1.bf16.msra.mxu0 %v6055
    %6445 = vmatprep.subr.bf16.mxu0 0
    %6446 = vmatpush1.bf16.msra.mxu0 %v6056
    %6447 = vmatprep.subr.bf16.mxu0 0
    %6448 = vmatpush1.bf16.msra.mxu0 %v6057
    %6449 = vmatprep.subr.bf16.mxu0 0
    %6450 = vmatpush1.bf16.msra.mxu0 %v6058
    %6451 = vmatprep.mubr.bf16.mxu0 %v5430
    %6452 = vmatmul.mubr.bf16.gmra.mrb[0].mxu0 %v5429
    %v6453 = vpop.f32.mrb[0].mxu0
    %v6454 = vadd.f32 %v6414, %v6453
    %v6455 = vpop.f32.mrb[0].mxu0
    %v6456 = vpop.f32.mrb[0].mxu0
    %v6457 = vpop.f32.mrb[0].mxu0
    %6458 = vdwg.mxu0
    %6459 = vmatprep.subr.bf16.mxu0 0
    %6460 = vmatpush1.bf16.msra.mxu0 %v6059
    %6461 = vmatprep.subr.bf16.mxu0 0
    %6462 = vmatpush1.bf16.msra.mxu0 %v6060
    %6463 = vmatprep.subr.bf16.mxu0 0
    %6464 = vmatpush1.bf16.msra.mxu0 %v6061
    %6465 = vmatprep.subr.bf16.mxu0 0
    %6466 = vmatpush1.bf16.msra.mxu0 %v6062
    %6467 = vmatprep.subr.bf16.mxu0 0
    %6468 = vmatpush1.bf16.msra.mxu0 %v6063
    %6469 = vmatprep.subr.bf16.mxu0 0
    %6470 = vmatpush1.bf16.msra.mxu0 %v6064
    %6471 = vmatprep.subr.bf16.mxu0 0
    %6472 = vmatpush1.bf16.msra.mxu0 %v6065
    %6473 = vmatprep.subr.bf16.mxu0 0
    %6474 = vmatpush1.bf16.msra.mxu0 %v6066
    %6475 = vmatprep.subr.bf16.mxu0 0
    %6476 = vmatpush1.bf16.msra.mxu0 %v6067
    %6477 = vmatprep.subr.bf16.mxu0 0
    %6478 = vmatpush1.bf16.msra.mxu0 %v6068
    %6479 = vmatprep.subr.bf16.mxu0 0
    %6480 = vmatpush1.bf16.msra.mxu0 %v6069
    %6481 = vmatprep.subr.bf16.mxu0 0
    %6482 = vmatpush1.bf16.msra.mxu0 %v6070
    %6483 = vmatprep.subr.bf16.mxu0 0
    %6484 = vmatpush1.bf16.msra.mxu0 %v6071
    %6485 = vmatprep.subr.bf16.mxu0 0
    %6486 = vmatpush1.bf16.msra.mxu0 %v6072
    %6487 = vmatprep.subr.bf16.mxu0 0
    %6488 = vmatpush1.bf16.msra.mxu0 %v6073
    %6489 = vmatprep.subr.bf16.mxu0 0
    %6490 = vmatpush1.bf16.msra.mxu0 %v6074
    %6491 = vmatprep.mubr.bf16.mxu0 %v5432
    %6492 = vmatmul.mubr.bf16.gmra.mrb[0].mxu0 %v5431
    %v6493 = vpop.f32.mrb[0].mxu0
    %v6494 = vadd.f32 %v6454, %v6493
    %v6495 = vpop.f32.mrb[0].mxu0
    %v6496 = vpop.f32.mrb[0].mxu0
    %v6497 = vpop.f32.mrb[0].mxu0
    %6498 = vdwg.mxu0
    %6499 = vmatprep.subr.bf16.mxu0 0
    %6500 = vmatpush1.bf16.msra.mxu0 %v6075
    %6501 = vmatprep.subr.bf16.mxu0 0
    %6502 = vmatpush1.bf16.msra.mxu0 %v6076
    %6503 = vmatprep.subr.bf16.mxu0 0
    %6504 = vmatpush1.bf16.msra.mxu0 %v6077
    %6505 = vmatprep.subr.bf16.mxu0 0
    %6506 = vmatpush1.bf16.msra.mxu0 %v6078
    %6507 = vmatprep.subr.bf16.mxu0 0
    %6508 = vmatpush1.bf16.msra.mxu0 %v6079
    %6509 = vmatprep.subr.bf16.mxu0 0
    %6510 = vmatpush1.bf16.msra.mxu0 %v6080
    %6511 = vmatprep.subr.bf16.mxu0 0
    %6512 = vmatpush1.bf16.msra.mxu0 %v6081
    %6513 = vmatprep.subr.bf16.mxu0 0
    %6514 = vmatpush1.bf16.msra.mxu0 %v6082
    %6515 = vmatprep.subr.bf16.mxu0 0
    %6516 = vmatpush1.bf16.msra.mxu0 %v6083
    %6517 = vmatprep.subr.bf16.mxu0 0
    %6518 = vmatpush1.bf16.msra.mxu0 %v6084
    %6519 = vmatprep.subr.bf16.mxu0 0
    %6520 = vmatpush1.bf16.msra.mxu0 %v6085
    %6521 = vmatprep.subr.bf16.mxu0 0
    %6522 = vmatpush1.bf16.msra.mxu0 %v6086
    %6523 = vmatprep.subr.bf16.mxu0 0
    %6524 = vmatpush1.bf16.msra.mxu0 %v6087
    %6525 = vmatprep.subr.bf16.mxu0 0
    %6526 = vmatpush1.bf16.msra.mxu0 %v6088
    %6527 = vmatprep.subr.bf16.mxu0 0
    %6528 = vmatpush1.bf16.msra.mxu0 %v6089
    %6529 = vmatprep.subr.bf16.mxu0 0
    %6530 = vmatpush1.bf16.msra.mxu0 %v6090
    %6531 = vmatprep.mubr.bf16.mxu0 %v5434
    %6532 = vmatmul.mubr.bf16.gmra.mrb[0].mxu0 %v5433
    %v6533 = vpop.f32.mrb[0].mxu0
    %v6534 = vadd.f32 %v6494, %v6533
    %v6535 = vpop.f32.mrb[0].mxu0
    %v6536 = vpop.f32.mrb[0].mxu0
    %v6537 = vpop.f32.mrb[0].mxu0
    %6538 = vdwg.mxu0
    %v6539 = vadd.f32 %v5049, %v6534
    %6540 = vst [vmem:[#allocation2] sm:$0x3] %v6539
    // Predicated region
    $region54: #{tpu_custom_call.1} parent=1 // pred_check
      %p6541 = pneg %p101
    $region55: #{tpu_custom_call.1} parent=1 // pred_check_branch
      %6543 = sbr.rel (%p6541) target = $region57
    $region56: #{tpu_custom_call.1} parent=1 // pred_region
      %v6544 = vld [vmem:[#allocation2] sm:$0x3]
      %v6545 = vxor.u32 %v6544, 2147483648
      %v6546 = vmul.f32 %v6545, 1.442695
      %v6547 = vpow.pop %v6546
      %v6548 = vadd.f32 %v6547, 1.0
      %v6549 = vrcp.pop %v6548
      %v6550 = vmul.f32 1.0, %v6549
      %6551 = vst [vmem:[#allocation14] sm:$0x3] %v6550
    $region57: #{tpu_custom_call.1} parent=1 // pred_fallthru
      _
    // Predicated region
    $region58: #{tpu_custom_call.1} parent=1 // pred_check
      _
    $region59: #{tpu_custom_call.1} parent=1 // pred_check_branch
      %6553 = sbr.rel (0) target = $region61
    $region60: #{tpu_custom_call.1} parent=1 // pred_region
      %s6555 = ssub.s32 32, 32
      %6556 = vsyncadd [#allocation5], %s6555
      %s6558 = sshll.u32 [#allocation14], 4
      %s6559 = int_to_ptr.vmem [resolvable:$true] %s6558
      %6561 = dma.vmem_to_hbm [thread:$0]  %s6559, 32, %s6, [#allocation5]
    $region61: #{tpu_custom_call.1} parent=1 // pred_fallthru
      _
    // Predicated region
    $region62: #{tpu_custom_call.1} parent=1 // pred_check
      _
    $region63: #{tpu_custom_call.1} parent=1 // pred_check_branch
      %6563 = sbr.rel (0) target = $region65
    $region64: #{tpu_custom_call.1} parent=1 // pred_region
      %6564 = dma.done [#allocation5], 32
    $region65: #{tpu_custom_call.1} parent=1 // pred_fallthru
      _
    %6565 = vsyncpa [#allocation4], 1
    %6566 = vsyncpa [#allocation7], 1
    %6567 = vsyncpa [#allocation10], 1
    %6568 = vsyncpa [#allocation13], 1
    %6569 = vsyncpa [#allocation5], 1

</llo_original>
